<compile_context>
chip_gen: v5e
topology: v5e:2x2
jax: 0.10.0
libtpu: 0.0.40
codegen_flags: <defaults>
</compile_context>

<pallas_src>
import numpy as np
import jax
import jax.numpy as jnp
from jax.experimental import pallas as pl
from jax.experimental.pallas import tpu as pltpu

_EPS = 1e-5          # InstanceNorm3d default eps
_NEG_SLOPE = 0.01    # LeakyReLU default negative slope
_LANES = 128


def _round_up(v, m):
    return ((v + m - 1) // m) * m


# ----------------------------------------------------------------------------
# Kernel 1: shifted-matmul conv (bf16 operands, f32 accumulate) + masked
#           per-channel partial sums for InstanceNorm.
# ----------------------------------------------------------------------------
def _make_conv_stats_kernel(nq, taps, cout, pp_out):
    def kernel(*refs):
        x_refs = refs[:nq]            # nq depth-shifted views of the phase array
        w_ref = refs[nq]              # (k^3, Cout, Cin) bf16
        m_ref = refs[nq + 1]          # (1, pp_out) f32 validity mask
        y_ref = refs[nq + 2]          # (1, 1, Cout, pp_out) f32 conv plane
        st_ref = refs[nq + 3]         # (1, 1, Cout, 2) f32 partial (sum, sumsq)

        acc = jnp.zeros((cout, pp_out), jnp.float32)
        for (ti, phase, qd, qoff) in taps:            # unrolled: k^3 taps
            slab = x_refs[qd][0, phase, 0, :, qoff:qoff + pp_out]  # (Cin, pp) bf16
            w_t = w_ref[ti]                                        # (Cout, Cin) bf16
            acc = acc + jnp.dot(w_t, slab, preferred_element_type=jnp.float32)

        y_ref[0, 0] = acc                             # lane-dense f32 store

        am = acc * m_ref[...]                         # zero out halo/pad lanes
        st_ref[0, 0, :, 0:1] = jnp.sum(am, axis=1, keepdims=True)
        st_ref[0, 0, :, 1:2] = jnp.sum(am * am, axis=1, keepdims=True)

    return kernel


# ----------------------------------------------------------------------------
# Kernel 2: fused InstanceNorm affine apply + LeakyReLU (lane-dense).
# ----------------------------------------------------------------------------
def _norm_act_kernel(y_ref, ss_ref, o_ref):
    y = y_ref[0, 0]                    # (Cout, pp) f32
    scale = ss_ref[0, :, 0:1]          # (Cout, 1)  = gamma * rsqrt(var + eps)
    shift = ss_ref[0, :, 1:2]          # (Cout, 1)  = beta - mean * scale
    z = y * scale + shift
    o_ref[0, 0] = jnp.where(z >= 0.0, z, _NEG_SLOPE * z)


# ----------------------------------------------------------------------------
# One encoder block forward (conv3d -> instance-norm -> leaky-relu)
# ----------------------------------------------------------------------------
def encoder_block_forward(x, w, gamma, beta, stride):
    """x: (N, C_in, D, H, W) f32 NCDHW;  w: (C_out, C_in, k, k, k) f32.
    Returns (N, C_out, OD, OH, OW) f32."""
    N, Cin, D, H, W = x.shape
    Cout, Cin_w, k, _, _ = w.shape
    assert Cin_w == Cin
    s = int(stride)
    p = k // 2

    def odim(d):
        return (d + 2 * p - k) // s + 1

    OD, OH, OW = odim(D), odim(H), odim(W)
    qk = (k - 1) // s                        # extra decimated planes per dim
    Qd, Qh, Qw = OD + qk, OH + qk, OW + qk
    qhqw = Qh * Qw
    pp_out = _round_up(qhqw, _LANES)                       # lane-dense output width
    pp_in = _round_up(pp_out + qk * Qw + qk, _LANES)       # + max intra-plane shift

    # ---- phase decomposition over the stride (pure JAX, ~1x input traffic) ----
    xb = x.astype(jnp.bfloat16)

    def fit(a, axis, Q):
        tgt = Q * s
        pads = [(0, 0)] * a.ndim
        pads[axis] = (p, max(0, tgt - a.shape[axis] - p))
        a = jnp.pad(a, pads)
        sl = [slice(None)] * a.ndim
        sl[axis] = slice(0, tgt)
        return a[tuple(sl)]

    xb = fit(xb, 2, Qd)
    xb = fit(xb, 3, Qh)
    xb = fit(xb, 4, Qw)
    xb = xb.reshape(N, Cin, Qd, s, Qh, s, Qw, s)
    xb = xb.transpose(0, 3, 5, 7, 2, 1, 4, 6)      # (N, sd, sh, sw, Qd, Cin, Qh, Qw)
    xb = xb.reshape(N, s ** 3, Qd, Cin, qhqw)
    xb = jnp.pad(xb, ((0, 0), (0, 0), (0, 0), (0, 0), (0, pp_in - qhqw)))

    # ---- weights: one (Cout, Cin) matrix per tap, bf16 ----
    w_all = jnp.transpose(w, (2, 3, 4, 0, 1)).reshape(k ** 3, Cout, Cin)
    w_all = w_all.astype(jnp.bfloat16)

    # ---- validity mask over flattened output lanes (halo/pad lanes = 0) ----
    j = np.arange(pp_out)
    valid = (j < qhqw) & ((j // Qw) < OH) & ((j % Qw) < OW)
    mask = jnp.asarray(valid.reshape(1, pp_out).astype(np.float32))

    # ---- tap table (python constants; unrolled inside the kernel) ----
    taps = []
    for kd in range(k):
        for kh in range(k):
            for kw in range(k):
                ti = (kd * k + kh) * k + kw
                phase = ((kd % s) * s + (kh % s)) * s + (kw % s)
                taps.append((ti, phase, kd // s, (kh // s) * Qw + (kw // s)))

    nq = qk + 1
    x_specs = [
        pl.BlockSpec((1, s ** 3, 1, Cin, pp_in),
                     lambda n, d, qd=qd: (n, 0, d + qd, 0, 0))
        for qd in range(nq)
    ]
    # TODO(synk): for very large H*W planes (tens of MiB per plane) the per-plane
    # blocks should additionally be tiled along the flattened H*W axis with a
    # halo DMA; unnecessary at these sizes.

    kern1 = _make_conv_stats_kernel(nq=nq, taps=tuple(taps), cout=Cout, pp_out=pp_out)
    cparams = pltpu.CompilerParams(
        dimension_semantics=("parallel", "parallel"),
        vmem_limit_bytes=32 * 1024 * 1024)

    y, st = pl.pallas_call(
        kern1,
        out_shape=(jax.ShapeDtypeStruct((N, OD, Cout, pp_out), jnp.float32),
                   jax.ShapeDtypeStruct((N, OD, Cout, 2), jnp.float32)),
        grid=(N, OD),
        in_specs=x_specs + [
            pl.BlockSpec((k ** 3, Cout, Cin), lambda n, d: (0, 0, 0)),
            pl.BlockSpec((1, pp_out), lambda n, d: (0, 0)),
        ],
        out_specs=(pl.BlockSpec((1, 1, Cout, pp_out), lambda n, d: (n, d, 0, 0)),
                   pl.BlockSpec((1, 1, Cout, 2), lambda n, d: (n, d, 0, 0))),
        compiler_params=cparams,
        cost_estimate=pl.CostEstimate(
            flops=int(2 * N * OD * (k ** 3) * Cout * Cin * pp_out),
            transcendentals=0,
            bytes_accessed=int(nq * xb.size * 2 + w_all.size * 2
                               + N * OD * Cout * pp_out * 4 + N * OD * Cout * 2 * 4)),
    )(*([xb] * nq + [w_all, mask]))

    # ---- tiny per-(n, channel) finalize of instance-norm statistics (JAX) ----
    m_total = float(OD * OH * OW)
    sums = st.sum(axis=1)                                # (N, Cout, 2)
    mean = sums[..., 0] / m_total
    var = jnp.maximum(sums[..., 1] / m_total - mean * mean, 0.0)
    rstd = jax.lax.rsqrt(var + _EPS)
    scale = gamma[None, :] * rstd                        # gamma folded into rsqrt
    shift = beta[None, :] - mean * scale                 # conv bias cancels exactly
    ss = jnp.stack([scale, shift], axis=-1)              # (N, Cout, 2) f32

    out = pl.pallas_call(
        _norm_act_kernel,
        out_shape=jax.ShapeDtypeStruct((N, OD, Cout, pp_out), jnp.float32),
        grid=(N, OD),
        in_specs=[pl.BlockSpec((1, 1, Cout, pp_out), lambda n, d: (n, d, 0, 0)),
                  pl.BlockSpec((1, Cout, 2), lambda n, d: (n, 0, 0))],
        out_specs=pl.BlockSpec((1, 1, Cout, pp_out), lambda n, d: (n, d, 0, 0)),
        compiler_params=cparams,
        cost_estimate=pl.CostEstimate(
            flops=int(4 * N * OD * Cout * pp_out),
            transcendentals=0,
            bytes_accessed=int(2 * N * OD * Cout * pp_out * 4 + N * Cout * 2 * 4)),
    )(y, ss)

    # ---- drop padding lanes and return NCDHW (module API layout) ----
    out = out[..., :qhqw].reshape(N, OD, Cout, Qh, Qw)[:, :, :, :OH, :OW]
    return jnp.transpose(out, (0, 2, 1, 3, 4))           # (N, Cout, OD, OH, OW)


# ----------------------------------------------------------------------------
# CNNEncoder: parameter init + forward
# ----------------------------------------------------------------------------
def init_cnn_encoder_params(key, in_channels, kernel_sizes, features):
    chans = [in_channels] + list(features)
    params = []
    for i, (ich, och, k) in enumerate(zip(chans[:-1], chans[1:], kernel_sizes)):
        kk = jax.random.fold_in(key, i)
        kw_key, kb_key = jax.random.split(kk)
        fan_in = ich * k * k * k
        bound = 1.0 / (fan_in ** 0.5)
        w = jax.random.uniform(kw_key, (och, ich, k, k, k), jnp.float32, -bound, bound)
        # Conv bias kept only for parameter parity: a per-channel constant is
        # exactly cancelled by the InstanceNorm mean subtraction, so the fused
        # kernels never load or add it.
        b = jax.random.uniform(kb_key, (och,), jnp.float32, -bound, bound)
        gamma = jnp.ones((och,), jnp.float32)   # == InstanceNorm3d default (affine off)
        beta = jnp.zeros((och,), jnp.float32)
        params.append((w, b, gamma, beta))
    return params


def cnn_encoder_forward(x, params, strides):
    """Mirrors CNNEncoder.forward: returns (last_x, [per-block features]), NCDHW."""
    feats = []
    for (w, _b, gamma, beta), st in zip(params, strides):
        x = encoder_block_forward(x, w, gamma, beta, st)
        feats.append(x)
    return x, feats


# ----------------------------------------------------------------------------
# Pure-JAX reference (same bf16 operand rounding) for a runtime sanity check
# ----------------------------------------------------------------------------
def _reference_block(x, w, gamma, beta, stride):
    xb = x.astype(jnp.bfloat16).astype(jnp.float32)
    wb = w.astype(jnp.bfloat16).astype(jnp.float32)
    k = w.shape[2]
    p = k // 2
    y = jax.lax.conv_general_dilated(
        xb, wb, window_strides=(stride,) * 3, padding=[(p, p)] * 3,
        dimension_numbers=("NCDHW", "OIDHW", "NCDHW"))
    mean = y.mean(axis=(2, 3, 4), keepdims=True)
    var = jnp.mean((y - mean) ** 2, axis=(2, 3, 4), keepdims=True)
    yn = (y - mean) * jax.lax.rsqrt(var + _EPS)
    yn = yn * gamma.reshape(1, -1, 1, 1, 1) + beta.reshape(1, -1, 1, 1, 1)
    return jnp.where(yn >= 0, yn, _NEG_SLOPE * yn)


if __name__ == "__main__":
    # Small, module-consistent config: 3D input, two encoder blocks.
    in_channels = 4
    kernel_sizes = [3, 3]
    features = [8, 16]
    strides = [2, 2]
    # dropouts = 0.0 -> inference no-op

    key = jax.random.PRNGKey(0)
    x_key, p_key = jax.random.split(key)
    x = jax.random.normal(x_key, (2, in_channels, 16, 16, 16), jnp.float32)  # NCDHW

    params = init_cnn_encoder_params(p_key, in_channels, kernel_sizes, features)

    fwd = jax.jit(lambda v: cnn_encoder_forward(v, params, strides))
    out, feats = fwd(x)
    out = jax.block_until_ready(out)
    feats = [jax.block_until_ready(f) for f in feats]

    assert out.shape == (2, 16, 4, 4, 4), out.shape
    assert feats[0].shape == (2, 8, 8, 8, 8), feats[0].shape
    assert feats[1].shape == (2, 16, 4, 4, 4), feats[1].shape

    # Numerical sanity check against a pure-JAX reference chain.
    ref = x
    for (w, _b, gamma, beta), st in zip(params, strides):
        ref = _reference_block(ref, w, gamma, beta, st)
    ref = jax.block_until_ready(ref)
    err = float(jnp.max(jnp.abs(out - ref)))
    assert err < 2e-2, f"max |kernel - reference| too large: {err}"

    print("KERNEL_OK")
</pallas_src>

<mosaic_0001>
module attributes {stable_mosaic.version = 11 : i64} {
  func.func @kernel(%arg0: i32, %arg1: i32, %arg2: memref<1x8x1x4x256xbf16, #tpu.memory_space<vmem>>, %arg3: memref<1x8x1x4x256xbf16, #tpu.memory_space<vmem>>, %arg4: memref<27x8x4xbf16, #tpu.memory_space<vmem>>, %arg5: memref<1x128xf32, #tpu.memory_space<vmem>>, %arg6: memref<1x1x8x128xf32, #tpu.memory_space<vmem>>, %arg7: memref<1x1x8x2xf32, #tpu.memory_space<vmem>>) attributes {dimension_semantics = [#tpu.dimension_semantics<parallel>, #tpu.dimension_semantics<parallel>], iteration_bounds = array<i64: 2, 8>, scalar_prefetch = 0 : i64, scratch_operands = 0 : i64, tpu.core_type = #tpu.core_type<tc>, window_params = [{transform_indices = @transform_0, window_bounds = array<i64: 1, 8, 1, 4, 256>}, {transform_indices = @transform_1, window_bounds = array<i64: 1, 8, 1, 4, 256>}, {pipeline_mode = #tpu.pipeline_mode<synchronous>, transform_indices = @transform_2, window_bounds = array<i64: 27, 8, 4>}, {pipeline_mode = #tpu.pipeline_mode<synchronous>, transform_indices = @transform_3, window_bounds = array<i64: 1, 128>}, {transform_indices = @transform_4, window_bounds = array<i64: 1, 1, 8, 128>}, {transform_indices = @transform_5, window_bounds = array<i64: 1, 1, 8, 2>}]} {
    %cst = arith.constant 0.000000e+00 : f32
    %0 = vector.broadcast %cst : f32 to vector<8x128xf32>
    %c0 = arith.constant 0 : index
    %c0_0 = arith.constant 0 : index
    %c0_1 = arith.constant 0 : index
    %c0_2 = arith.constant 0 : index
    %c0_3 = arith.constant 0 : index
    %1 = vector.load %arg2[%c0, %c0_0, %c0_1, %c0_2, %c0_3] : memref<1x8x1x4x256xbf16, #tpu.memory_space<vmem>>, vector<1x1x1x4x128xbf16>
    %2 = vector.shape_cast %1 : vector<1x1x1x4x128xbf16> to vector<4x128xbf16>
    %c0_4 = arith.constant 0 : index
    %c0_5 = arith.constant 0 : index
    %c0_6 = arith.constant 0 : index
    %3 = vector.load %arg4[%c0_4, %c0_5, %c0_6] : memref<27x8x4xbf16, #tpu.memory_space<vmem>>, vector<1x8x4xbf16>
    %4 = vector.shape_cast %3 : vector<1x8x4xbf16> to vector<8x4xbf16>
    %cst_7 = arith.constant dense<0.000000e+00> : vector<8x128xf32>
    %5 = tpu.matmul %4, %2, %cst_7 {dimension_numbers = #tpu.dot_dimension_numbers<[1], [0], [0], [1], [0, 0, 1, 1], [], []>} : vector<8x4xbf16>, vector<4x128xbf16>, vector<8x128xf32> -> vector<8x128xf32>
    %6 = arith.addf %0, %5 : vector<8x128xf32>
    %c0_8 = arith.constant 0 : index
    %c1 = arith.constant 1 : index
    %c0_9 = arith.constant 0 : index
    %c0_10 = arith.constant 0 : index
    %c0_11 = arith.constant 0 : index
    %7 = vector.load %arg2[%c0_8, %c1, %c0_9, %c0_10, %c0_11] : memref<1x8x1x4x256xbf16, #tpu.memory_space<vmem>>, vector<1x1x1x4x128xbf16>
    %8 = vector.shape_cast %7 : vector<1x1x1x4x128xbf16> to vector<4x128xbf16>
    %c1_12 = arith.constant 1 : index
    %c0_13 = arith.constant 0 : index
    %c0_14 = arith.constant 0 : index
    %9 = vector.load %arg4[%c1_12, %c0_13, %c0_14] : memref<27x8x4xbf16, #tpu.memory_space<vmem>>, vector<1x8x4xbf16>
    %10 = vector.shape_cast %9 : vector<1x8x4xbf16> to vector<8x4xbf16>
    %cst_15 = arith.constant dense<0.000000e+00> : vector<8x128xf32>
    %11 = tpu.matmul %10, %8, %cst_15 {dimension_numbers = #tpu.dot_dimension_numbers<[1], [0], [0], [1], [0, 0, 1, 1], [], []>} : vector<8x4xbf16>, vector<4x128xbf16>, vector<8x128xf32> -> vector<8x128xf32>
    %12 = arith.addf %6, %11 : vector<8x128xf32>
    %c0_16 = arith.constant 0 : index
    %c0_17 = arith.constant 0 : index
    %c0_18 = arith.constant 0 : index
    %c0_19 = arith.constant 0 : index
    %c1_20 = arith.constant 1 : index
    %13 = vector.load %arg2[%c0_16, %c0_17, %c0_18, %c0_19, %c1_20] : memref<1x8x1x4x256xbf16, #tpu.memory_space<vmem>>, vector<1x1x1x4x128xbf16>
    %14 = vector.shape_cast %13 : vector<1x1x1x4x128xbf16> to vector<4x128xbf16>
    %c2 = arith.constant 2 : index
    %c0_21 = arith.constant 0 : index
    %c0_22 = arith.constant 0 : index
    %15 = vector.load %arg4[%c2, %c0_21, %c0_22] : memref<27x8x4xbf16, #tpu.memory_space<vmem>>, vector<1x8x4xbf16>
    %16 = vector.shape_cast %15 : vector<1x8x4xbf16> to vector<8x4xbf16>
    %cst_23 = arith.constant dense<0.000000e+00> : vector<8x128xf32>
    %17 = tpu.matmul %16, %14, %cst_23 {dimension_numbers = #tpu.dot_dimension_numbers<[1], [0], [0], [1], [0, 0, 1, 1], [], []>} : vector<8x4xbf16>, vector<4x128xbf16>, vector<8x128xf32> -> vector<8x128xf32>
    %18 = arith.addf %12, %17 : vector<8x128xf32>
    %c0_24 = arith.constant 0 : index
    %c2_25 = arith.constant 2 : index
    %c0_26 = arith.constant 0 : index
    %c0_27 = arith.constant 0 : index
    %c0_28 = arith.constant 0 : index
    %19 = vector.load %arg2[%c0_24, %c2_25, %c0_26, %c0_27, %c0_28] : memref<1x8x1x4x256xbf16, #tpu.memory_space<vmem>>, vector<1x1x1x4x128xbf16>
    %20 = vector.shape_cast %19 : vector<1x1x1x4x128xbf16> to vector<4x128xbf16>
    %c3 = arith.constant 3 : index
    %c0_29 = arith.constant 0 : index
    %c0_30 = arith.constant 0 : index
    %21 = vector.load %arg4[%c3, %c0_29, %c0_30] : memref<27x8x4xbf16, #tpu.memory_space<vmem>>, vector<1x8x4xbf16>
    %22 = vector.shape_cast %21 : vector<1x8x4xbf16> to vector<8x4xbf16>
    %cst_31 = arith.constant dense<0.000000e+00> : vector<8x128xf32>
    %23 = tpu.matmul %22, %20, %cst_31 {dimension_numbers = #tpu.dot_dimension_numbers<[1], [0], [0], [1], [0, 0, 1, 1], [], []>} : vector<8x4xbf16>, vector<4x128xbf16>, vector<8x128xf32> -> vector<8x128xf32>
    %24 = arith.addf %18, %23 : vector<8x128xf32>
    %c0_32 = arith.constant 0 : index
    %c3_33 = arith.constant 3 : index
    %c0_34 = arith.constant 0 : index
    %c0_35 = arith.constant 0 : index
    %c0_36 = arith.constant 0 : index
    %25 = vector.load %arg2[%c0_32, %c3_33, %c0_34, %c0_35, %c0_36] : memref<1x8x1x4x256xbf16, #tpu.memory_space<vmem>>, vector<1x1x1x4x128xbf16>
    %26 = vector.shape_cast %25 : vector<1x1x1x4x128xbf16> to vector<4x128xbf16>
    %c4 = arith.constant 4 : index
    %c0_37 = arith.constant 0 : index
    %c0_38 = arith.constant 0 : index
    %27 = vector.load %arg4[%c4, %c0_37, %c0_38] : memref<27x8x4xbf16, #tpu.memory_space<vmem>>, vector<1x8x4xbf16>
    %28 = vector.shape_cast %27 : vector<1x8x4xbf16> to vector<8x4xbf16>
    %cst_39 = arith.constant dense<0.000000e+00> : vector<8x128xf32>
    %29 = tpu.matmul %28, %26, %cst_39 {dimension_numbers = #tpu.dot_dimension_numbers<[1], [0], [0], [1], [0, 0, 1, 1], [], []>} : vector<8x4xbf16>, vector<4x128xbf16>, vector<8x128xf32> -> vector<8x128xf32>
    %30 = arith.addf %24, %29 : vector<8x128xf32>
    %c0_40 = arith.constant 0 : index
    %c2_41 = arith.constant 2 : index
    %c0_42 = arith.constant 0 : index
    %c0_43 = arith.constant 0 : index
    %c1_44 = arith.constant 1 : index
    %31 = vector.load %arg2[%c0_40, %c2_41, %c0_42, %c0_43, %c1_44] : memref<1x8x1x4x256xbf16, #tpu.memory_space<vmem>>, vector<1x1x1x4x128xbf16>
    %32 = vector.shape_cast %31 : vector<1x1x1x4x128xbf16> to vector<4x128xbf16>
    %c5 = arith.constant 5 : index
    %c0_45 = arith.constant 0 : index
    %c0_46 = arith.constant 0 : index
    %33 = vector.load %arg4[%c5, %c0_45, %c0_46] : memref<27x8x4xbf16, #tpu.memory_space<vmem>>, vector<1x8x4xbf16>
    %34 = vector.shape_cast %33 : vector<1x8x4xbf16> to vector<8x4xbf16>
    %cst_47 = arith.constant dense<0.000000e+00> : vector<8x128xf32>
    %35 = tpu.matmul %34, %32, %cst_47 {dimension_numbers = #tpu.dot_dimension_numbers<[1], [0], [0], [1], [0, 0, 1, 1], [], []>} : vector<8x4xbf16>, vector<4x128xbf16>, vector<8x128xf32> -> vector<8x128xf32>
    %36 = arith.addf %30, %35 : vector<8x128xf32>
    %c0_48 = arith.constant 0 : index
    %c0_49 = arith.constant 0 : index
    %c0_50 = arith.constant 0 : index
    %c0_51 = arith.constant 0 : index
    %c9 = arith.constant 9 : index
    %37 = vector.load %arg2[%c0_48, %c0_49, %c0_50, %c0_51, %c9] : memref<1x8x1x4x256xbf16, #tpu.memory_space<vmem>>, vector<1x1x1x4x128xbf16>
    %38 = vector.shape_cast %37 : vector<1x1x1x4x128xbf16> to vector<4x128xbf16>
    %c6 = arith.constant 6 : index
    %c0_52 = arith.constant 0 : index
    %c0_53 = arith.constant 0 : index
    %39 = vector.load %arg4[%c6, %c0_52, %c0_53] : memref<27x8x4xbf16, #tpu.memory_space<vmem>>, vector<1x8x4xbf16>
    %40 = vector.shape_cast %39 : vector<1x8x4xbf16> to vector<8x4xbf16>
    %cst_54 = arith.constant dense<0.000000e+00> : vector<8x128xf32>
    %41 = tpu.matmul %40, %38, %cst_54 {dimension_numbers = #tpu.dot_dimension_numbers<[1], [0], [0], [1], [0, 0, 1, 1], [], []>} : vector<8x4xbf16>, vector<4x128xbf16>, vector<8x128xf32> -> vector<8x128xf32>
    %42 = arith.addf %36, %41 : vector<8x128xf32>
    %c0_55 = arith.constant 0 : index
    %c1_56 = arith.constant 1 : index
    %c0_57 = arith.constant 0 : index
    %c0_58 = arith.constant 0 : index
    %c9_59 = arith.constant 9 : index
    %43 = vector.load %arg2[%c0_55, %c1_56, %c0_57, %c0_58, %c9_59] : memref<1x8x1x4x256xbf16, #tpu.memory_space<vmem>>, vector<1x1x1x4x128xbf16>
    %44 = vector.shape_cast %43 : vector<1x1x1x4x128xbf16> to vector<4x128xbf16>
    %c7 = arith.constant 7 : index
    %c0_60 = arith.constant 0 : index
    %c0_61 = arith.constant 0 : index
    %45 = vector.load %arg4[%c7, %c0_60, %c0_61] : memref<27x8x4xbf16, #tpu.memory_space<vmem>>, vector<1x8x4xbf16>
    %46 = vector.shape_cast %45 : vector<1x8x4xbf16> to vector<8x4xbf16>
    %cst_62 = arith.constant dense<0.000000e+00> : vector<8x128xf32>
    %47 = tpu.matmul %46, %44, %cst_62 {dimension_numbers = #tpu.dot_dimension_numbers<[1], [0], [0], [1], [0, 0, 1, 1], [], []>} : vector<8x4xbf16>, vector<4x128xbf16>, vector<8x128xf32> -> vector<8x128xf32>
    %48 = arith.addf %42, %47 : vector<8x128xf32>
    %c0_63 = arith.constant 0 : index
    %c0_64 = arith.constant 0 : index
    %c0_65 = arith.constant 0 : index
    %c0_66 = arith.constant 0 : index
    %c10 = arith.constant 10 : index
    %49 = vector.load %arg2[%c0_63, %c0_64, %c0_65, %c0_66, %c10] : memref<1x8x1x4x256xbf16, #tpu.memory_space<vmem>>, vector<1x1x1x4x128xbf16>
    %50 = vector.shape_cast %49 : vector<1x1x1x4x128xbf16> to vector<4x128xbf16>
    %c8 = arith.constant 8 : index
    %c0_67 = arith.constant 0 : index
    %c0_68 = arith.constant 0 : index
    %51 = vector.load %arg4[%c8, %c0_67, %c0_68] : memref<27x8x4xbf16, #tpu.memory_space<vmem>>, vector<1x8x4xbf16>
    %52 = vector.shape_cast %51 : vector<1x8x4xbf16> to vector<8x4xbf16>
    %cst_69 = arith.constant dense<0.000000e+00> : vector<8x128xf32>
    %53 = tpu.matmul %52, %50, %cst_69 {dimension_numbers = #tpu.dot_dimension_numbers<[1], [0], [0], [1], [0, 0, 1, 1], [], []>} : vector<8x4xbf16>, vector<4x128xbf16>, vector<8x128xf32> -> vector<8x128xf32>
    %54 = arith.addf %48, %53 : vector<8x128xf32>
    %c0_70 = arith.constant 0 : index
    %c4_71 = arith.constant 4 : index
    %c0_72 = arith.constant 0 : index
    %c0_73 = arith.constant 0 : index
    %c0_74 = arith.constant 0 : index
    %55 = vector.load %arg2[%c0_70, %c4_71, %c0_72, %c0_73, %c0_74] : memref<1x8x1x4x256xbf16, #tpu.memory_space<vmem>>, vector<1x1x1x4x128xbf16>
    %56 = vector.shape_cast %55 : vector<1x1x1x4x128xbf16> to vector<4x128xbf16>
    %c9_75 = arith.constant 9 : index
    %c0_76 = arith.constant 0 : index
    %c0_77 = arith.constant 0 : index
    %57 = vector.load %arg4[%c9_75, %c0_76, %c0_77] : memref<27x8x4xbf16, #tpu.memory_space<vmem>>, vector<1x8x4xbf16>
    %58 = vector.shape_cast %57 : vector<1x8x4xbf16> to vector<8x4xbf16>
    %cst_78 = arith.constant dense<0.000000e+00> : vector<8x128xf32>
    %59 = tpu.matmul %58, %56, %cst_78 {dimension_numbers = #tpu.dot_dimension_numbers<[1], [0], [0], [1], [0, 0, 1, 1], [], []>} : vector<8x4xbf16>, vector<4x128xbf16>, vector<8x128xf32> -> vector<8x128xf32>
    %60 = arith.addf %54, %59 : vector<8x128xf32>
    %c0_79 = arith.constant 0 : index
    %c5_80 = arith.constant 5 : index
    %c0_81 = arith.constant 0 : index
    %c0_82 = arith.constant 0 : index
    %c0_83 = arith.constant 0 : index
    %61 = vector.load %arg2[%c0_79, %c5_80, %c0_81, %c0_82, %c0_83] : memref<1x8x1x4x256xbf16, #tpu.memory_space<vmem>>, vector<1x1x1x4x128xbf16>
    %62 = vector.shape_cast %61 : vector<1x1x1x4x128xbf16> to vector<4x128xbf16>
    %c10_84 = arith.constant 10 : index
    %c0_85 = arith.constant 0 : index
    %c0_86 = arith.constant 0 : index
    %63 = vector.load %arg4[%c10_84, %c0_85, %c0_86] : memref<27x8x4xbf16, #tpu.memory_space<vmem>>, vector<1x8x4xbf16>
    %64 = vector.shape_cast %63 : vector<1x8x4xbf16> to vector<8x4xbf16>
    %cst_87 = arith.constant dense<0.000000e+00> : vector<8x128xf32>
    %65 = tpu.matmul %64, %62, %cst_87 {dimension_numbers = #tpu.dot_dimension_numbers<[1], [0], [0], [1], [0, 0, 1, 1], [], []>} : vector<8x4xbf16>, vector<4x128xbf16>, vector<8x128xf32> -> vector<8x128xf32>
    %66 = arith.addf %60, %65 : vector<8x128xf32>
    %c0_88 = arith.constant 0 : index
    %c4_89 = arith.constant 4 : index
    %c0_90 = arith.constant 0 : index
    %c0_91 = arith.constant 0 : index
    %c1_92 = arith.constant 1 : index
    %67 = vector.load %arg2[%c0_88, %c4_89, %c0_90, %c0_91, %c1_92] : memref<1x8x1x4x256xbf16, #tpu.memory_space<vmem>>, vector<1x1x1x4x128xbf16>
    %68 = vector.shape_cast %67 : vector<1x1x1x4x128xbf16> to vector<4x128xbf16>
    %c11 = arith.constant 11 : index
    %c0_93 = arith.constant 0 : index
    %c0_94 = arith.constant 0 : index
    %69 = vector.load %arg4[%c11, %c0_93, %c0_94] : memref<27x8x4xbf16, #tpu.memory_space<vmem>>, vector<1x8x4xbf16>
    %70 = vector.shape_cast %69 : vector<1x8x4xbf16> to vector<8x4xbf16>
    %cst_95 = arith.constant dense<0.000000e+00> : vector<8x128xf32>
    %71 = tpu.matmul %70, %68, %cst_95 {dimension_numbers = #tpu.dot_dimension_numbers<[1], [0], [0], [1], [0, 0, 1, 1], [], []>} : vector<8x4xbf16>, vector<4x128xbf16>, vector<8x128xf32> -> vector<8x128xf32>
    %72 = arith.addf %66, %71 : vector<8x128xf32>
    %c0_96 = arith.constant 0 : index
    %c6_97 = arith.constant 6 : index
    %c0_98 = arith.constant 0 : index
    %c0_99 = arith.constant 0 : index
    %c0_100 = arith.constant 0 : index
    %73 = vector.load %arg2[%c0_96, %c6_97, %c0_98, %c0_99, %c0_100] : memref<1x8x1x4x256xbf16, #tpu.memory_space<vmem>>, vector<1x1x1x4x128xbf16>
    %74 = vector.shape_cast %73 : vector<1x1x1x4x128xbf16> to vector<4x128xbf16>
    %c12 = arith.constant 12 : index
    %c0_101 = arith.constant 0 : index
    %c0_102 = arith.constant 0 : index
    %75 = vector.load %arg4[%c12, %c0_101, %c0_102] : memref<27x8x4xbf16, #tpu.memory_space<vmem>>, vector<1x8x4xbf16>
    %76 = vector.shape_cast %75 : vector<1x8x4xbf16> to vector<8x4xbf16>
    %cst_103 = arith.constant dense<0.000000e+00> : vector<8x128xf32>
    %77 = tpu.matmul %76, %74, %cst_103 {dimension_numbers = #tpu.dot_dimension_numbers<[1], [0], [0], [1], [0, 0, 1, 1], [], []>} : vector<8x4xbf16>, vector<4x128xbf16>, vector<8x128xf32> -> vector<8x128xf32>
    %78 = arith.addf %72, %77 : vector<8x128xf32>
    %c0_104 = arith.constant 0 : index
    %c7_105 = arith.constant 7 : index
    %c0_106 = arith.constant 0 : index
    %c0_107 = arith.constant 0 : index
    %c0_108 = arith.constant 0 : index
    %79 = vector.load %arg2[%c0_104, %c7_105, %c0_106, %c0_107, %c0_108] : memref<1x8x1x4x256xbf16, #tpu.memory_space<vmem>>, vector<1x1x1x4x128xbf16>
    %80 = vector.shape_cast %79 : vector<1x1x1x4x128xbf16> to vector<4x128xbf16>
    %c13 = arith.constant 13 : index
    %c0_109 = arith.constant 0 : index
    %c0_110 = arith.constant 0 : index
    %81 = vector.load %arg4[%c13, %c0_109, %c0_110] : memref<27x8x4xbf16, #tpu.memory_space<vmem>>, vector<1x8x4xbf16>
    %82 = vector.shape_cast %81 : vector<1x8x4xbf16> to vector<8x4xbf16>
    %cst_111 = arith.constant dense<0.000000e+00> : vector<8x128xf32>
    %83 = tpu.matmul %82, %80, %cst_111 {dimension_numbers = #tpu.dot_dimension_numbers<[1], [0], [0], [1], [0, 0, 1, 1], [], []>} : vector<8x4xbf16>, vector<4x128xbf16>, vector<8x128xf32> -> vector<8x128xf32>
    %84 = arith.addf %78, %83 : vector<8x128xf32>
    %c0_112 = arith.constant 0 : index
    %c6_113 = arith.constant 6 : index
    %c0_114 = arith.constant 0 : index
    %c0_115 = arith.constant 0 : index
    %c1_116 = arith.constant 1 : index
    %85 = vector.load %arg2[%c0_112, %c6_113, %c0_114, %c0_115, %c1_116] : memref<1x8x1x4x256xbf16, #tpu.memory_space<vmem>>, vector<1x1x1x4x128xbf16>
    %86 = vector.shape_cast %85 : vector<1x1x1x4x128xbf16> to vector<4x128xbf16>
    %c14 = arith.constant 14 : index
    %c0_117 = arith.constant 0 : index
    %c0_118 = arith.constant 0 : index
    %87 = vector.load %arg4[%c14, %c0_117, %c0_118] : memref<27x8x4xbf16, #tpu.memory_space<vmem>>, vector<1x8x4xbf16>
    %88 = vector.shape_cast %87 : vector<1x8x4xbf16> to vector<8x4xbf16>
    %cst_119 = arith.constant dense<0.000000e+00> : vector<8x128xf32>
    %89 = tpu.matmul %88, %86, %cst_119 {dimension_numbers = #tpu.dot_dimension_numbers<[1], [0], [0], [1], [0, 0, 1, 1], [], []>} : vector<8x4xbf16>, vector<4x128xbf16>, vector<8x128xf32> -> vector<8x128xf32>
    %90 = arith.addf %84, %89 : vector<8x128xf32>
    %c0_120 = arith.constant 0 : index
    %c4_121 = arith.constant 4 : index
    %c0_122 = arith.constant 0 : index
    %c0_123 = arith.constant 0 : index
    %c9_124 = arith.constant 9 : index
    %91 = vector.load %arg2[%c0_120, %c4_121, %c0_122, %c0_123, %c9_124] : memref<1x8x1x4x256xbf16, #tpu.memory_space<vmem>>, vector<1x1x1x4x128xbf16>
    %92 = vector.shape_cast %91 : vector<1x1x1x4x128xbf16> to vector<4x128xbf16>
    %c15 = arith.constant 15 : index
    %c0_125 = arith.constant 0 : index
    %c0_126 = arith.constant 0 : index
    %93 = vector.load %arg4[%c15, %c0_125, %c0_126] : memref<27x8x4xbf16, #tpu.memory_space<vmem>>, vector<1x8x4xbf16>
    %94 = vector.shape_cast %93 : vector<1x8x4xbf16> to vector<8x4xbf16>
    %cst_127 = arith.constant dense<0.000000e+00> : vector<8x128xf32>
    %95 = tpu.matmul %94, %92, %cst_127 {dimension_numbers = #tpu.dot_dimension_numbers<[1], [0], [0], [1], [0, 0, 1, 1], [], []>} : vector<8x4xbf16>, vector<4x128xbf16>, vector<8x128xf32> -> vector<8x128xf32>
    %96 = arith.addf %90, %95 : vector<8x128xf32>
    %c0_128 = arith.constant 0 : index
    %c5_129 = arith.constant 5 : index
    %c0_130 = arith.constant 0 : index
    %c0_131 = arith.constant 0 : index
    %c9_132 = arith.constant 9 : index
    %97 = vector.load %arg2[%c0_128, %c5_129, %c0_130, %c0_131, %c9_132] : memref<1x8x1x4x256xbf16, #tpu.memory_space<vmem>>, vector<1x1x1x4x128xbf16>
    %98 = vector.shape_cast %97 : vector<1x1x1x4x128xbf16> to vector<4x128xbf16>
    %c16 = arith.constant 16 : index
    %c0_133 = arith.constant 0 : index
    %c0_134 = arith.constant 0 : index
    %99 = vector.load %arg4[%c16, %c0_133, %c0_134] : memref<27x8x4xbf16, #tpu.memory_space<vmem>>, vector<1x8x4xbf16>
    %100 = vector.shape_cast %99 : vector<1x8x4xbf16> to vector<8x4xbf16>
    %cst_135 = arith.constant dense<0.000000e+00> : vector<8x128xf32>
    %101 = tpu.matmul %100, %98, %cst_135 {dimension_numbers = #tpu.dot_dimension_numbers<[1], [0], [0], [1], [0, 0, 1, 1], [], []>} : vector<8x4xbf16>, vector<4x128xbf16>, vector<8x128xf32> -> vector<8x128xf32>
    %102 = arith.addf %96, %101 : vector<8x128xf32>
    %c0_136 = arith.constant 0 : index
    %c4_137 = arith.constant 4 : index
    %c0_138 = arith.constant 0 : index
    %c0_139 = arith.constant 0 : index
    %c10_140 = arith.constant 10 : index
    %103 = vector.load %arg2[%c0_136, %c4_137, %c0_138, %c0_139, %c10_140] : memref<1x8x1x4x256xbf16, #tpu.memory_space<vmem>>, vector<1x1x1x4x128xbf16>
    %104 = vector.shape_cast %103 : vector<1x1x1x4x128xbf16> to vector<4x128xbf16>
    %c17 = arith.constant 17 : index
    %c0_141 = arith.constant 0 : index
    %c0_142 = arith.constant 0 : index
    %105 = vector.load %arg4[%c17, %c0_141, %c0_142] : memref<27x8x4xbf16, #tpu.memory_space<vmem>>, vector<1x8x4xbf16>
    %106 = vector.shape_cast %105 : vector<1x8x4xbf16> to vector<8x4xbf16>
    %cst_143 = arith.constant dense<0.000000e+00> : vector<8x128xf32>
    %107 = tpu.matmul %106, %104, %cst_143 {dimension_numbers = #tpu.dot_dimension_numbers<[1], [0], [0], [1], [0, 0, 1, 1], [], []>} : vector<8x4xbf16>, vector<4x128xbf16>, vector<8x128xf32> -> vector<8x128xf32>
    %108 = arith.addf %102, %107 : vector<8x128xf32>
    %c0_144 = arith.constant 0 : index
    %c0_145 = arith.constant 0 : index
    %c0_146 = arith.constant 0 : index
    %c0_147 = arith.constant 0 : index
    %c0_148 = arith.constant 0 : index
    %109 = vector.load %arg3[%c0_144, %c0_145, %c0_146, %c0_147, %c0_148] : memref<1x8x1x4x256xbf16, #tpu.memory_space<vmem>>, vector<1x1x1x4x128xbf16>
    %110 = vector.shape_cast %109 : vector<1x1x1x4x128xbf16> to vector<4x128xbf16>
    %c18 = arith.constant 18 : index
    %c0_149 = arith.constant 0 : index
    %c0_150 = arith.constant 0 : index
    %111 = vector.load %arg4[%c18, %c0_149, %c0_150] : memref<27x8x4xbf16, #tpu.memory_space<vmem>>, vector<1x8x4xbf16>
    %112 = vector.shape_cast %111 : vector<1x8x4xbf16> to vector<8x4xbf16>
    %cst_151 = arith.constant dense<0.000000e+00> : vector<8x128xf32>
    %113 = tpu.matmul %112, %110, %cst_151 {dimension_numbers = #tpu.dot_dimension_numbers<[1], [0], [0], [1], [0, 0, 1, 1], [], []>} : vector<8x4xbf16>, vector<4x128xbf16>, vector<8x128xf32> -> vector<8x128xf32>
    %114 = arith.addf %108, %113 : vector<8x128xf32>
    %c0_152 = arith.constant 0 : index
    %c1_153 = arith.constant 1 : index
    %c0_154 = arith.constant 0 : index
    %c0_155 = arith.constant 0 : index
    %c0_156 = arith.constant 0 : index
    %115 = vector.load %arg3[%c0_152, %c1_153, %c0_154, %c0_155, %c0_156] : memref<1x8x1x4x256xbf16, #tpu.memory_space<vmem>>, vector<1x1x1x4x128xbf16>
    %116 = vector.shape_cast %115 : vector<1x1x1x4x128xbf16> to vector<4x128xbf16>
    %c19 = arith.constant 19 : index
    %c0_157 = arith.constant 0 : index
    %c0_158 = arith.constant 0 : index
    %117 = vector.load %arg4[%c19, %c0_157, %c0_158] : memref<27x8x4xbf16, #tpu.memory_space<vmem>>, vector<1x8x4xbf16>
    %118 = vector.shape_cast %117 : vector<1x8x4xbf16> to vector<8x4xbf16>
    %cst_159 = arith.constant dense<0.000000e+00> : vector<8x128xf32>
    %119 = tpu.matmul %118, %116, %cst_159 {dimension_numbers = #tpu.dot_dimension_numbers<[1], [0], [0], [1], [0, 0, 1, 1], [], []>} : vector<8x4xbf16>, vector<4x128xbf16>, vector<8x128xf32> -> vector<8x128xf32>
    %120 = arith.addf %114, %119 : vector<8x128xf32>
    %c0_160 = arith.constant 0 : index
    %c0_161 = arith.constant 0 : index
    %c0_162 = arith.constant 0 : index
    %c0_163 = arith.constant 0 : index
    %c1_164 = arith.constant 1 : index
    %121 = vector.load %arg3[%c0_160, %c0_161, %c0_162, %c0_163, %c1_164] : memref<1x8x1x4x256xbf16, #tpu.memory_space<vmem>>, vector<1x1x1x4x128xbf16>
    %122 = vector.shape_cast %121 : vector<1x1x1x4x128xbf16> to vector<4x128xbf16>
    %c20 = arith.constant 20 : index
    %c0_165 = arith.constant 0 : index
    %c0_166 = arith.constant 0 : index
    %123 = vector.load %arg4[%c20, %c0_165, %c0_166] : memref<27x8x4xbf16, #tpu.memory_space<vmem>>, vector<1x8x4xbf16>
    %124 = vector.shape_cast %123 : vector<1x8x4xbf16> to vector<8x4xbf16>
    %cst_167 = arith.constant dense<0.000000e+00> : vector<8x128xf32>
    %125 = tpu.matmul %124, %122, %cst_167 {dimension_numbers = #tpu.dot_dimension_numbers<[1], [0], [0], [1], [0, 0, 1, 1], [], []>} : vector<8x4xbf16>, vector<4x128xbf16>, vector<8x128xf32> -> vector<8x128xf32>
    %126 = arith.addf %120, %125 : vector<8x128xf32>
    %c0_168 = arith.constant 0 : index
    %c2_169 = arith.constant 2 : index
    %c0_170 = arith.constant 0 : index
    %c0_171 = arith.constant 0 : index
    %c0_172 = arith.constant 0 : index
    %127 = vector.load %arg3[%c0_168, %c2_169, %c0_170, %c0_171, %c0_172] : memref<1x8x1x4x256xbf16, #tpu.memory_space<vmem>>, vector<1x1x1x4x128xbf16>
    %128 = vector.shape_cast %127 : vector<1x1x1x4x128xbf16> to vector<4x128xbf16>
    %c21 = arith.constant 21 : index
    %c0_173 = arith.constant 0 : index
    %c0_174 = arith.constant 0 : index
    %129 = vector.load %arg4[%c21, %c0_173, %c0_174] : memref<27x8x4xbf16, #tpu.memory_space<vmem>>, vector<1x8x4xbf16>
    %130 = vector.shape_cast %129 : vector<1x8x4xbf16> to vector<8x4xbf16>
    %cst_175 = arith.constant dense<0.000000e+00> : vector<8x128xf32>
    %131 = tpu.matmul %130, %128, %cst_175 {dimension_numbers = #tpu.dot_dimension_numbers<[1], [0], [0], [1], [0, 0, 1, 1], [], []>} : vector<8x4xbf16>, vector<4x128xbf16>, vector<8x128xf32> -> vector<8x128xf32>
    %132 = arith.addf %126, %131 : vector<8x128xf32>
    %c0_176 = arith.constant 0 : index
    %c3_177 = arith.constant 3 : index
    %c0_178 = arith.constant 0 : index
    %c0_179 = arith.constant 0 : index
    %c0_180 = arith.constant 0 : index
    %133 = vector.load %arg3[%c0_176, %c3_177, %c0_178, %c0_179, %c0_180] : memref<1x8x1x4x256xbf16, #tpu.memory_space<vmem>>, vector<1x1x1x4x128xbf16>
    %134 = vector.shape_cast %133 : vector<1x1x1x4x128xbf16> to vector<4x128xbf16>
    %c22 = arith.constant 22 : index
    %c0_181 = arith.constant 0 : index
    %c0_182 = arith.constant 0 : index
    %135 = vector.load %arg4[%c22, %c0_181, %c0_182] : memref<27x8x4xbf16, #tpu.memory_space<vmem>>, vector<1x8x4xbf16>
    %136 = vector.shape_cast %135 : vector<1x8x4xbf16> to vector<8x4xbf16>
    %cst_183 = arith.constant dense<0.000000e+00> : vector<8x128xf32>
    %137 = tpu.matmul %136, %134, %cst_183 {dimension_numbers = #tpu.dot_dimension_numbers<[1], [0], [0], [1], [0, 0, 1, 1], [], []>} : vector<8x4xbf16>, vector<4x128xbf16>, vector<8x128xf32> -> vector<8x128xf32>
    %138 = arith.addf %132, %137 : vector<8x128xf32>
    %c0_184 = arith.constant 0 : index
    %c2_185 = arith.constant 2 : index
    %c0_186 = arith.constant 0 : index
    %c0_187 = arith.constant 0 : index
    %c1_188 = arith.constant 1 : index
    %139 = vector.load %arg3[%c0_184, %c2_185, %c0_186, %c0_187, %c1_188] : memref<1x8x1x4x256xbf16, #tpu.memory_space<vmem>>, vector<1x1x1x4x128xbf16>
    %140 = vector.shape_cast %139 : vector<1x1x1x4x128xbf16> to vector<4x128xbf16>
    %c23 = arith.constant 23 : index
    %c0_189 = arith.constant 0 : index
    %c0_190 = arith.constant 0 : index
    %141 = vector.load %arg4[%c23, %c0_189, %c0_190] : memref<27x8x4xbf16, #tpu.memory_space<vmem>>, vector<1x8x4xbf16>
    %142 = vector.shape_cast %141 : vector<1x8x4xbf16> to vector<8x4xbf16>
    %cst_191 = arith.constant dense<0.000000e+00> : vector<8x128xf32>
    %143 = tpu.matmul %142, %140, %cst_191 {dimension_numbers = #tpu.dot_dimension_numbers<[1], [0], [0], [1], [0, 0, 1, 1], [], []>} : vector<8x4xbf16>, vector<4x128xbf16>, vector<8x128xf32> -> vector<8x128xf32>
    %144 = arith.addf %138, %143 : vector<8x128xf32>
    %c0_192 = arith.constant 0 : index
    %c0_193 = arith.constant 0 : index
    %c0_194 = arith.constant 0 : index
    %c0_195 = arith.constant 0 : index
    %c9_196 = arith.constant 9 : index
    %145 = vector.load %arg3[%c0_192, %c0_193, %c0_194, %c0_195, %c9_196] : memref<1x8x1x4x256xbf16, #tpu.memory_space<vmem>>, vector<1x1x1x4x128xbf16>
    %146 = vector.shape_cast %145 : vector<1x1x1x4x128xbf16> to vector<4x128xbf16>
    %c24 = arith.constant 24 : index
    %c0_197 = arith.constant 0 : index
    %c0_198 = arith.constant 0 : index
    %147 = vector.load %arg4[%c24, %c0_197, %c0_198] : memref<27x8x4xbf16, #tpu.memory_space<vmem>>, vector<1x8x4xbf16>
    %148 = vector.shape_cast %147 : vector<1x8x4xbf16> to vector<8x4xbf16>
    %cst_199 = arith.constant dense<0.000000e+00> : vector<8x128xf32>
    %149 = tpu.matmul %148, %146, %cst_199 {dimension_numbers = #tpu.dot_dimension_numbers<[1], [0], [0], [1], [0, 0, 1, 1], [], []>} : vector<8x4xbf16>, vector<4x128xbf16>, vector<8x128xf32> -> vector<8x128xf32>
    %150 = arith.addf %144, %149 : vector<8x128xf32>
    %c0_200 = arith.constant 0 : index
    %c1_201 = arith.constant 1 : index
    %c0_202 = arith.constant 0 : index
    %c0_203 = arith.constant 0 : index
    %c9_204 = arith.constant 9 : index
    %151 = vector.load %arg3[%c0_200, %c1_201, %c0_202, %c0_203, %c9_204] : memref<1x8x1x4x256xbf16, #tpu.memory_space<vmem>>, vector<1x1x1x4x128xbf16>
    %152 = vector.shape_cast %151 : vector<1x1x1x4x128xbf16> to vector<4x128xbf16>
    %c25 = arith.constant 25 : index
    %c0_205 = arith.constant 0 : index
    %c0_206 = arith.constant 0 : index
    %153 = vector.load %arg4[%c25, %c0_205, %c0_206] : memref<27x8x4xbf16, #tpu.memory_space<vmem>>, vector<1x8x4xbf16>
    %154 = vector.shape_cast %153 : vector<1x8x4xbf16> to vector<8x4xbf16>
    %cst_207 = arith.constant dense<0.000000e+00> : vector<8x128xf32>
    %155 = tpu.matmul %154, %152, %cst_207 {dimension_numbers = #tpu.dot_dimension_numbers<[1], [0], [0], [1], [0, 0, 1, 1], [], []>} : vector<8x4xbf16>, vector<4x128xbf16>, vector<8x128xf32> -> vector<8x128xf32>
    %156 = arith.addf %150, %155 : vector<8x128xf32>
    %c0_208 = arith.constant 0 : index
    %c0_209 = arith.constant 0 : index
    %c0_210 = arith.constant 0 : index
    %c0_211 = arith.constant 0 : index
    %c10_212 = arith.constant 10 : index
    %157 = vector.load %arg3[%c0_208, %c0_209, %c0_210, %c0_211, %c10_212] : memref<1x8x1x4x256xbf16, #tpu.memory_space<vmem>>, vector<1x1x1x4x128xbf16>
    %158 = vector.shape_cast %157 : vector<1x1x1x4x128xbf16> to vector<4x128xbf16>
    %c26 = arith.constant 26 : index
    %c0_213 = arith.constant 0 : index
    %c0_214 = arith.constant 0 : index
    %159 = vector.load %arg4[%c26, %c0_213, %c0_214] : memref<27x8x4xbf16, #tpu.memory_space<vmem>>, vector<1x8x4xbf16>
    %160 = vector.shape_cast %159 : vector<1x8x4xbf16> to vector<8x4xbf16>
    %cst_215 = arith.constant dense<0.000000e+00> : vector<8x128xf32>
    %161 = tpu.matmul %160, %158, %cst_215 {dimension_numbers = #tpu.dot_dimension_numbers<[1], [0], [0], [1], [0, 0, 1, 1], [], []>} : vector<8x4xbf16>, vector<4x128xbf16>, vector<8x128xf32> -> vector<8x128xf32>
    %162 = arith.addf %156, %161 : vector<8x128xf32>
    %c0_216 = arith.constant 0 : index
    %c0_217 = arith.constant 0 : index
    %c0_218 = arith.constant 0 : index
    %c0_219 = arith.constant 0 : index
    %163 = vector.load %arg6[%c0_216, %c0_217, %c0_218, %c0_219] : memref<1x1x8x128xf32, #tpu.memory_space<vmem>>, vector<1x1x8x128xf32>
    %164 = vector.shape_cast %163 : vector<1x1x8x128xf32> to vector<8x128xf32>
    %165 = vector.shape_cast %162 : vector<8x128xf32> to vector<1x1x8x128xf32>
    tpu.vector_store %arg6[%c0_216, %c0_217, %c0_218, %c0_219], %165 {strides = array<i32>} : memref<1x1x8x128xf32, #tpu.memory_space<vmem>>, vector<1x1x8x128xf32>,
    %c0_220 = arith.constant 0 : index
    %c0_221 = arith.constant 0 : index
    %166 = vector.load %arg5[%c0_220, %c0_221] : memref<1x128xf32, #tpu.memory_space<vmem>>, vector<1x128xf32>
    %167 = vector.broadcast %166 : vector<1x128xf32> to vector<8x128xf32>
    %168 = arith.mulf %162, %167 : vector<8x128xf32>
    %cst_222 = arith.constant dense<0.000000e+00> : vector<8xf32>
    %169 = vector.multi_reduction <add>, %168, %cst_222 [1] : vector<8x128xf32> to vector<8xf32>
    %170 = vector.shape_cast %169 : vector<8xf32> to vector<8x1xf32>
    %c0_223 = arith.constant 0 : index
    %c0_224 = arith.constant 0 : index
    %c0_225 = arith.constant 0 : index
    %c0_226 = arith.constant 0 : index
    %171 = vector.load %arg7[%c0_223, %c0_224, %c0_225, %c0_226] : memref<1x1x8x2xf32, #tpu.memory_space<vmem>>, vector<1x1x8x1xf32>
    %172 = vector.shape_cast %171 : vector<1x1x8x1xf32> to vector<8x1xf32>
    %173 = vector.shape_cast %170 : vector<8x1xf32> to vector<1x1x8x1xf32>
    tpu.vector_store %arg7[%c0_223, %c0_224, %c0_225, %c0_226], %173 {strides = array<i32>} : memref<1x1x8x2xf32, #tpu.memory_space<vmem>>, vector<1x1x8x1xf32>,
    %174 = arith.mulf %168, %168 : vector<8x128xf32>
    %cst_227 = arith.constant dense<0.000000e+00> : vector<8xf32>
    %175 = vector.multi_reduction <add>, %174, %cst_227 [1] : vector<8x128xf32> to vector<8xf32>
    %176 = vector.shape_cast %175 : vector<8xf32> to vector<8x1xf32>
    %c0_228 = arith.constant 0 : index
    %c0_229 = arith.constant 0 : index
    %c0_230 = arith.constant 0 : index
    %c1_231 = arith.constant 1 : index
    %177 = vector.load %arg7[%c0_228, %c0_229, %c0_230, %c1_231] : memref<1x1x8x2xf32, #tpu.memory_space<vmem>>, vector<1x1x8x1xf32>
    %178 = vector.shape_cast %177 : vector<1x1x8x1xf32> to vector<8x1xf32>
    %179 = vector.shape_cast %176 : vector<8x1xf32> to vector<1x1x8x1xf32>
    tpu.vector_store %arg7[%c0_228, %c0_229, %c0_230, %c1_231], %179 {strides = array<i32>} : memref<1x1x8x2xf32, #tpu.memory_space<vmem>>, vector<1x1x8x1xf32>,
    return
  }
  func.func @transform_0(%arg0: i32, %arg1: i32) -> (i32, i32, i32, i32, i32) {
    %c0_i32 = arith.constant 0 : i32
    %0 = arith.addi %arg1, %c0_i32 : i32
    %c0_i32_0 = arith.constant 0 : i32
    %c0_i32_1 = arith.constant 0 : i32
    %c0_i32_2 = arith.constant 0 : i32
    %c0_i32_3 = arith.constant 0 : i32
    return %arg0, %c0_i32_0, %0, %c0_i32_1, %c0_i32_2 : i32, i32, i32, i32, i32
  }
  func.func @transform_1(%arg0: i32, %arg1: i32) -> (i32, i32, i32, i32, i32) {
    %c1_i32 = arith.constant 1 : i32
    %0 = arith.addi %arg1, %c1_i32 : i32
    %c0_i32 = arith.constant 0 : i32
    %c0_i32_0 = arith.constant 0 : i32
    %c0_i32_1 = arith.constant 0 : i32
    %c0_i32_2 = arith.constant 0 : i32
    return %arg0, %c0_i32, %0, %c0_i32_0, %c0_i32_1 : i32, i32, i32, i32, i32
  }
  func.func @transform_2(%arg0: i32, %arg1: i32) -> (i32, i32, i32) {
    %c0_i32 = arith.constant 0 : i32
    %c0_i32_0 = arith.constant 0 : i32
    %c0_i32_1 = arith.constant 0 : i32
    %c0_i32_2 = arith.constant 0 : i32
    return %c0_i32, %c0_i32_0, %c0_i32_1 : i32, i32, i32
  }
  func.func @transform_3(%arg0: i32, %arg1: i32) -> (i32, i32) {
    %c0_i32 = arith.constant 0 : i32
    %c0_i32_0 = arith.constant 0 : i32
    %c0_i32_1 = arith.constant 0 : i32
    return %c0_i32, %c0_i32_0 : i32, i32
  }
  func.func @transform_4(%arg0: i32, %arg1: i32) -> (i32, i32, i32, i32) {
    %c0_i32 = arith.constant 0 : i32
    %c0_i32_0 = arith.constant 0 : i32
    %c0_i32_1 = arith.constant 0 : i32
    return %arg0, %arg1, %c0_i32, %c0_i32_0 : i32, i32, i32, i32
  }
  func.func @transform_5(%arg0: i32, %arg1: i32) -> (i32, i32, i32, i32) {
    %c0_i32 = arith.constant 0 : i32
    %c0_i32_0 = arith.constant 0 : i32
    %c0_i32_1 = arith.constant 0 : i32
    return %arg0, %arg1, %c0_i32, %c0_i32_0 : i32, i32, i32, i32
  }
}

module attributes {stable_mosaic.version = 11 : i64} {
  func.func @_norm_act_kernel(%arg0: i32, %arg1: i32, %arg2: memref<1x1x8x128xf32, #tpu.memory_space<vmem>>, %arg3: memref<1x8x2xf32, #tpu.memory_space<vmem>>, %arg4: memref<1x1x8x128xf32, #tpu.memory_space<vmem>>) attributes {dimension_semantics = [#tpu.dimension_semantics<parallel>, #tpu.dimension_semantics<parallel>], iteration_bounds = array<i64: 2, 8>, scalar_prefetch = 0 : i64, scratch_operands = 0 : i64, tpu.core_type = #tpu.core_type<tc>, window_params = [{transform_indices = @transform_0, window_bounds = array<i64: 1, 1, 8, 128>}, {transform_indices = @transform_1, window_bounds = array<i64: 1, 8, 2>}, {transform_indices = @transform_2, window_bounds = array<i64: 1, 1, 8, 128>}]} {
    %c0 = arith.constant 0 : index
    %c0_0 = arith.constant 0 : index
    %c0_1 = arith.constant 0 : index
    %c0_2 = arith.constant 0 : index
    %0 = vector.load %arg2[%c0, %c0_0, %c0_1, %c0_2] : memref<1x1x8x128xf32, #tpu.memory_space<vmem>>, vector<1x1x8x128xf32>
    %1 = vector.shape_cast %0 : vector<1x1x8x128xf32> to vector<8x128xf32>
    %c0_3 = arith.constant 0 : index
    %c0_4 = arith.constant 0 : index
    %c0_5 = arith.constant 0 : index
    %2 = vector.load %arg3[%c0_3, %c0_4, %c0_5] : memref<1x8x2xf32, #tpu.memory_space<vmem>>, vector<1x8x1xf32>
    %3 = vector.shape_cast %2 : vector<1x8x1xf32> to vector<8x1xf32>
    %c0_6 = arith.constant 0 : index
    %c0_7 = arith.constant 0 : index
    %c1 = arith.constant 1 : index
    %4 = vector.load %arg3[%c0_6, %c0_7, %c1] : memref<1x8x2xf32, #tpu.memory_space<vmem>>, vector<1x8x1xf32>
    %5 = vector.shape_cast %4 : vector<1x8x1xf32> to vector<8x1xf32>
    %6 = vector.broadcast %3 : vector<8x1xf32> to vector<8x128xf32>
    %7 = arith.mulf %1, %6 : vector<8x128xf32>
    %8 = vector.broadcast %5 : vector<8x1xf32> to vector<8x128xf32>
    %9 = arith.addf %7, %8 : vector<8x128xf32>
    %cst = arith.constant 0.000000e+00 : f32
    %10 = vector.broadcast %cst : f32 to vector<8x128xf32>
    %11 = arith.cmpf oge, %9, %10 : vector<8x128xf32>
    %cst_8 = arith.constant 0.00999999977 : f32
    %12 = vector.broadcast %cst_8 : f32 to vector<8x128xf32>
    %13 = arith.mulf %12, %9 : vector<8x128xf32>
    %14 = arith.select %11, %9, %13 : vector<8x128xi1>, vector<8x128xf32>
    %c0_9 = arith.constant 0 : index
    %c0_10 = arith.constant 0 : index
    %c0_11 = arith.constant 0 : index
    %c0_12 = arith.constant 0 : index
    %15 = vector.load %arg4[%c0_9, %c0_10, %c0_11, %c0_12] : memref<1x1x8x128xf32, #tpu.memory_space<vmem>>, vector<1x1x8x128xf32>
    %16 = vector.shape_cast %15 : vector<1x1x8x128xf32> to vector<8x128xf32>
    %17 = vector.shape_cast %14 : vector<8x128xf32> to vector<1x1x8x128xf32>
    tpu.vector_store %arg4[%c0_9, %c0_10, %c0_11, %c0_12], %17 {strides = array<i32>} : memref<1x1x8x128xf32, #tpu.memory_space<vmem>>, vector<1x1x8x128xf32>,
    return
  }
  func.func @transform_0(%arg0: i32, %arg1: i32) -> (i32, i32, i32, i32) {
    %c0_i32 = arith.constant 0 : i32
    %c0_i32_0 = arith.constant 0 : i32
    %c0_i32_1 = arith.constant 0 : i32
    return %arg0, %arg1, %c0_i32, %c0_i32_0 : i32, i32, i32, i32
  }
  func.func @transform_1(%arg0: i32, %arg1: i32) -> (i32, i32, i32) {
    %c0_i32 = arith.constant 0 : i32
    %c0_i32_0 = arith.constant 0 : i32
    %c0_i32_1 = arith.constant 0 : i32
    return %arg0, %c0_i32, %c0_i32_0 : i32, i32, i32
  }
  func.func @transform_2(%arg0: i32, %arg1: i32) -> (i32, i32, i32, i32) {
    %c0_i32 = arith.constant 0 : i32
    %c0_i32_0 = arith.constant 0 : i32
    %c0_i32_1 = arith.constant 0 : i32
    return %arg0, %arg1, %c0_i32, %c0_i32_0 : i32, i32, i32, i32
  }
}

module attributes {stable_mosaic.version = 11 : i64} {
  func.func @kernel(%arg0: i32, %arg1: i32, %arg2: memref<1x8x1x8x256xbf16, #tpu.memory_space<vmem>>, %arg3: memref<1x8x1x8x256xbf16, #tpu.memory_space<vmem>>, %arg4: memref<27x16x8xbf16, #tpu.memory_space<vmem>>, %arg5: memref<1x128xf32, #tpu.memory_space<vmem>>, %arg6: memref<1x1x16x128xf32, #tpu.memory_space<vmem>>, %arg7: memref<1x1x16x2xf32, #tpu.memory_space<vmem>>) attributes {dimension_semantics = [#tpu.dimension_semantics<parallel>, #tpu.dimension_semantics<parallel>], iteration_bounds = array<i64: 2, 4>, scalar_prefetch = 0 : i64, scratch_operands = 0 : i64, tpu.core_type = #tpu.core_type<tc>, window_params = [{transform_indices = @transform_0, window_bounds = array<i64: 1, 8, 1, 8, 256>}, {transform_indices = @transform_1, window_bounds = array<i64: 1, 8, 1, 8, 256>}, {pipeline_mode = #tpu.pipeline_mode<synchronous>, transform_indices = @transform_2, window_bounds = array<i64: 27, 16, 8>}, {pipeline_mode = #tpu.pipeline_mode<synchronous>, transform_indices = @transform_3, window_bounds = array<i64: 1, 128>}, {transform_indices = @transform_4, window_bounds = array<i64: 1, 1, 16, 128>}, {transform_indices = @transform_5, window_bounds = array<i64: 1, 1, 16, 2>}]} {
    %cst = arith.constant 0.000000e+00 : f32
    %0 = vector.broadcast %cst : f32 to vector<16x128xf32>
    %c0 = arith.constant 0 : index
    %c0_0 = arith.constant 0 : index
    %c0_1 = arith.constant 0 : index
    %c0_2 = arith.constant 0 : index
    %c0_3 = arith.constant 0 : index
    %1 = vector.load %arg2[%c0, %c0_0, %c0_1, %c0_2, %c0_3] : memref<1x8x1x8x256xbf16, #tpu.memory_space<vmem>>, vector<1x1x1x8x128xbf16>
    %2 = vector.shape_cast %1 : vector<1x1x1x8x128xbf16> to vector<8x128xbf16>
    %c0_4 = arith.constant 0 : index
    %c0_5 = arith.constant 0 : index
    %c0_6 = arith.constant 0 : index
    %3 = vector.load %arg4[%c0_4, %c0_5, %c0_6] : memref<27x16x8xbf16, #tpu.memory_space<vmem>>, vector<1x16x8xbf16>
    %4 = vector.shape_cast %3 : vector<1x16x8xbf16> to vector<16x8xbf16>
    %cst_7 = arith.constant dense<0.000000e+00> : vector<16x128xf32>
    %5 = tpu.matmul %4, %2, %cst_7 {dimension_numbers = #tpu.dot_dimension_numbers<[1], [0], [0], [1], [0, 0, 1, 1], [], []>} : vector<16x8xbf16>, vector<8x128xbf16>, vector<16x128xf32> -> vector<16x128xf32>
    %6 = arith.addf %0, %5 : vector<16x128xf32>
    %c0_8 = arith.constant 0 : index
    %c1 = arith.constant 1 : index
    %c0_9 = arith.constant 0 : index
    %c0_10 = arith.constant 0 : index
    %c0_11 = arith.constant 0 : index
    %7 = vector.load %arg2[%c0_8, %c1, %c0_9, %c0_10, %c0_11] : memref<1x8x1x8x256xbf16, #tpu.memory_space<vmem>>, vector<1x1x1x8x128xbf16>
    %8 = vector.shape_cast %7 : vector<1x1x1x8x128xbf16> to vector<8x128xbf16>
    %c1_12 = arith.constant 1 : index
    %c0_13 = arith.constant 0 : index
    %c0_14 = arith.constant 0 : index
    %9 = vector.load %arg4[%c1_12, %c0_13, %c0_14] : memref<27x16x8xbf16, #tpu.memory_space<vmem>>, vector<1x16x8xbf16>
    %10 = vector.shape_cast %9 : vector<1x16x8xbf16> to vector<16x8xbf16>
    %cst_15 = arith.constant dense<0.000000e+00> : vector<16x128xf32>
    %11 = tpu.matmul %10, %8, %cst_15 {dimension_numbers = #tpu.dot_dimension_numbers<[1], [0], [0], [1], [0, 0, 1, 1], [], []>} : vector<16x8xbf16>, vector<8x128xbf16>, vector<16x128xf32> -> vector<16x128xf32>
    %12 = arith.addf %6, %11 : vector<16x128xf32>
    %c0_16 = arith.constant 0 : index
    %c0_17 = arith.constant 0 : index
    %c0_18 = arith.constant 0 : index
    %c0_19 = arith.constant 0 : index
    %c1_20 = arith.constant 1 : index
    %13 = vector.load %arg2[%c0_16, %c0_17, %c0_18, %c0_19, %c1_20] : memref<1x8x1x8x256xbf16, #tpu.memory_space<vmem>>, vector<1x1x1x8x128xbf16>
    %14 = vector.shape_cast %13 : vector<1x1x1x8x128xbf16> to vector<8x128xbf16>
    %c2 = arith.constant 2 : index
    %c0_21 = arith.constant 0 : index
    %c0_22 = arith.constant 0 : index
    %15 = vector.load %arg4[%c2, %c0_21, %c0_22] : memref<27x16x8xbf16, #tpu.memory_space<vmem>>, vector<1x16x8xbf16>
    %16 = vector.shape_cast %15 : vector<1x16x8xbf16> to vector<16x8xbf16>
    %cst_23 = arith.constant dense<0.000000e+00> : vector<16x128xf32>
    %17 = tpu.matmul %16, %14, %cst_23 {dimension_numbers = #tpu.dot_dimension_numbers<[1], [0], [0], [1], [0, 0, 1, 1], [], []>} : vector<16x8xbf16>, vector<8x128xbf16>, vector<16x128xf32> -> vector<16x128xf32>
    %18 = arith.addf %12, %17 : vector<16x128xf32>
    %c0_24 = arith.constant 0 : index
    %c2_25 = arith.constant 2 : index
    %c0_26 = arith.constant 0 : index
    %c0_27 = arith.constant 0 : index
    %c0_28 = arith.constant 0 : index
    %19 = vector.load %arg2[%c0_24, %c2_25, %c0_26, %c0_27, %c0_28] : memref<1x8x1x8x256xbf16, #tpu.memory_space<vmem>>, vector<1x1x1x8x128xbf16>
    %20 = vector.shape_cast %19 : vector<1x1x1x8x128xbf16> to vector<8x128xbf16>
    %c3 = arith.constant 3 : index
    %c0_29 = arith.constant 0 : index
    %c0_30 = arith.constant 0 : index
    %21 = vector.load %arg4[%c3, %c0_29, %c0_30] : memref<27x16x8xbf16, #tpu.memory_space<vmem>>, vector<1x16x8xbf16>
    %22 = vector.shape_cast %21 : vector<1x16x8xbf16> to vector<16x8xbf16>
    %cst_31 = arith.constant dense<0.000000e+00> : vector<16x128xf32>
    %23 = tpu.matmul %22, %20, %cst_31 {dimension_numbers = #tpu.dot_dimension_numbers<[1], [0], [0], [1], [0, 0, 1, 1], [], []>} : vector<16x8xbf16>, vector<8x128xbf16>, vector<16x128xf32> -> vector<16x128xf32>
    %24 = arith.addf %18, %23 : vector<16x128xf32>
    %c0_32 = arith.constant 0 : index
    %c3_33 = arith.constant 3 : index
    %c0_34 = arith.constant 0 : index
    %c0_35 = arith.constant 0 : index
    %c0_36 = arith.constant 0 : index
    %25 = vector.load %arg2[%c0_32, %c3_33, %c0_34, %c0_35, %c0_36] : memref<1x8x1x8x256xbf16, #tpu.memory_space<vmem>>, vector<1x1x1x8x128xbf16>
    %26 = vector.shape_cast %25 : vector<1x1x1x8x128xbf16> to vector<8x128xbf16>
    %c4 = arith.constant 4 : index
    %c0_37 = arith.constant 0 : index
    %c0_38 = arith.constant 0 : index
    %27 = vector.load %arg4[%c4, %c0_37, %c0_38] : memref<27x16x8xbf16, #tpu.memory_space<vmem>>, vector<1x16x8xbf16>
    %28 = vector.shape_cast %27 : vector<1x16x8xbf16> to vector<16x8xbf16>
    %cst_39 = arith.constant dense<0.000000e+00> : vector<16x128xf32>
    %29 = tpu.matmul %28, %26, %cst_39 {dimension_numbers = #tpu.dot_dimension_numbers<[1], [0], [0], [1], [0, 0, 1, 1], [], []>} : vector<16x8xbf16>, vector<8x128xbf16>, vector<16x128xf32> -> vector<16x128xf32>
    %30 = arith.addf %24, %29 : vector<16x128xf32>
    %c0_40 = arith.constant 0 : index
    %c2_41 = arith.constant 2 : index
    %c0_42 = arith.constant 0 : index
    %c0_43 = arith.constant 0 : index
    %c1_44 = arith.constant 1 : index
    %31 = vector.load %arg2[%c0_40, %c2_41, %c0_42, %c0_43, %c1_44] : memref<1x8x1x8x256xbf16, #tpu.memory_space<vmem>>, vector<1x1x1x8x128xbf16>
    %32 = vector.shape_cast %31 : vector<1x1x1x8x128xbf16> to vector<8x128xbf16>
    %c5 = arith.constant 5 : index
    %c0_45 = arith.constant 0 : index
    %c0_46 = arith.constant 0 : index
    %33 = vector.load %arg4[%c5, %c0_45, %c0_46] : memref<27x16x8xbf16, #tpu.memory_space<vmem>>, vector<1x16x8xbf16>
    %34 = vector.shape_cast %33 : vector<1x16x8xbf16> to vector<16x8xbf16>
    %cst_47 = arith.constant dense<0.000000e+00> : vector<16x128xf32>
    %35 = tpu.matmul %34, %32, %cst_47 {dimension_numbers = #tpu.dot_dimension_numbers<[1], [0], [0], [1], [0, 0, 1, 1], [], []>} : vector<16x8xbf16>, vector<8x128xbf16>, vector<16x128xf32> -> vector<16x128xf32>
    %36 = arith.addf %30, %35 : vector<16x128xf32>
    %c0_48 = arith.constant 0 : index
    %c0_49 = arith.constant 0 : index
    %c0_50 = arith.constant 0 : index
    %c0_51 = arith.constant 0 : index
    %c5_52 = arith.constant 5 : index
    %37 = vector.load %arg2[%c0_48, %c0_49, %c0_50, %c0_51, %c5_52] : memref<1x8x1x8x256xbf16, #tpu.memory_space<vmem>>, vector<1x1x1x8x128xbf16>
    %38 = vector.shape_cast %37 : vector<1x1x1x8x128xbf16> to vector<8x128xbf16>
    %c6 = arith.constant 6 : index
    %c0_53 = arith.constant 0 : index
    %c0_54 = arith.constant 0 : index
    %39 = vector.load %arg4[%c6, %c0_53, %c0_54] : memref<27x16x8xbf16, #tpu.memory_space<vmem>>, vector<1x16x8xbf16>
    %40 = vector.shape_cast %39 : vector<1x16x8xbf16> to vector<16x8xbf16>
    %cst_55 = arith.constant dense<0.000000e+00> : vector<16x128xf32>
    %41 = tpu.matmul %40, %38, %cst_55 {dimension_numbers = #tpu.dot_dimension_numbers<[1], [0], [0], [1], [0, 0, 1, 1], [], []>} : vector<16x8xbf16>, vector<8x128xbf16>, vector<16x128xf32> -> vector<16x128xf32>
    %42 = arith.addf %36, %41 : vector<16x128xf32>
    %c0_56 = arith.constant 0 : index
    %c1_57 = arith.constant 1 : index
    %c0_58 = arith.constant 0 : index
    %c0_59 = arith.constant 0 : index
    %c5_60 = arith.constant 5 : index
    %43 = vector.load %arg2[%c0_56, %c1_57, %c0_58, %c0_59, %c5_60] : memref<1x8x1x8x256xbf16, #tpu.memory_space<vmem>>, vector<1x1x1x8x128xbf16>
    %44 = vector.shape_cast %43 : vector<1x1x1x8x128xbf16> to vector<8x128xbf16>
    %c7 = arith.constant 7 : index
    %c0_61 = arith.constant 0 : index
    %c0_62 = arith.constant 0 : index
    %45 = vector.load %arg4[%c7, %c0_61, %c0_62] : memref<27x16x8xbf16, #tpu.memory_space<vmem>>, vector<1x16x8xbf16>
    %46 = vector.shape_cast %45 : vector<1x16x8xbf16> to vector<16x8xbf16>
    %cst_63 = arith.constant dense<0.000000e+00> : vector<16x128xf32>
    %47 = tpu.matmul %46, %44, %cst_63 {dimension_numbers = #tpu.dot_dimension_numbers<[1], [0], [0], [1], [0, 0, 1, 1], [], []>} : vector<16x8xbf16>, vector<8x128xbf16>, vector<16x128xf32> -> vector<16x128xf32>
    %48 = arith.addf %42, %47 : vector<16x128xf32>
    %c0_64 = arith.constant 0 : index
    %c0_65 = arith.constant 0 : index
    %c0_66 = arith.constant 0 : index
    %c0_67 = arith.constant 0 : index
    %c6_68 = arith.constant 6 : index
    %49 = vector.load %arg2[%c0_64, %c0_65, %c0_66, %c0_67, %c6_68] : memref<1x8x1x8x256xbf16, #tpu.memory_space<vmem>>, vector<1x1x1x8x128xbf16>
    %50 = vector.shape_cast %49 : vector<1x1x1x8x128xbf16> to vector<8x128xbf16>
    %c8 = arith.constant 8 : index
    %c0_69 = arith.constant 0 : index
    %c0_70 = arith.constant 0 : index
    %51 = vector.load %arg4[%c8, %c0_69, %c0_70] : memref<27x16x8xbf16, #tpu.memory_space<vmem>>, vector<1x16x8xbf16>
    %52 = vector.shape_cast %51 : vector<1x16x8xbf16> to vector<16x8xbf16>
    %cst_71 = arith.constant dense<0.000000e+00> : vector<16x128xf32>
    %53 = tpu.matmul %52, %50, %cst_71 {dimension_numbers = #tpu.dot_dimension_numbers<[1], [0], [0], [1], [0, 0, 1, 1], [], []>} : vector<16x8xbf16>, vector<8x128xbf16>, vector<16x128xf32> -> vector<16x128xf32>
    %54 = arith.addf %48, %53 : vector<16x128xf32>
    %c0_72 = arith.constant 0 : index
    %c4_73 = arith.constant 4 : index
    %c0_74 = arith.constant 0 : index
    %c0_75 = arith.constant 0 : index
    %c0_76 = arith.constant 0 : index
    %55 = vector.load %arg2[%c0_72, %c4_73, %c0_74, %c0_75, %c0_76] : memref<1x8x1x8x256xbf16, #tpu.memory_space<vmem>>, vector<1x1x1x8x128xbf16>
    %56 = vector.shape_cast %55 : vector<1x1x1x8x128xbf16> to vector<8x128xbf16>
    %c9 = arith.constant 9 : index
    %c0_77 = arith.constant 0 : index
    %c0_78 = arith.constant 0 : index
    %57 = vector.load %arg4[%c9, %c0_77, %c0_78] : memref<27x16x8xbf16, #tpu.memory_space<vmem>>, vector<1x16x8xbf16>
    %58 = vector.shape_cast %57 : vector<1x16x8xbf16> to vector<16x8xbf16>
    %cst_79 = arith.constant dense<0.000000e+00> : vector<16x128xf32>
    %59 = tpu.matmul %58, %56, %cst_79 {dimension_numbers = #tpu.dot_dimension_numbers<[1], [0], [0], [1], [0, 0, 1, 1], [], []>} : vector<16x8xbf16>, vector<8x128xbf16>, vector<16x128xf32> -> vector<16x128xf32>
    %60 = arith.addf %54, %59 : vector<16x128xf32>
    %c0_80 = arith.constant 0 : index
    %c5_81 = arith.constant 5 : index
    %c0_82 = arith.constant 0 : index
    %c0_83 = arith.constant 0 : index
    %c0_84 = arith.constant 0 : index
    %61 = vector.load %arg2[%c0_80, %c5_81, %c0_82, %c0_83, %c0_84] : memref<1x8x1x8x256xbf16, #tpu.memory_space<vmem>>, vector<1x1x1x8x128xbf16>
    %62 = vector.shape_cast %61 : vector<1x1x1x8x128xbf16> to vector<8x128xbf16>
    %c10 = arith.constant 10 : index
    %c0_85 = arith.constant 0 : index
    %c0_86 = arith.constant 0 : index
    %63 = vector.load %arg4[%c10, %c0_85, %c0_86] : memref<27x16x8xbf16, #tpu.memory_space<vmem>>, vector<1x16x8xbf16>
    %64 = vector.shape_cast %63 : vector<1x16x8xbf16> to vector<16x8xbf16>
    %cst_87 = arith.constant dense<0.000000e+00> : vector<16x128xf32>
    %65 = tpu.matmul %64, %62, %cst_87 {dimension_numbers = #tpu.dot_dimension_numbers<[1], [0], [0], [1], [0, 0, 1, 1], [], []>} : vector<16x8xbf16>, vector<8x128xbf16>, vector<16x128xf32> -> vector<16x128xf32>
    %66 = arith.addf %60, %65 : vector<16x128xf32>
    %c0_88 = arith.constant 0 : index
    %c4_89 = arith.constant 4 : index
    %c0_90 = arith.constant 0 : index
    %c0_91 = arith.constant 0 : index
    %c1_92 = arith.constant 1 : index
    %67 = vector.load %arg2[%c0_88, %c4_89, %c0_90, %c0_91, %c1_92] : memref<1x8x1x8x256xbf16, #tpu.memory_space<vmem>>, vector<1x1x1x8x128xbf16>
    %68 = vector.shape_cast %67 : vector<1x1x1x8x128xbf16> to vector<8x128xbf16>
    %c11 = arith.constant 11 : index
    %c0_93 = arith.constant 0 : index
    %c0_94 = arith.constant 0 : index
    %69 = vector.load %arg4[%c11, %c0_93, %c0_94] : memref<27x16x8xbf16, #tpu.memory_space<vmem>>, vector<1x16x8xbf16>
    %70 = vector.shape_cast %69 : vector<1x16x8xbf16> to vector<16x8xbf16>
    %cst_95 = arith.constant dense<0.000000e+00> : vector<16x128xf32>
    %71 = tpu.matmul %70, %68, %cst_95 {dimension_numbers = #tpu.dot_dimension_numbers<[1], [0], [0], [1], [0, 0, 1, 1], [], []>} : vector<16x8xbf16>, vector<8x128xbf16>, vector<16x128xf32> -> vector<16x128xf32>
    %72 = arith.addf %66, %71 : vector<16x128xf32>
    %c0_96 = arith.constant 0 : index
    %c6_97 = arith.constant 6 : index
    %c0_98 = arith.constant 0 : index
    %c0_99 = arith.constant 0 : index
    %c0_100 = arith.constant 0 : index
    %73 = vector.load %arg2[%c0_96, %c6_97, %c0_98, %c0_99, %c0_100] : memref<1x8x1x8x256xbf16, #tpu.memory_space<vmem>>, vector<1x1x1x8x128xbf16>
    %74 = vector.shape_cast %73 : vector<1x1x1x8x128xbf16> to vector<8x128xbf16>
    %c12 = arith.constant 12 : index
    %c0_101 = arith.constant 0 : index
    %c0_102 = arith.constant 0 : index
    %75 = vector.load %arg4[%c12, %c0_101, %c0_102] : memref<27x16x8xbf16, #tpu.memory_space<vmem>>, vector<1x16x8xbf16>
    %76 = vector.shape_cast %75 : vector<1x16x8xbf16> to vector<16x8xbf16>
    %cst_103 = arith.constant dense<0.000000e+00> : vector<16x128xf32>
    %77 = tpu.matmul %76, %74, %cst_103 {dimension_numbers = #tpu.dot_dimension_numbers<[1], [0], [0], [1], [0, 0, 1, 1], [], []>} : vector<16x8xbf16>, vector<8x128xbf16>, vector<16x128xf32> -> vector<16x128xf32>
    %78 = arith.addf %72, %77 : vector<16x128xf32>
    %c0_104 = arith.constant 0 : index
    %c7_105 = arith.constant 7 : index
    %c0_106 = arith.constant 0 : index
    %c0_107 = arith.constant 0 : index
    %c0_108 = arith.constant 0 : index
    %79 = vector.load %arg2[%c0_104, %c7_105, %c0_106, %c0_107, %c0_108] : memref<1x8x1x8x256xbf16, #tpu.memory_space<vmem>>, vector<1x1x1x8x128xbf16>
    %80 = vector.shape_cast %79 : vector<1x1x1x8x128xbf16> to vector<8x128xbf16>
    %c13 = arith.constant 13 : index
    %c0_109 = arith.constant 0 : index
    %c0_110 = arith.constant 0 : index
    %81 = vector.load %arg4[%c13, %c0_109, %c0_110] : memref<27x16x8xbf16, #tpu.memory_space<vmem>>, vector<1x16x8xbf16>
    %82 = vector.shape_cast %81 : vector<1x16x8xbf16> to vector<16x8xbf16>
    %cst_111 = arith.constant dense<0.000000e+00> : vector<16x128xf32>
    %83 = tpu.matmul %82, %80, %cst_111 {dimension_numbers = #tpu.dot_dimension_numbers<[1], [0], [0], [1], [0, 0, 1, 1], [], []>} : vector<16x8xbf16>, vector<8x128xbf16>, vector<16x128xf32> -> vector<16x128xf32>
    %84 = arith.addf %78, %83 : vector<16x128xf32>
    %c0_112 = arith.constant 0 : index
    %c6_113 = arith.constant 6 : index
    %c0_114 = arith.constant 0 : index
    %c0_115 = arith.constant 0 : index
    %c1_116 = arith.constant 1 : index
    %85 = vector.load %arg2[%c0_112, %c6_113, %c0_114, %c0_115, %c1_116] : memref<1x8x1x8x256xbf16, #tpu.memory_space<vmem>>, vector<1x1x1x8x128xbf16>
    %86 = vector.shape_cast %85 : vector<1x1x1x8x128xbf16> to vector<8x128xbf16>
    %c14 = arith.constant 14 : index
    %c0_117 = arith.constant 0 : index
    %c0_118 = arith.constant 0 : index
    %87 = vector.load %arg4[%c14, %c0_117, %c0_118] : memref<27x16x8xbf16, #tpu.memory_space<vmem>>, vector<1x16x8xbf16>
    %88 = vector.shape_cast %87 : vector<1x16x8xbf16> to vector<16x8xbf16>
    %cst_119 = arith.constant dense<0.000000e+00> : vector<16x128xf32>
    %89 = tpu.matmul %88, %86, %cst_119 {dimension_numbers = #tpu.dot_dimension_numbers<[1], [0], [0], [1], [0, 0, 1, 1], [], []>} : vector<16x8xbf16>, vector<8x128xbf16>, vector<16x128xf32> -> vector<16x128xf32>
    %90 = arith.addf %84, %89 : vector<16x128xf32>
    %c0_120 = arith.constant 0 : index
    %c4_121 = arith.constant 4 : index
    %c0_122 = arith.constant 0 : index
    %c0_123 = arith.constant 0 : index
    %c5_124 = arith.constant 5 : index
    %91 = vector.load %arg2[%c0_120, %c4_121, %c0_122, %c0_123, %c5_124] : memref<1x8x1x8x256xbf16, #tpu.memory_space<vmem>>, vector<1x1x1x8x128xbf16>
    %92 = vector.shape_cast %91 : vector<1x1x1x8x128xbf16> to vector<8x128xbf16>
    %c15 = arith.constant 15 : index
    %c0_125 = arith.constant 0 : index
    %c0_126 = arith.constant 0 : index
    %93 = vector.load %arg4[%c15, %c0_125, %c0_126] : memref<27x16x8xbf16, #tpu.memory_space<vmem>>, vector<1x16x8xbf16>
    %94 = vector.shape_cast %93 : vector<1x16x8xbf16> to vector<16x8xbf16>
    %cst_127 = arith.constant dense<0.000000e+00> : vector<16x128xf32>
    %95 = tpu.matmul %94, %92, %cst_127 {dimension_numbers = #tpu.dot_dimension_numbers<[1], [0], [0], [1], [0, 0, 1, 1], [], []>} : vector<16x8xbf16>, vector<8x128xbf16>, vector<16x128xf32> -> vector<16x128xf32>
    %96 = arith.addf %90, %95 : vector<16x128xf32>
    %c0_128 = arith.constant 0 : index
    %c5_129 = arith.constant 5 : index
    %c0_130 = arith.constant 0 : index
    %c0_131 = arith.constant 0 : index
    %c5_132 = arith.constant 5 : index
    %97 = vector.load %arg2[%c0_128, %c5_129, %c0_130, %c0_131, %c5_132] : memref<1x8x1x8x256xbf16, #tpu.memory_space<vmem>>, vector<1x1x1x8x128xbf16>
    %98 = vector.shape_cast %97 : vector<1x1x1x8x128xbf16> to vector<8x128xbf16>
    %c16 = arith.constant 16 : index
    %c0_133 = arith.constant 0 : index
    %c0_134 = arith.constant 0 : index
    %99 = vector.load %arg4[%c16, %c0_133, %c0_134] : memref<27x16x8xbf16, #tpu.memory_space<vmem>>, vector<1x16x8xbf16>
    %100 = vector.shape_cast %99 : vector<1x16x8xbf16> to vector<16x8xbf16>
    %cst_135 = arith.constant dense<0.000000e+00> : vector<16x128xf32>
    %101 = tpu.matmul %100, %98, %cst_135 {dimension_numbers = #tpu.dot_dimension_numbers<[1], [0], [0], [1], [0, 0, 1, 1], [], []>} : vector<16x8xbf16>, vector<8x128xbf16>, vector<16x128xf32> -> vector<16x128xf32>
    %102 = arith.addf %96, %101 : vector<16x128xf32>
    %c0_136 = arith.constant 0 : index
    %c4_137 = arith.constant 4 : index
    %c0_138 = arith.constant 0 : index
    %c0_139 = arith.constant 0 : index
    %c6_140 = arith.constant 6 : index
    %103 = vector.load %arg2[%c0_136, %c4_137, %c0_138, %c0_139, %c6_140] : memref<1x8x1x8x256xbf16, #tpu.memory_space<vmem>>, vector<1x1x1x8x128xbf16>
    %104 = vector.shape_cast %103 : vector<1x1x1x8x128xbf16> to vector<8x128xbf16>
    %c17 = arith.constant 17 : index
    %c0_141 = arith.constant 0 : index
    %c0_142 = arith.constant 0 : index
    %105 = vector.load %arg4[%c17, %c0_141, %c0_142] : memref<27x16x8xbf16, #tpu.memory_space<vmem>>, vector<1x16x8xbf16>
    %106 = vector.shape_cast %105 : vector<1x16x8xbf16> to vector<16x8xbf16>
    %cst_143 = arith.constant dense<0.000000e+00> : vector<16x128xf32>
    %107 = tpu.matmul %106, %104, %cst_143 {dimension_numbers = #tpu.dot_dimension_numbers<[1], [0], [0], [1], [0, 0, 1, 1], [], []>} : vector<16x8xbf16>, vector<8x128xbf16>, vector<16x128xf32> -> vector<16x128xf32>
    %108 = arith.addf %102, %107 : vector<16x128xf32>
    %c0_144 = arith.constant 0 : index
    %c0_145 = arith.constant 0 : index
    %c0_146 = arith.constant 0 : index
    %c0_147 = arith.constant 0 : index
    %c0_148 = arith.constant 0 : index
    %109 = vector.load %arg3[%c0_144, %c0_145, %c0_146, %c0_147, %c0_148] : memref<1x8x1x8x256xbf16, #tpu.memory_space<vmem>>, vector<1x1x1x8x128xbf16>
    %110 = vector.shape_cast %109 : vector<1x1x1x8x128xbf16> to vector<8x128xbf16>
    %c18 = arith.constant 18 : index
    %c0_149 = arith.constant 0 : index
    %c0_150 = arith.constant 0 : index
    %111 = vector.load %arg4[%c18, %c0_149, %c0_150] : memref<27x16x8xbf16, #tpu.memory_space<vmem>>, vector<1x16x8xbf16>
    %112 = vector.shape_cast %111 : vector<1x16x8xbf16> to vector<16x8xbf16>
    %cst_151 = arith.constant dense<0.000000e+00> : vector<16x128xf32>
    %113 = tpu.matmul %112, %110, %cst_151 {dimension_numbers = #tpu.dot_dimension_numbers<[1], [0], [0], [1], [0, 0, 1, 1], [], []>} : vector<16x8xbf16>, vector<8x128xbf16>, vector<16x128xf32> -> vector<16x128xf32>
    %114 = arith.addf %108, %113 : vector<16x128xf32>
    %c0_152 = arith.constant 0 : index
    %c1_153 = arith.constant 1 : index
    %c0_154 = arith.constant 0 : index
    %c0_155 = arith.constant 0 : index
    %c0_156 = arith.constant 0 : index
    %115 = vector.load %arg3[%c0_152, %c1_153, %c0_154, %c0_155, %c0_156] : memref<1x8x1x8x256xbf16, #tpu.memory_space<vmem>>, vector<1x1x1x8x128xbf16>
    %116 = vector.shape_cast %115 : vector<1x1x1x8x128xbf16> to vector<8x128xbf16>
    %c19 = arith.constant 19 : index
    %c0_157 = arith.constant 0 : index
    %c0_158 = arith.constant 0 : index
    %117 = vector.load %arg4[%c19, %c0_157, %c0_158] : memref<27x16x8xbf16, #tpu.memory_space<vmem>>, vector<1x16x8xbf16>
    %118 = vector.shape_cast %117 : vector<1x16x8xbf16> to vector<16x8xbf16>
    %cst_159 = arith.constant dense<0.000000e+00> : vector<16x128xf32>
    %119 = tpu.matmul %118, %116, %cst_159 {dimension_numbers = #tpu.dot_dimension_numbers<[1], [0], [0], [1], [0, 0, 1, 1], [], []>} : vector<16x8xbf16>, vector<8x128xbf16>, vector<16x128xf32> -> vector<16x128xf32>
    %120 = arith.addf %114, %119 : vector<16x128xf32>
    %c0_160 = arith.constant 0 : index
    %c0_161 = arith.constant 0 : index
    %c0_162 = arith.constant 0 : index
    %c0_163 = arith.constant 0 : index
    %c1_164 = arith.constant 1 : index
    %121 = vector.load %arg3[%c0_160, %c0_161, %c0_162, %c0_163, %c1_164] : memref<1x8x1x8x256xbf16, #tpu.memory_space<vmem>>, vector<1x1x1x8x128xbf16>
    %122 = vector.shape_cast %121 : vector<1x1x1x8x128xbf16> to vector<8x128xbf16>
    %c20 = arith.constant 20 : index
    %c0_165 = arith.constant 0 : index
    %c0_166 = arith.constant 0 : index
    %123 = vector.load %arg4[%c20, %c0_165, %c0_166] : memref<27x16x8xbf16, #tpu.memory_space<vmem>>, vector<1x16x8xbf16>
    %124 = vector.shape_cast %123 : vector<1x16x8xbf16> to vector<16x8xbf16>
    %cst_167 = arith.constant dense<0.000000e+00> : vector<16x128xf32>
    %125 = tpu.matmul %124, %122, %cst_167 {dimension_numbers = #tpu.dot_dimension_numbers<[1], [0], [0], [1], [0, 0, 1, 1], [], []>} : vector<16x8xbf16>, vector<8x128xbf16>, vector<16x128xf32> -> vector<16x128xf32>
    %126 = arith.addf %120, %125 : vector<16x128xf32>
    %c0_168 = arith.constant 0 : index
    %c2_169 = arith.constant 2 : index
    %c0_170 = arith.constant 0 : index
    %c0_171 = arith.constant 0 : index
    %c0_172 = arith.constant 0 : index
    %127 = vector.load %arg3[%c0_168, %c2_169, %c0_170, %c0_171, %c0_172] : memref<1x8x1x8x256xbf16, #tpu.memory_space<vmem>>, vector<1x1x1x8x128xbf16>
    %128 = vector.shape_cast %127 : vector<1x1x1x8x128xbf16> to vector<8x128xbf16>
    %c21 = arith.constant 21 : index
    %c0_173 = arith.constant 0 : index
    %c0_174 = arith.constant 0 : index
    %129 = vector.load %arg4[%c21, %c0_173, %c0_174] : memref<27x16x8xbf16, #tpu.memory_space<vmem>>, vector<1x16x8xbf16>
    %130 = vector.shape_cast %129 : vector<1x16x8xbf16> to vector<16x8xbf16>
    %cst_175 = arith.constant dense<0.000000e+00> : vector<16x128xf32>
    %131 = tpu.matmul %130, %128, %cst_175 {dimension_numbers = #tpu.dot_dimension_numbers<[1], [0], [0], [1], [0, 0, 1, 1], [], []>} : vector<16x8xbf16>, vector<8x128xbf16>, vector<16x128xf32> -> vector<16x128xf32>
    %132 = arith.addf %126, %131 : vector<16x128xf32>
    %c0_176 = arith.constant 0 : index
    %c3_177 = arith.constant 3 : index
    %c0_178 = arith.constant 0 : index
    %c0_179 = arith.constant 0 : index
    %c0_180 = arith.constant 0 : index
    %133 = vector.load %arg3[%c0_176, %c3_177, %c0_178, %c0_179, %c0_180] : memref<1x8x1x8x256xbf16, #tpu.memory_space<vmem>>, vector<1x1x1x8x128xbf16>
    %134 = vector.shape_cast %133 : vector<1x1x1x8x128xbf16> to vector<8x128xbf16>
    %c22 = arith.constant 22 : index
    %c0_181 = arith.constant 0 : index
    %c0_182 = arith.constant 0 : index
    %135 = vector.load %arg4[%c22, %c0_181, %c0_182] : memref<27x16x8xbf16, #tpu.memory_space<vmem>>, vector<1x16x8xbf16>
    %136 = vector.shape_cast %135 : vector<1x16x8xbf16> to vector<16x8xbf16>
    %cst_183 = arith.constant dense<0.000000e+00> : vector<16x128xf32>
    %137 = tpu.matmul %136, %134, %cst_183 {dimension_numbers = #tpu.dot_dimension_numbers<[1], [0], [0], [1], [0, 0, 1, 1], [], []>} : vector<16x8xbf16>, vector<8x128xbf16>, vector<16x128xf32> -> vector<16x128xf32>
    %138 = arith.addf %132, %137 : vector<16x128xf32>
    %c0_184 = arith.constant 0 : index
    %c2_185 = arith.constant 2 : index
    %c0_186 = arith.constant 0 : index
    %c0_187 = arith.constant 0 : index
    %c1_188 = arith.constant 1 : index
    %139 = vector.load %arg3[%c0_184, %c2_185, %c0_186, %c0_187, %c1_188] : memref<1x8x1x8x256xbf16, #tpu.memory_space<vmem>>, vector<1x1x1x8x128xbf16>
    %140 = vector.shape_cast %139 : vector<1x1x1x8x128xbf16> to vector<8x128xbf16>
    %c23 = arith.constant 23 : index
    %c0_189 = arith.constant 0 : index
    %c0_190 = arith.constant 0 : index
    %141 = vector.load %arg4[%c23, %c0_189, %c0_190] : memref<27x16x8xbf16, #tpu.memory_space<vmem>>, vector<1x16x8xbf16>
    %142 = vector.shape_cast %141 : vector<1x16x8xbf16> to vector<16x8xbf16>
    %cst_191 = arith.constant dense<0.000000e+00> : vector<16x128xf32>
    %143 = tpu.matmul %142, %140, %cst_191 {dimension_numbers = #tpu.dot_dimension_numbers<[1], [0], [0], [1], [0, 0, 1, 1], [], []>} : vector<16x8xbf16>, vector<8x128xbf16>, vector<16x128xf32> -> vector<16x128xf32>
    %144 = arith.addf %138, %143 : vector<16x128xf32>
    %c0_192 = arith.constant 0 : index
    %c0_193 = arith.constant 0 : index
    %c0_194 = arith.constant 0 : index
    %c0_195 = arith.constant 0 : index
    %c5_196 = arith.constant 5 : index
    %145 = vector.load %arg3[%c0_192, %c0_193, %c0_194, %c0_195, %c5_196] : memref<1x8x1x8x256xbf16, #tpu.memory_space<vmem>>, vector<1x1x1x8x128xbf16>
    %146 = vector.shape_cast %145 : vector<1x1x1x8x128xbf16> to vector<8x128xbf16>
    %c24 = arith.constant 24 : index
    %c0_197 = arith.constant 0 : index
    %c0_198 = arith.constant 0 : index
    %147 = vector.load %arg4[%c24, %c0_197, %c0_198] : memref<27x16x8xbf16, #tpu.memory_space<vmem>>, vector<1x16x8xbf16>
    %148 = vector.shape_cast %147 : vector<1x16x8xbf16> to vector<16x8xbf16>
    %cst_199 = arith.constant dense<0.000000e+00> : vector<16x128xf32>
    %149 = tpu.matmul %148, %146, %cst_199 {dimension_numbers = #tpu.dot_dimension_numbers<[1], [0], [0], [1], [0, 0, 1, 1], [], []>} : vector<16x8xbf16>, vector<8x128xbf16>, vector<16x128xf32> -> vector<16x128xf32>
    %150 = arith.addf %144, %149 : vector<16x128xf32>
    %c0_200 = arith.constant 0 : index
    %c1_201 = arith.constant 1 : index
    %c0_202 = arith.constant 0 : index
    %c0_203 = arith.constant 0 : index
    %c5_204 = arith.constant 5 : index
    %151 = vector.load %arg3[%c0_200, %c1_201, %c0_202, %c0_203, %c5_204] : memref<1x8x1x8x256xbf16, #tpu.memory_space<vmem>>, vector<1x1x1x8x128xbf16>
    %152 = vector.shape_cast %151 : vector<1x1x1x8x128xbf16> to vector<8x128xbf16>
    %c25 = arith.constant 25 : index
    %c0_205 = arith.constant 0 : index
    %c0_206 = arith.constant 0 : index
    %153 = vector.load %arg4[%c25, %c0_205, %c0_206] : memref<27x16x8xbf16, #tpu.memory_space<vmem>>, vector<1x16x8xbf16>
    %154 = vector.shape_cast %153 : vector<1x16x8xbf16> to vector<16x8xbf16>
    %cst_207 = arith.constant dense<0.000000e+00> : vector<16x128xf32>
    %155 = tpu.matmul %154, %152, %cst_207 {dimension_numbers = #tpu.dot_dimension_numbers<[1], [0], [0], [1], [0, 0, 1, 1], [], []>} : vector<16x8xbf16>, vector<8x128xbf16>, vector<16x128xf32> -> vector<16x128xf32>
    %156 = arith.addf %150, %155 : vector<16x128xf32>
    %c0_208 = arith.constant 0 : index
    %c0_209 = arith.constant 0 : index
    %c0_210 = arith.constant 0 : index
    %c0_211 = arith.constant 0 : index
    %c6_212 = arith.constant 6 : index
    %157 = vector.load %arg3[%c0_208, %c0_209, %c0_210, %c0_211, %c6_212] : memref<1x8x1x8x256xbf16, #tpu.memory_space<vmem>>, vector<1x1x1x8x128xbf16>
    %158 = vector.shape_cast %157 : vector<1x1x1x8x128xbf16> to vector<8x128xbf16>
    %c26 = arith.constant 26 : index
    %c0_213 = arith.constant 0 : index
    %c0_214 = arith.constant 0 : index
    %159 = vector.load %arg4[%c26, %c0_213, %c0_214] : memref<27x16x8xbf16, #tpu.memory_space<vmem>>, vector<1x16x8xbf16>
    %160 = vector.shape_cast %159 : vector<1x16x8xbf16> to vector<16x8xbf16>
    %cst_215 = arith.constant dense<0.000000e+00> : vector<16x128xf32>
    %161 = tpu.matmul %160, %158, %cst_215 {dimension_numbers = #tpu.dot_dimension_numbers<[1], [0], [0], [1], [0, 0, 1, 1], [], []>} : vector<16x8xbf16>, vector<8x128xbf16>, vector<16x128xf32> -> vector<16x128xf32>
    %162 = arith.addf %156, %161 : vector<16x128xf32>
    %c0_216 = arith.constant 0 : index
    %c0_217 = arith.constant 0 : index
    %c0_218 = arith.constant 0 : index
    %c0_219 = arith.constant 0 : index
    %163 = vector.load %arg6[%c0_216, %c0_217, %c0_218, %c0_219] : memref<1x1x16x128xf32, #tpu.memory_space<vmem>>, vector<1x1x16x128xf32>
    %164 = vector.shape_cast %163 : vector<1x1x16x128xf32> to vector<16x128xf32>
    %165 = vector.shape_cast %162 : vector<16x128xf32> to vector<1x1x16x128xf32>
    tpu.vector_store %arg6[%c0_216, %c0_217, %c0_218, %c0_219], %165 {strides = array<i32>} : memref<1x1x16x128xf32, #tpu.memory_space<vmem>>, vector<1x1x16x128xf32>,
    %c0_220 = arith.constant 0 : index
    %c0_221 = arith.constant 0 : index
    %166 = vector.load %arg5[%c0_220, %c0_221] : memref<1x128xf32, #tpu.memory_space<vmem>>, vector<1x128xf32>
    %167 = vector.broadcast %166 : vector<1x128xf32> to vector<16x128xf32>
    %168 = arith.mulf %162, %167 : vector<16x128xf32>
    %cst_222 = arith.constant dense<0.000000e+00> : vector<16xf32>
    %169 = vector.multi_reduction <add>, %168, %cst_222 [1] : vector<16x128xf32> to vector<16xf32>
    %170 = vector.shape_cast %169 : vector<16xf32> to vector<16x1xf32>
    %c0_223 = arith.constant 0 : index
    %c0_224 = arith.constant 0 : index
    %c0_225 = arith.constant 0 : index
    %c0_226 = arith.constant 0 : index
    %171 = vector.load %arg7[%c0_223, %c0_224, %c0_225, %c0_226] : memref<1x1x16x2xf32, #tpu.memory_space<vmem>>, vector<1x1x16x1xf32>
    %172 = vector.shape_cast %171 : vector<1x1x16x1xf32> to vector<16x1xf32>
    %173 = vector.shape_cast %170 : vector<16x1xf32> to vector<1x1x16x1xf32>
    tpu.vector_store %arg7[%c0_223, %c0_224, %c0_225, %c0_226], %173 {strides = array<i32>} : memref<1x1x16x2xf32, #tpu.memory_space<vmem>>, vector<1x1x16x1xf32>,
    %174 = arith.mulf %168, %168 : vector<16x128xf32>
    %cst_227 = arith.constant dense<0.000000e+00> : vector<16xf32>
    %175 = vector.multi_reduction <add>, %174, %cst_227 [1] : vector<16x128xf32> to vector<16xf32>
    %176 = vector.shape_cast %175 : vector<16xf32> to vector<16x1xf32>
    %c0_228 = arith.constant 0 : index
    %c0_229 = arith.constant 0 : index
    %c0_230 = arith.constant 0 : index
    %c1_231 = arith.constant 1 : index
    %177 = vector.load %arg7[%c0_228, %c0_229, %c0_230, %c1_231] : memref<1x1x16x2xf32, #tpu.memory_space<vmem>>, vector<1x1x16x1xf32>
    %178 = vector.shape_cast %177 : vector<1x1x16x1xf32> to vector<16x1xf32>
    %179 = vector.shape_cast %176 : vector<16x1xf32> to vector<1x1x16x1xf32>
    tpu.vector_store %arg7[%c0_228, %c0_229, %c0_230, %c1_231], %179 {strides = array<i32>} : memref<1x1x16x2xf32, #tpu.memory_space<vmem>>, vector<1x1x16x1xf32>,
    return
  }
  func.func @transform_0(%arg0: i32, %arg1: i32) -> (i32, i32, i32, i32, i32) {
    %c0_i32 = arith.constant 0 : i32
    %0 = arith.addi %arg1, %c0_i32 : i32
    %c0_i32_0 = arith.constant 0 : i32
    %c0_i32_1 = arith.constant 0 : i32
    %c0_i32_2 = arith.constant 0 : i32
    %c0_i32_3 = arith.constant 0 : i32
    return %arg0, %c0_i32_0, %0, %c0_i32_1, %c0_i32_2 : i32, i32, i32, i32, i32
  }
  func.func @transform_1(%arg0: i32, %arg1: i32) -> (i32, i32, i32, i32, i32) {
    %c1_i32 = arith.constant 1 : i32
    %0 = arith.addi %arg1, %c1_i32 : i32
    %c0_i32 = arith.constant 0 : i32
    %c0_i32_0 = arith.constant 0 : i32
    %c0_i32_1 = arith.constant 0 : i32
    %c0_i32_2 = arith.constant 0 : i32
    return %arg0, %c0_i32, %0, %c0_i32_0, %c0_i32_1 : i32, i32, i32, i32, i32
  }
  func.func @transform_2(%arg0: i32, %arg1: i32) -> (i32, i32, i32) {
    %c0_i32 = arith.constant 0 : i32
    %c0_i32_0 = arith.constant 0 : i32
    %c0_i32_1 = arith.constant 0 : i32
    %c0_i32_2 = arith.constant 0 : i32
    return %c0_i32, %c0_i32_0, %c0_i32_1 : i32, i32, i32
  }
  func.func @transform_3(%arg0: i32, %arg1: i32) -> (i32, i32) {
    %c0_i32 = arith.constant 0 : i32
    %c0_i32_0 = arith.constant 0 : i32
    %c0_i32_1 = arith.constant 0 : i32
    return %c0_i32, %c0_i32_0 : i32, i32
  }
  func.func @transform_4(%arg0: i32, %arg1: i32) -> (i32, i32, i32, i32) {
    %c0_i32 = arith.constant 0 : i32
    %c0_i32_0 = arith.constant 0 : i32
    %c0_i32_1 = arith.constant 0 : i32
    return %arg0, %arg1, %c0_i32, %c0_i32_0 : i32, i32, i32, i32
  }
  func.func @transform_5(%arg0: i32, %arg1: i32) -> (i32, i32, i32, i32) {
    %c0_i32 = arith.constant 0 : i32
    %c0_i32_0 = arith.constant 0 : i32
    %c0_i32_1 = arith.constant 0 : i32
    return %arg0, %arg1, %c0_i32, %c0_i32_0 : i32, i32, i32, i32
  }
}

module attributes {stable_mosaic.version = 11 : i64} {
  func.func @_norm_act_kernel(%arg0: i32, %arg1: i32, %arg2: memref<1x1x16x128xf32, #tpu.memory_space<vmem>>, %arg3: memref<1x16x2xf32, #tpu.memory_space<vmem>>, %arg4: memref<1x1x16x128xf32, #tpu.memory_space<vmem>>) attributes {dimension_semantics = [#tpu.dimension_semantics<parallel>, #tpu.dimension_semantics<parallel>], iteration_bounds = array<i64: 2, 4>, scalar_prefetch = 0 : i64, scratch_operands = 0 : i64, tpu.core_type = #tpu.core_type<tc>, window_params = [{transform_indices = @transform_0, window_bounds = array<i64: 1, 1, 16, 128>}, {transform_indices = @transform_1, window_bounds = array<i64: 1, 16, 2>}, {transform_indices = @transform_2, window_bounds = array<i64: 1, 1, 16, 128>}]} {
    %c0 = arith.constant 0 : index
    %c0_0 = arith.constant 0 : index
    %c0_1 = arith.constant 0 : index
    %c0_2 = arith.constant 0 : index
    %0 = vector.load %arg2[%c0, %c0_0, %c0_1, %c0_2] : memref<1x1x16x128xf32, #tpu.memory_space<vmem>>, vector<1x1x16x128xf32>
    %1 = vector.shape_cast %0 : vector<1x1x16x128xf32> to vector<16x128xf32>
    %c0_3 = arith.constant 0 : index
    %c0_4 = arith.constant 0 : index
    %c0_5 = arith.constant 0 : index
    %2 = vector.load %arg3[%c0_3, %c0_4, %c0_5] : memref<1x16x2xf32, #tpu.memory_space<vmem>>, vector<1x16x1xf32>
    %3 = vector.shape_cast %2 : vector<1x16x1xf32> to vector<16x1xf32>
    %c0_6 = arith.constant 0 : index
    %c0_7 = arith.constant 0 : index
    %c1 = arith.constant 1 : index
    %4 = vector.load %arg3[%c0_6, %c0_7, %c1] : memref<1x16x2xf32, #tpu.memory_space<vmem>>, vector<1x16x1xf32>
    %5 = vector.shape_cast %4 : vector<1x16x1xf32> to vector<16x1xf32>
    %6 = vector.broadcast %3 : vector<16x1xf32> to vector<16x128xf32>
    %7 = arith.mulf %1, %6 : vector<16x128xf32>
    %8 = vector.broadcast %5 : vector<16x1xf32> to vector<16x128xf32>
    %9 = arith.addf %7, %8 : vector<16x128xf32>
    %cst = arith.constant 0.000000e+00 : f32
    %10 = vector.broadcast %cst : f32 to vector<16x128xf32>
    %11 = arith.cmpf oge, %9, %10 : vector<16x128xf32>
    %cst_8 = arith.constant 0.00999999977 : f32
    %12 = vector.broadcast %cst_8 : f32 to vector<16x128xf32>
    %13 = arith.mulf %12, %9 : vector<16x128xf32>
    %14 = arith.select %11, %9, %13 : vector<16x128xi1>, vector<16x128xf32>
    %c0_9 = arith.constant 0 : index
    %c0_10 = arith.constant 0 : index
    %c0_11 = arith.constant 0 : index
    %c0_12 = arith.constant 0 : index
    %15 = vector.load %arg4[%c0_9, %c0_10, %c0_11, %c0_12] : memref<1x1x16x128xf32, #tpu.memory_space<vmem>>, vector<1x1x16x128xf32>
    %16 = vector.shape_cast %15 : vector<1x1x16x128xf32> to vector<16x128xf32>
    %17 = vector.shape_cast %14 : vector<16x128xf32> to vector<1x1x16x128xf32>
    tpu.vector_store %arg4[%c0_9, %c0_10, %c0_11, %c0_12], %17 {strides = array<i32>} : memref<1x1x16x128xf32, #tpu.memory_space<vmem>>, vector<1x1x16x128xf32>,
    return
  }
  func.func @transform_0(%arg0: i32, %arg1: i32) -> (i32, i32, i32, i32) {
    %c0_i32 = arith.constant 0 : i32
    %c0_i32_0 = arith.constant 0 : i32
    %c0_i32_1 = arith.constant 0 : i32
    return %arg0, %arg1, %c0_i32, %c0_i32_0 : i32, i32, i32, i32
  }
  func.func @transform_1(%arg0: i32, %arg1: i32) -> (i32, i32, i32) {
    %c0_i32 = arith.constant 0 : i32
    %c0_i32_0 = arith.constant 0 : i32
    %c0_i32_1 = arith.constant 0 : i32
    return %arg0, %c0_i32, %c0_i32_0 : i32, i32, i32
  }
  func.func @transform_2(%arg0: i32, %arg1: i32) -> (i32, i32, i32, i32) {
    %c0_i32 = arith.constant 0 : i32
    %c0_i32_0 = arith.constant 0 : i32
    %c0_i32_1 = arith.constant 0 : i32
    return %arg0, %arg1, %c0_i32, %c0_i32_0 : i32, i32, i32, i32
  }
}

</mosaic_0001>

<llo_original>
// kernel: _lambda_.5
$region0: #{_lambda_.5}
  #allocation0 [shape = 'u32[]', space=smem, size = 0x4, offset = 0x4, fixed_abs, tag = 'smem constant byte address 0x4 - core index']
  #allocation1 [shape = 'u32[72,128]{1,0:T(1,128)}', space=vmem, size = 0x9000, scoped, tag = 'internal scratch']
  %s0 = inlined_call_operand.vmem [shape: f32[2,8,8,128], index: 0, kind: input, shape index: {}]
  %s1 = inlined_call_operand.vmem [shape: f32[2,8,2], index: 1, kind: input, shape index: {}]
  %s2 = inlined_call_operand.vmem [shape: f32[2,8,8,128], index: 2, kind: output, shape index: {}]
  %s3 = sld [smem:[#allocation0]]
  $region41: #{_lambda_.5} parent=0
    _
  %s5 = ssub.s32 1, %s3
  %s6 = scalar_select 0, %s5, %s3
  loop: start=0, step=1, limit=18
  $region2: #{_lambda_.5} parent=0 // loop_pre_header
    _
  $region3: #{_lambda_.5} parent=0 // loop_header
    %s8 = sphi 0, %s12
    %p9 = scmp.ge.s32.totalorder %s8, 18
    %s15 = sphi 0, %s27
    %s16 = sphi 0, %s23
    %s17 = sphi 0, %s15
    %s18 = sphi 0, %s16
    %s19 = sphi 0, %s17
    %s20 = sphi 0, %s18
    %s32 = sphi 0, %s34
    %s35 = sphi 0, %s32
    %s36 = sphi 0, %s35
    %s52 = sphi 0, %s36
    %s58 = sphi 0, %s60
    %s61 = sphi 0, %s58
    %s62 = sphi 0, %s61
    %s78 = sphi 0, %s62
    %s86 = sphi 0, %s88
    %s89 = sphi 0, %s86
    %s90 = sphi 0, %s89
    %s106 = sphi 0, %s90
  $region4: #{_lambda_.5} parent=0 // loop_header_branch
    %11 = sbr.rel (%p9) target = $region8
  $region5: #{_lambda_.5} parent=0 // loop_body
    %s13 = ssub.s32 %s8, 1
    %s14 = ssub.s32 %s8, 2
    %s21 = sadd.s32 1, %s16
    %p22 = scmp.ge.s32.totalorder %s21, 8
    %s23 = scalar_select %p22, 0, %s21
    %s24 = sadd.s32 1, %s15
    %s25 = scalar_select %p22, %s24, %s15
    %p26 = scmp.ge.s32.totalorder %s25, 2
    %s27 = scalar_select %p26, 0, %s25
    %s28 = ssub.s32 %s15, %s27
    %s29 = ssub.s32 %s16, %s23
    %s30 = sor.u32 %s28, %s29
    %p31 = scmp.eq.s32.totalorder %s30, 0
    %s33 = sadd.s32 %s32, 1
    %s34 = scalar_select %p31, %s32, %s33
    %p37 = pneg %p31
    %p38 = scmp.eq.s32.totalorder %s8, 15
    %p39 = por %p37, %p38
    %p40 = scmp.ne.s32.totalorder %s32, %s35
    %p41 = scmp.eq.s32.totalorder %s8, 0
    %p42 = por %p40, %p41
    %p43 = scmp.ne.s32.totalorder %s32, %s35
    %p44 = scmp.eq.s32.totalorder %s13, 15
    %p45 = por %p43, %p44
    %p46 = scmp.ne.s32.totalorder %s35, %s36
    %p47 = scmp.eq.s32.totalorder %s13, 0
    %p48 = por %p46, %p47
    %p49 = scmp.ne.s32.totalorder %s35, %s36
    %p50 = scmp.eq.s32.totalorder %s14, 15
    %p51 = por %p49, %p50
    %p53 = scmp.ne.s32.totalorder %s36, %s52
    %p54 = scmp.eq.s32.totalorder %s14, 0
    %p55 = por %p53, %p54
    %s56 = ssub.s32 %s15, %s27
    %p57 = scmp.eq.s32.totalorder %s56, 0
    %s59 = sadd.s32 %s58, 1
    %s60 = scalar_select %p57, %s58, %s59
    %p63 = pneg %p57
    %p64 = scmp.eq.s32.totalorder %s8, 15
    %p65 = por %p63, %p64
    %p66 = scmp.ne.s32.totalorder %s58, %s61
    %p67 = scmp.eq.s32.totalorder %s8, 0
    %p68 = por %p66, %p67
    %p69 = scmp.ne.s32.totalorder %s58, %s61
    %p70 = scmp.eq.s32.totalorder %s13, 15
    %p71 = por %p69, %p70
    %p72 = scmp.ne.s32.totalorder %s61, %s62
    %p73 = scmp.eq.s32.totalorder %s13, 0
    %p74 = por %p72, %p73
    %p75 = scmp.ne.s32.totalorder %s61, %s62
    %p76 = scmp.eq.s32.totalorder %s14, 15
    %p77 = por %p75, %p76
    %p79 = scmp.ne.s32.totalorder %s62, %s78
    %p80 = scmp.eq.s32.totalorder %s14, 0
    %p81 = por %p79, %p80
    %s82 = ssub.s32 %s15, %s27
    %s83 = ssub.s32 %s16, %s23
    %s84 = sor.u32 %s82, %s83
    %p85 = scmp.eq.s32.totalorder %s84, 0
    %s87 = sadd.s32 %s86, 1
    %s88 = scalar_select %p85, %s86, %s87
    %p91 = pneg %p85
    %p92 = scmp.eq.s32.totalorder %s8, 15
    %p93 = por %p91, %p92
    %p94 = scmp.ne.s32.totalorder %s86, %s89
    %p95 = scmp.eq.s32.totalorder %s8, 0
    %p96 = por %p94, %p95
    %p97 = scmp.ne.s32.totalorder %s86, %s89
    %p98 = scmp.eq.s32.totalorder %s13, 15
    %p99 = por %p97, %p98
    %p100 = scmp.ne.s32.totalorder %s89, %s90
    %p101 = scmp.eq.s32.totalorder %s13, 0
    %p102 = por %p100, %p101
    %p103 = scmp.ne.s32.totalorder %s89, %s90
    %p104 = scmp.eq.s32.totalorder %s14, 15
    %p105 = por %p103, %p104
    %p107 = scmp.ne.s32.totalorder %s90, %s106
    %p108 = scmp.eq.s32.totalorder %s14, 0
    %p109 = por %p107, %p108
    %p110 = scmp.le.s32.totalorder 1, %s8
    %p111 = scmp.lt.s32.totalorder %s8, 17
    %p112 = pnand %p110, %p111
    %p113 = pneg %p112
    // Predicated region
    $region9: #{_lambda_.5} parent=5 // pred_check
      _
    $region10: #{_lambda_.5} parent=5 // pred_check_branch
      %115 = sbr.rel (%p112) target = $region12
    $region11: #{_lambda_.5} parent=5 // pred_region
      %s116 = ssub.s32 %s8, 1
    $region12: #{_lambda_.5} parent=5 // pred_fallthru
      _
    %p117 = scmp.lt.s32.totalorder %s8, 16
    // Predicated region
    $region13: #{_lambda_.5} parent=5 // pred_check
      %p118 = pneg %p117
    $region14: #{_lambda_.5} parent=5 // pred_check_branch
      %120 = sbr.rel (%p118) target = $region16
    $region15: #{_lambda_.5} parent=5 // pred_region
      // Predicated region
      $region17: #{_lambda_.5} parent=15 // pred_check
        %p121 = pneg %p42
      $region18: #{_lambda_.5} parent=15 // pred_check_branch
        %123 = sbr.rel (%p121) target = $region20
      $region19: #{_lambda_.5} parent=15 // pred_region
        %p124 = scmp.lt.s32.totalorder %s15, 1
        %s125 = scalar_select %p124, %s15, 1
        %p126 = scmp.lt.s32.totalorder %s16, 7
        %s127 = scalar_select %p126, %s16, 7
        %s128 = smul.addr %s125, 8
        %s129 = sadd.s32 %s127, %s128
        %s130 = smul.addr %s129, 8
        %s131 = scalar_lea.vmem %s0, %s130
      $region20: #{_lambda_.5} parent=15 // pred_fallthru
        _
      // Predicated region
      $region21: #{_lambda_.5} parent=15 // pred_check
        %p132 = pneg %p68
      $region22: #{_lambda_.5} parent=15 // pred_check_branch
        %134 = sbr.rel (%p132) target = $region24
      $region23: #{_lambda_.5} parent=15 // pred_region
        %p135 = scmp.lt.s32.totalorder %s15, 1
        %s136 = scalar_select %p135, %s15, 1
        %s137 = smul.addr %s136, 8
        %s138 = scalar_lea.vmem %s1, %s137
      $region24: #{_lambda_.5} parent=15 // pred_fallthru
        _
    $region16: #{_lambda_.5} parent=5 // pred_fallthru
      _
    %p139 = scmp.le.s32.totalorder 1, %s8
    %p140 = scmp.lt.s32.totalorder %s8, 17
    %p141 = pnand %p139, %p140
    %p142 = pneg %p141
    // Predicated region
    $region25: #{_lambda_.5} parent=5 // pred_check
      _
    $region26: #{_lambda_.5} parent=5 // pred_check_branch
      %144 = sbr.rel (%p141) target = $region28
    $region27: #{_lambda_.5} parent=5 // pred_region
      %s145 = ssub.s32 %s8, 1
      %p146 = scmp.lt.s32.totalorder %s17, 1
      %s147 = scalar_select %p146, %s17, 1
      %p148 = scmp.lt.s32.totalorder %s18, 7
      %s149 = scalar_select %p148, %s18, 7
      %s150 = smul.addr %s147, 8
      %s151 = sadd.s32 %s149, %s150
      %s152 = smul.addr %s151, 8
      %s153 = scalar_lea.vmem %s0, %s152
      %p154 = pneg %p48
      %p155 = pneg %p45
      %p156 = scmp.lt.s32.totalorder %s17, 1
      %s157 = scalar_select %p156, %s17, 1
      %s158 = smul.addr %s157, 8
      %s159 = scalar_lea.vmem %s1, %s158
      %p160 = pneg %p74
      %p161 = pneg %p71
      %p162 = pneg %p102
      %p163 = pneg %p99
      %p164 = scmp.lt.s32.totalorder %s17, 1
      %s165 = scalar_select %p164, %s17, 1
      %p166 = scmp.lt.s32.totalorder %s18, 7
      %s167 = scalar_select %p166, %s18, 7
      %s168 = smul.addr %s165, 8
      %s169 = sadd.s32 %s167, %s168
      %s170 = smul.addr %s169, 8
      %s171 = scalar_lea.vmem %s2, %s170
      %p172 = scmp.lt.s32.totalorder %s17, 1
      %s173 = scalar_select %p172, %s17, 1
      %p174 = scmp.lt.s32.totalorder %s18, 7
      %s175 = scalar_select %p174, %s18, 7
      %s176 = smul.addr %s173, 8
      %s177 = sadd.s32 %s175, %s176
      %s178 = smul.addr %s177, 8
      %s179 = scalar_lea.vmem %s0, %s178
      %p180 = scmp.lt.s32.totalorder %s17, 1
      %s181 = scalar_select %p180, %s17, 1
      %s182 = smul.addr %s181, 8
      %s183 = scalar_lea.vmem %s1, %s182
      %p184 = scmp.lt.s32.totalorder %s17, 1
      %s185 = scalar_select %p184, %s17, 1
      %p186 = scmp.lt.s32.totalorder %s18, 7
      %s187 = scalar_select %p186, %s18, 7
      %s188 = smul.addr %s185, 8
      %s189 = sadd.s32 %s187, %s188
      %s190 = smul.addr %s189, 8
      %s191 = scalar_lea.vmem %s2, %s190
      %v192 = vld [vmem:[%s179] sm:$0xff]
      %v193 = vld [vmem:[%s183] sm:$0xff]
      %195 = vset.pattern.permute.xlu0 0
      %196 = vperm.xlu0 %195, %v193
      %v197 = vpop.permute.xlu0 %196
      %v199 = vmul.f32 %v192, %v197
      %200 = vset.pattern.permute.xlu0 1
      %201 = vperm.xlu0 %200, %v193
      %v202 = vpop.permute.xlu0 %201
      %v204 = vadd.f32 %v199, %v202
      %vm205 = vcmp.ge.f32.partialorder %v204, 0.0
      %v206 = vmul.f32 %v204, 0.01
      %v207 = vsel %vm205, %v204, %v206
      %208 = vst [vmem:[%s191] sm:$0xff] %v207
      %p209 = scmp.lt.s32.totalorder %s17, 1
      %s210 = scalar_select %p209, %s17, 1
      %p211 = scmp.lt.s32.totalorder %s18, 7
      %s212 = scalar_select %p211, %s18, 7
      %s213 = smul.addr %s210, 8
      %s214 = sadd.s32 %s212, %s213
      %s215 = smul.addr %s214, 8
      %s216 = scalar_lea.vmem %s2, %s215
      // Predicated region
      $region29: #{_lambda_.5} parent=27 // pred_check
        %p217 = pneg %p99
      $region30: #{_lambda_.5} parent=27 // pred_check_branch
        %219 = sbr.rel (%p217) target = $region32
      $region31: #{_lambda_.5} parent=27 // pred_region
        _
      $region32: #{_lambda_.5} parent=27 // pred_fallthru
        _
    $region28: #{_lambda_.5} parent=5 // pred_fallthru
      _
    %p220 = scmp.le.s32.totalorder 2, %s8
    // Predicated region
    $region33: #{_lambda_.5} parent=5 // pred_check
      %p221 = pneg %p220
    $region34: #{_lambda_.5} parent=5 // pred_check_branch
      %223 = sbr.rel (%p221) target = $region36
    $region35: #{_lambda_.5} parent=5 // pred_region
      %s224 = ssub.s32 %s8, 2
      // Predicated region
      $region37: #{_lambda_.5} parent=35 // pred_check
        %p225 = pneg %p105
      $region38: #{_lambda_.5} parent=35 // pred_check_branch
        %227 = sbr.rel (%p225) target = $region40
      $region39: #{_lambda_.5} parent=35 // pred_region
        %p228 = scmp.lt.s32.totalorder %s19, 1
        %s229 = scalar_select %p228, %s19, 1
        %p230 = scmp.lt.s32.totalorder %s20, 7
        %s231 = scalar_select %p230, %s20, 7
        %s232 = smul.addr %s229, 8
        %s233 = sadd.s32 %s231, %s232
        %s234 = smul.addr %s233, 8
        %s235 = scalar_lea.vmem %s2, %s234
      $region40: #{_lambda_.5} parent=35 // pred_fallthru
        _
    $region36: #{_lambda_.5} parent=5 // pred_fallthru
      _
  $region6: #{_lambda_.5} parent=0 // loop_footer
    %s12 = sadd.s32 1, %s8
  $region7: #{_lambda_.5} parent=0 // loop_footer_branch
    %7 = sbr.rel target = $region3
  $region8: #{_lambda_.5} parent=0 // loop_exit
    _

// kernel: _lambda_.4
$region0: #{_lambda_.4}
  #allocation0 [shape = 'u32[]', space=smem, size = 0x4, offset = 0x4, fixed_abs, tag = 'smem constant byte address 0x4 - core index']
  #allocation1 [shape = 'u32[72,128]{1,0:T(1,128)}', space=vmem, size = 0x9000, scoped, tag = 'internal scratch']
  %s0 = inlined_call_operand.vmem [shape: bf16[2,8,9,4,256], index: 0, kind: input, shape index: {}, may-alias: {0,1}]
  %s1 = inlined_call_operand.vmem [shape: bf16[2,8,9,4,256], index: 1, kind: input, shape index: {}, may-alias: {0,1}]
  %s2 = inlined_call_operand.vmem [shape: bf16[27,8,4], index: 2, kind: input, shape index: {}]
  %s3 = inlined_call_operand.vmem [shape: f32[1,128], index: 3, kind: input, shape index: {}]
  %s4 = inlined_call_operand.vmem [shape: f32[2,8,8,128], index: 4, kind: output, shape index: {0}]
  %s5 = inlined_call_operand.vmem [shape: f32[2,8,8,2], index: 5, kind: output, shape index: {1}]
  %6 = xla_tuple %s4, %s5
  %s7 = sld [smem:[#allocation0]]
  $region139: #{_lambda_.4} parent=0
    _
  %s9 = ssub.s32 1, %s7
  %s10 = scalar_select 0, %s9, %s7
  $region1: #{_lambda_.4} parent=0
    #allocation2 [shape = 'u8[32768]{0}', space=vmem, size = 0x8000, scoped, tag = 'input window, operand 0']
    #allocation3 [shape = 'u8[32768]{0}', space=vmem, size = 0x8000, scoped, tag = 'input window, operand 1']
    loop: start=0, step=1, limit=18
    $region2: #{_lambda_.4} parent=1 // loop_pre_header
      _
    $region3: #{_lambda_.4} parent=1 // loop_header
      %s12 = sphi 0, %s16
      %p13 = scmp.ge.s32.totalorder %s12, 18
      %s19 = sphi 0, %s31
      %s20 = sphi 0, %s27
      %s21 = sphi 0, %s19
      %s22 = sphi 0, %s20
      %s23 = sphi 0, %s21
      %s24 = sphi 0, %s22
      %s36 = sphi 0, %s38
      %s39 = sphi 0, %s36
      %s40 = sphi 0, %s39
      %s56 = sphi 0, %s40
      %s66 = sphi 0, %s68
      %s69 = sphi 0, %s66
      %s70 = sphi 0, %s69
      %s86 = sphi 0, %s70
      %s90 = sphi 0, %s90
      %s92 = sphi 0, %s90
      %s93 = sphi 0, %s92
      %s107 = sphi 0, %s93
      %s111 = sphi 0, %s111
      %s113 = sphi 0, %s111
      %s114 = sphi 0, %s113
      %s128 = sphi 0, %s114
      %s136 = sphi 0, %s138
      %s139 = sphi 0, %s136
      %s140 = sphi 0, %s139
      %s156 = sphi 0, %s140
      %s164 = sphi 0, %s166
      %s167 = sphi 0, %s164
      %s168 = sphi 0, %s167
      %s184 = sphi 0, %s168
    $region4: #{_lambda_.4} parent=1 // loop_header_branch
      %15 = sbr.rel (%p13) target = $region8
    $region5: #{_lambda_.4} parent=1 // loop_body
      %s17 = ssub.s32 %s12, 1
      %s18 = ssub.s32 %s12, 2
      %s25 = sadd.s32 1, %s20
      %p26 = scmp.ge.s32.totalorder %s25, 8
      %s27 = scalar_select %p26, 0, %s25
      %s28 = sadd.s32 1, %s19
      %s29 = scalar_select %p26, %s28, %s19
      %p30 = scmp.ge.s32.totalorder %s29, 2
      %s31 = scalar_select %p30, 0, %s29
      %s32 = ssub.s32 %s19, %s31
      %s33 = ssub.s32 %s20, %s27
      %s34 = sor.u32 %s32, %s33
      %p35 = scmp.eq.s32.totalorder %s34, 0
      %s37 = sadd.s32 %s36, 1
      %s38 = scalar_select %p35, %s36, %s37
      %p41 = pneg %p35
      %p42 = scmp.eq.s32.totalorder %s12, 15
      %p43 = por %p41, %p42
      %p44 = scmp.ne.s32.totalorder %s36, %s39
      %p45 = scmp.eq.s32.totalorder %s12, 0
      %p46 = por %p44, %p45
      %p47 = scmp.ne.s32.totalorder %s36, %s39
      %p48 = scmp.eq.s32.totalorder %s17, 15
      %p49 = por %p47, %p48
      %p50 = scmp.ne.s32.totalorder %s39, %s40
      %p51 = scmp.eq.s32.totalorder %s17, 0
      %p52 = por %p50, %p51
      %p53 = scmp.ne.s32.totalorder %s39, %s40
      %p54 = scmp.eq.s32.totalorder %s18, 15
      %p55 = por %p53, %p54
      %p57 = scmp.ne.s32.totalorder %s40, %s56
      %p58 = scmp.eq.s32.totalorder %s18, 0
      %p59 = por %p57, %p58
      %s60 = sadd.s32 %s20, 1
      %s61 = sadd.s32 %s27, 1
      %s62 = ssub.s32 %s19, %s31
      %s63 = ssub.s32 %s60, %s61
      %s64 = sor.u32 %s62, %s63
      %p65 = scmp.eq.s32.totalorder %s64, 0
      %s67 = sadd.s32 %s66, 1
      %s68 = scalar_select %p65, %s66, %s67
      %p71 = pneg %p65
      %p72 = scmp.eq.s32.totalorder %s12, 15
      %p73 = por %p71, %p72
      %p74 = scmp.ne.s32.totalorder %s66, %s69
      %p75 = scmp.eq.s32.totalorder %s12, 0
      %p76 = por %p74, %p75
      %p77 = scmp.ne.s32.totalorder %s66, %s69
      %p78 = scmp.eq.s32.totalorder %s17, 15
      %p79 = por %p77, %p78
      %p80 = scmp.ne.s32.totalorder %s69, %s70
      %p81 = scmp.eq.s32.totalorder %s17, 0
      %p82 = por %p80, %p81
      %p83 = scmp.ne.s32.totalorder %s69, %s70
      %p84 = scmp.eq.s32.totalorder %s18, 15
      %p85 = por %p83, %p84
      %p87 = scmp.ne.s32.totalorder %s70, %s86
      %p88 = scmp.eq.s32.totalorder %s18, 0
      %p89 = por %p87, %p88
      %s91 = sadd.s32 %s90, 1
      %p94 = scmp.eq.s32.totalorder %s12, 15
      %p95 = scmp.ne.s32.totalorder %s90, %s92
      %p96 = scmp.eq.s32.totalorder %s12, 0
      %p97 = por %p95, %p96
      %p98 = scmp.ne.s32.totalorder %s90, %s92
      %p99 = scmp.eq.s32.totalorder %s17, 15
      %p100 = por %p98, %p99
      %p101 = scmp.ne.s32.totalorder %s92, %s93
      %p102 = scmp.eq.s32.totalorder %s17, 0
      %p103 = por %p101, %p102
      %p104 = scmp.ne.s32.totalorder %s92, %s93
      %p105 = scmp.eq.s32.totalorder %s18, 15
      %p106 = por %p104, %p105
      %p108 = scmp.ne.s32.totalorder %s93, %s107
      %p109 = scmp.eq.s32.totalorder %s18, 0
      %p110 = por %p108, %p109
      %s112 = sadd.s32 %s111, 1
      %p115 = scmp.eq.s32.totalorder %s12, 15
      %p116 = scmp.ne.s32.totalorder %s111, %s113
      %p117 = scmp.eq.s32.totalorder %s12, 0
      %p118 = por %p116, %p117
      %p119 = scmp.ne.s32.totalorder %s111, %s113
      %p120 = scmp.eq.s32.totalorder %s17, 15
      %p121 = por %p119, %p120
      %p122 = scmp.ne.s32.totalorder %s113, %s114
      %p123 = scmp.eq.s32.totalorder %s17, 0
      %p124 = por %p122, %p123
      %p125 = scmp.ne.s32.totalorder %s113, %s114
      %p126 = scmp.eq.s32.totalorder %s18, 15
      %p127 = por %p125, %p126
      %p129 = scmp.ne.s32.totalorder %s114, %s128
      %p130 = scmp.eq.s32.totalorder %s18, 0
      %p131 = por %p129, %p130
      %s132 = ssub.s32 %s19, %s31
      %s133 = ssub.s32 %s20, %s27
      %s134 = sor.u32 %s132, %s133
      %p135 = scmp.eq.s32.totalorder %s134, 0
      %s137 = sadd.s32 %s136, 1
      %s138 = scalar_select %p135, %s136, %s137
      %p141 = pneg %p135
      %p142 = scmp.eq.s32.totalorder %s12, 15
      %p143 = por %p141, %p142
      %p144 = scmp.ne.s32.totalorder %s136, %s139
      %p145 = scmp.eq.s32.totalorder %s12, 0
      %p146 = por %p144, %p145
      %p147 = scmp.ne.s32.totalorder %s136, %s139
      %p148 = scmp.eq.s32.totalorder %s17, 15
      %p149 = por %p147, %p148
      %p150 = scmp.ne.s32.totalorder %s139, %s140
      %p151 = scmp.eq.s32.totalorder %s17, 0
      %p152 = por %p150, %p151
      %p153 = scmp.ne.s32.totalorder %s139, %s140
      %p154 = scmp.eq.s32.totalorder %s18, 15
      %p155 = por %p153, %p154
      %p157 = scmp.ne.s32.totalorder %s140, %s156
      %p158 = scmp.eq.s32.totalorder %s18, 0
      %p159 = por %p157, %p158
      %s160 = ssub.s32 %s19, %s31
      %s161 = ssub.s32 %s20, %s27
      %s162 = sor.u32 %s160, %s161
      %p163 = scmp.eq.s32.totalorder %s162, 0
      %s165 = sadd.s32 %s164, 1
      %s166 = scalar_select %p163, %s164, %s165
      %p169 = pneg %p163
      %p170 = scmp.eq.s32.totalorder %s12, 15
      %p171 = por %p169, %p170
      %p172 = scmp.ne.s32.totalorder %s164, %s167
      %p173 = scmp.eq.s32.totalorder %s12, 0
      %p174 = por %p172, %p173
      %p175 = scmp.ne.s32.totalorder %s164, %s167
      %p176 = scmp.eq.s32.totalorder %s17, 15
      %p177 = por %p175, %p176
      %p178 = scmp.ne.s32.totalorder %s167, %s168
      %p179 = scmp.eq.s32.totalorder %s17, 0
      %p180 = por %p178, %p179
      %p181 = scmp.ne.s32.totalorder %s167, %s168
      %p182 = scmp.eq.s32.totalorder %s18, 15
      %p183 = por %p181, %p182
      %p185 = scmp.ne.s32.totalorder %s168, %s184
      %p186 = scmp.eq.s32.totalorder %s18, 0
      %p187 = por %p185, %p186
      %p188 = scmp.le.s32.totalorder 1, %s12
      %p189 = scmp.lt.s32.totalorder %s12, 17
      %p190 = pnand %p188, %p189
      %p191 = pneg %p190
      // Predicated region
      $region9: #{_lambda_.4} parent=5 // pred_check
        _
      $region10: #{_lambda_.4} parent=5 // pred_check_branch
        %193 = sbr.rel (%p190) target = $region12
      $region11: #{_lambda_.4} parent=5 // pred_region
        %s194 = ssub.s32 %s12, 1
        // Predicated region
        $region13: #{_lambda_.4} parent=11 // pred_check
          %p195 = pneg %p103
        $region14: #{_lambda_.4} parent=11 // pred_check_branch
          %197 = sbr.rel (%p195) target = $region16
        $region15: #{_lambda_.4} parent=11 // pred_region
          _
        $region16: #{_lambda_.4} parent=11 // pred_fallthru
          _
        // Predicated region
        $region17: #{_lambda_.4} parent=11 // pred_check
          %p198 = pneg %p124
        $region18: #{_lambda_.4} parent=11 // pred_check_branch
          %200 = sbr.rel (%p198) target = $region20
        $region19: #{_lambda_.4} parent=11 // pred_region
          _
        $region20: #{_lambda_.4} parent=11 // pred_fallthru
          _
      $region12: #{_lambda_.4} parent=5 // pred_fallthru
        _
      %p201 = scmp.lt.s32.totalorder %s12, 16
      // Predicated region
      $region21: #{_lambda_.4} parent=5 // pred_check
        %p202 = pneg %p201
      $region22: #{_lambda_.4} parent=5 // pred_check_branch
        %204 = sbr.rel (%p202) target = $region24
      $region23: #{_lambda_.4} parent=5 // pred_region
        // Predicated region
        $region25: #{_lambda_.4} parent=23 // pred_check
          %p205 = pneg %p46
        $region26: #{_lambda_.4} parent=23 // pred_check_branch
          %207 = sbr.rel (%p205) target = $region28
        $region27: #{_lambda_.4} parent=23 // pred_region
          %s208 = sand.u32 %s36, 1
          %s209 = sand.u32 %s36, 1
          %s210 = smul.addr %s209, 32
          %s211 = scalar_lea.vmem [#allocation2], %s210
          %s212 = smul.addr %s20, 2
          %s213 = smul.addr %s19, 144
          %s214 = sadd.s32 %s212, %s213
          %s215 = smul.addr %s214, 2
          %s216 = scalar_lea.vmem %s0, %s215
          // Predicated region
          $region29: #{_lambda_.4} parent=27 // pred_check
            _
          $region30: #{_lambda_.4} parent=27 // pred_check_branch
            %218 = sbr.rel (0) target = $region32
          $region31: #{_lambda_.4} parent=27 // pred_region
            // Predicated region
            $region33: #{_lambda_.4} parent=31 // pred_check
              _
            $region34: #{_lambda_.4} parent=31 // pred_check_branch
              %220 = sbr.rel target = $region36
            $region35: #{_lambda_.4} parent=31 // pred_region
              // Predicated region
              $region48: #{_lambda_.4} parent=35 // pred_check
                _
              $region49: #{_lambda_.4} parent=35 // pred_check_branch
                %250 = sbr.rel (0) target = $region51
              $region50: #{_lambda_.4} parent=35 // pred_region
                loop: start=0, step=1, limit=1
                $region52: #{_lambda_.4} parent=50 // loop_pre_header
                  _
                $region53: #{_lambda_.4} parent=50 // loop_header
                  %s252 = sphi 0, %s256
                  %p253 = scmp.ge.s32.totalorder %s252, 1
                  %s257 = sphi %s216, %s216
                  %s258 = sphi %s211, %s211
                $region54: #{_lambda_.4} parent=50 // loop_header_branch
                  %255 = sbr.rel (%p253) target = $region58
                $region55: #{_lambda_.4} parent=50 // loop_body
                  _
                $region56: #{_lambda_.4} parent=50 // loop_footer
                  %s256 = sadd.s32 1, %s252
                $region57: #{_lambda_.4} parent=50 // loop_footer_branch
                  %251 = sbr.rel target = $region53
                $region58: #{_lambda_.4} parent=50 // loop_exit
                  _
                %s260 = ssub.s32 16, 1
                loop: start=0, step=1, limit=1
                $region59: #{_lambda_.4} parent=50 // loop_pre_header
                  _
                $region60: #{_lambda_.4} parent=50 // loop_header
                  %s262 = sphi 0, %s266
                  %p263 = scmp.ge.s32.totalorder %s262, 1
                  %s267 = sphi %s216, %s216
                  %s268 = sphi %s211, %s211
                $region61: #{_lambda_.4} parent=50 // loop_header_branch
                  %265 = sbr.rel (%p263) target = $region65
                $region62: #{_lambda_.4} parent=50 // loop_body
                  %v269 = vld [vmem:[%s267] sm:%s260]
                  %270 = vst [vmem:[%s268] sm:%s260] %v269
                  %v271 = vld [vmem:[%s267 + $0x24] sm:%s260]
                  %272 = vst [vmem:[%s268 + $0x4] sm:%s260] %v271
                  %v273 = vld [vmem:[%s267 + $0x48] sm:%s260]
                  %274 = vst [vmem:[%s268 + $0x8] sm:%s260] %v273
                  %v275 = vld [vmem:[%s267 + $0x6c] sm:%s260]
                  %276 = vst [vmem:[%s268 + $0xc] sm:%s260] %v275
                  %v277 = vld [vmem:[%s267 + $0x90] sm:%s260]
                  %278 = vst [vmem:[%s268 + $0x10] sm:%s260] %v277
                  %v279 = vld [vmem:[%s267 + $0xb4] sm:%s260]
                  %280 = vst [vmem:[%s268 + $0x14] sm:%s260] %v279
                  %v281 = vld [vmem:[%s267 + $0xd8] sm:%s260]
                  %282 = vst [vmem:[%s268 + $0x18] sm:%s260] %v281
                  %v283 = vld [vmem:[%s267 + $0xfc] sm:%s260]
                  %284 = vst [vmem:[%s268 + $0x1c] sm:%s260] %v283
                $region63: #{_lambda_.4} parent=50 // loop_footer
                  %s266 = sadd.s32 1, %s262
                $region64: #{_lambda_.4} parent=50 // loop_footer_branch
                  %261 = sbr.rel target = $region60
                $region65: #{_lambda_.4} parent=50 // loop_exit
                  _
              $region51: #{_lambda_.4} parent=35 // pred_fallthru
                _
            $region36: #{_lambda_.4} parent=31 // pred_fallthru
              _
            // Predicated region
            $region37: #{_lambda_.4} parent=31 // pred_check
              _
            $region38: #{_lambda_.4} parent=31 // pred_check_branch
              %222 = sbr.rel (0) target = $region40
            $region39: #{_lambda_.4} parent=31 // pred_region
              %s224 = ssub.s32 16, 1
              loop: start=0, step=1, limit=1
              $region41: #{_lambda_.4} parent=39 // loop_pre_header
                _
              $region42: #{_lambda_.4} parent=39 // loop_header
                %s226 = sphi 0, %s230
                %p227 = scmp.ge.s32.totalorder %s226, 1
                %s231 = sphi %s216, %s216
                %s232 = sphi %s211, %s211
              $region43: #{_lambda_.4} parent=39 // loop_header_branch
                %229 = sbr.rel (%p227) target = $region47
              $region44: #{_lambda_.4} parent=39 // loop_body
                %v233 = vld [vmem:[%s231] sm:%s224]
                %234 = vst [vmem:[%s232] sm:%s224] %v233
                %v235 = vld [vmem:[%s231 + $0x24] sm:%s224]
                %236 = vst [vmem:[%s232 + $0x4] sm:%s224] %v235
                %v237 = vld [vmem:[%s231 + $0x48] sm:%s224]
                %238 = vst [vmem:[%s232 + $0x8] sm:%s224] %v237
                %v239 = vld [vmem:[%s231 + $0x6c] sm:%s224]
                %240 = vst [vmem:[%s232 + $0xc] sm:%s224] %v239
                %v241 = vld [vmem:[%s231 + $0x90] sm:%s224]
                %242 = vst [vmem:[%s232 + $0x10] sm:%s224] %v241
                %v243 = vld [vmem:[%s231 + $0xb4] sm:%s224]
                %244 = vst [vmem:[%s232 + $0x14] sm:%s224] %v243
                %v245 = vld [vmem:[%s231 + $0xd8] sm:%s224]
                %246 = vst [vmem:[%s232 + $0x18] sm:%s224] %v245
                %v247 = vld [vmem:[%s231 + $0xfc] sm:%s224]
                %248 = vst [vmem:[%s232 + $0x1c] sm:%s224] %v247
              $region45: #{_lambda_.4} parent=39 // loop_footer
                %s230 = sadd.s32 1, %s226
              $region46: #{_lambda_.4} parent=39 // loop_footer_branch
                %225 = sbr.rel target = $region42
              $region47: #{_lambda_.4} parent=39 // loop_exit
                _
            $region40: #{_lambda_.4} parent=31 // pred_fallthru
              _
          $region32: #{_lambda_.4} parent=27 // pred_fallthru
            _
          %285 = vnop
        $region28: #{_lambda_.4} parent=23 // pred_fallthru
          _
        // Predicated region
        $region66: #{_lambda_.4} parent=23 // pred_check
          %p286 = pneg %p76
        $region67: #{_lambda_.4} parent=23 // pred_check_branch
          %288 = sbr.rel (%p286) target = $region69
        $region68: #{_lambda_.4} parent=23 // pred_region
          %s289 = sand.u32 %s66, 1
          %s290 = sand.u32 %s66, 1
          %s291 = smul.addr %s290, 32
          %s292 = scalar_lea.vmem [#allocation3], %s291
          %s293 = sadd.s32 %s20, 1
          %s294 = smul.addr %s293, 2
          %s295 = smul.addr %s19, 144
          %s296 = sadd.s32 %s294, %s295
          %s297 = smul.addr %s296, 2
          %s298 = scalar_lea.vmem %s1, %s297
          // Predicated region
          $region70: #{_lambda_.4} parent=68 // pred_check
            _
          $region71: #{_lambda_.4} parent=68 // pred_check_branch
            %300 = sbr.rel (0) target = $region73
          $region72: #{_lambda_.4} parent=68 // pred_region
            // Predicated region
            $region74: #{_lambda_.4} parent=72 // pred_check
              _
            $region75: #{_lambda_.4} parent=72 // pred_check_branch
              %302 = sbr.rel target = $region77
            $region76: #{_lambda_.4} parent=72 // pred_region
              // Predicated region
              $region89: #{_lambda_.4} parent=76 // pred_check
                _
              $region90: #{_lambda_.4} parent=76 // pred_check_branch
                %332 = sbr.rel (0) target = $region92
              $region91: #{_lambda_.4} parent=76 // pred_region
                loop: start=0, step=1, limit=1
                $region93: #{_lambda_.4} parent=91 // loop_pre_header
                  _
                $region94: #{_lambda_.4} parent=91 // loop_header
                  %s334 = sphi 0, %s338
                  %p335 = scmp.ge.s32.totalorder %s334, 1
                  %s339 = sphi %s298, %s298
                  %s340 = sphi %s292, %s292
                $region95: #{_lambda_.4} parent=91 // loop_header_branch
                  %337 = sbr.rel (%p335) target = $region99
                $region96: #{_lambda_.4} parent=91 // loop_body
                  _
                $region97: #{_lambda_.4} parent=91 // loop_footer
                  %s338 = sadd.s32 1, %s334
                $region98: #{_lambda_.4} parent=91 // loop_footer_branch
                  %333 = sbr.rel target = $region94
                $region99: #{_lambda_.4} parent=91 // loop_exit
                  _
                %s342 = ssub.s32 16, 1
                loop: start=0, step=1, limit=1
                $region100: #{_lambda_.4} parent=91 // loop_pre_header
                  _
                $region101: #{_lambda_.4} parent=91 // loop_header
                  %s344 = sphi 0, %s348
                  %p345 = scmp.ge.s32.totalorder %s344, 1
                  %s349 = sphi %s298, %s298
                  %s350 = sphi %s292, %s292
                $region102: #{_lambda_.4} parent=91 // loop_header_branch
                  %347 = sbr.rel (%p345) target = $region106
                $region103: #{_lambda_.4} parent=91 // loop_body
                  %v351 = vld [vmem:[%s349] sm:%s342]
                  %352 = vst [vmem:[%s350] sm:%s342] %v351
                  %v353 = vld [vmem:[%s349 + $0x24] sm:%s342]
                  %354 = vst [vmem:[%s350 + $0x4] sm:%s342] %v353
                  %v355 = vld [vmem:[%s349 + $0x48] sm:%s342]
                  %356 = vst [vmem:[%s350 + $0x8] sm:%s342] %v355
                  %v357 = vld [vmem:[%s349 + $0x6c] sm:%s342]
                  %358 = vst [vmem:[%s350 + $0xc] sm:%s342] %v357
                  %v359 = vld [vmem:[%s349 + $0x90] sm:%s342]
                  %360 = vst [vmem:[%s350 + $0x10] sm:%s342] %v359
                  %v361 = vld [vmem:[%s349 + $0xb4] sm:%s342]
                  %362 = vst [vmem:[%s350 + $0x14] sm:%s342] %v361
                  %v363 = vld [vmem:[%s349 + $0xd8] sm:%s342]
                  %364 = vst [vmem:[%s350 + $0x18] sm:%s342] %v363
                  %v365 = vld [vmem:[%s349 + $0xfc] sm:%s342]
                  %366 = vst [vmem:[%s350 + $0x1c] sm:%s342] %v365
                $region104: #{_lambda_.4} parent=91 // loop_footer
                  %s348 = sadd.s32 1, %s344
                $region105: #{_lambda_.4} parent=91 // loop_footer_branch
                  %343 = sbr.rel target = $region101
                $region106: #{_lambda_.4} parent=91 // loop_exit
                  _
              $region92: #{_lambda_.4} parent=76 // pred_fallthru
                _
            $region77: #{_lambda_.4} parent=72 // pred_fallthru
              _
            // Predicated region
            $region78: #{_lambda_.4} parent=72 // pred_check
              _
            $region79: #{_lambda_.4} parent=72 // pred_check_branch
              %304 = sbr.rel (0) target = $region81
            $region80: #{_lambda_.4} parent=72 // pred_region
              %s306 = ssub.s32 16, 1
              loop: start=0, step=1, limit=1
              $region82: #{_lambda_.4} parent=80 // loop_pre_header
                _
              $region83: #{_lambda_.4} parent=80 // loop_header
                %s308 = sphi 0, %s312
                %p309 = scmp.ge.s32.totalorder %s308, 1
                %s313 = sphi %s298, %s298
                %s314 = sphi %s292, %s292
              $region84: #{_lambda_.4} parent=80 // loop_header_branch
                %311 = sbr.rel (%p309) target = $region88
              $region85: #{_lambda_.4} parent=80 // loop_body
                %v315 = vld [vmem:[%s313] sm:%s306]
                %316 = vst [vmem:[%s314] sm:%s306] %v315
                %v317 = vld [vmem:[%s313 + $0x24] sm:%s306]
                %318 = vst [vmem:[%s314 + $0x4] sm:%s306] %v317
                %v319 = vld [vmem:[%s313 + $0x48] sm:%s306]
                %320 = vst [vmem:[%s314 + $0x8] sm:%s306] %v319
                %v321 = vld [vmem:[%s313 + $0x6c] sm:%s306]
                %322 = vst [vmem:[%s314 + $0xc] sm:%s306] %v321
                %v323 = vld [vmem:[%s313 + $0x90] sm:%s306]
                %324 = vst [vmem:[%s314 + $0x10] sm:%s306] %v323
                %v325 = vld [vmem:[%s313 + $0xb4] sm:%s306]
                %326 = vst [vmem:[%s314 + $0x14] sm:%s306] %v325
                %v327 = vld [vmem:[%s313 + $0xd8] sm:%s306]
                %328 = vst [vmem:[%s314 + $0x18] sm:%s306] %v327
                %v329 = vld [vmem:[%s313 + $0xfc] sm:%s306]
                %330 = vst [vmem:[%s314 + $0x1c] sm:%s306] %v329
              $region86: #{_lambda_.4} parent=80 // loop_footer
                %s312 = sadd.s32 1, %s308
              $region87: #{_lambda_.4} parent=80 // loop_footer_branch
                %307 = sbr.rel target = $region83
              $region88: #{_lambda_.4} parent=80 // loop_exit
                _
            $region81: #{_lambda_.4} parent=72 // pred_fallthru
              _
          $region73: #{_lambda_.4} parent=68 // pred_fallthru
            _
          %367 = vnop
        $region69: #{_lambda_.4} parent=23 // pred_fallthru
          _
      $region24: #{_lambda_.4} parent=5 // pred_fallthru
        _
      %p368 = scmp.le.s32.totalorder 1, %s12
      %p369 = scmp.lt.s32.totalorder %s12, 17
      %p370 = pnand %p368, %p369
      %p371 = pneg %p370
      // Predicated region
      $region107: #{_lambda_.4} parent=5 // pred_check
        _
      $region108: #{_lambda_.4} parent=5 // pred_check_branch
        %373 = sbr.rel (%p370) target = $region110
      $region109: #{_lambda_.4} parent=5 // pred_region
        %s374 = ssub.s32 %s12, 1
        %s375 = sand.u32 %s39, 1
        %s376 = sand.u32 %s39, 1
        %s377 = smul.addr %s376, 32
        %s378 = scalar_lea.vmem [#allocation2], %s377
        // Predicated region
        $region111: #{_lambda_.4} parent=109 // pred_check
          %p379 = pneg %p52
        $region112: #{_lambda_.4} parent=109 // pred_check_branch
          %381 = sbr.rel (%p379) target = $region114
        $region113: #{_lambda_.4} parent=109 // pred_region
          _
        $region114: #{_lambda_.4} parent=109 // pred_fallthru
          _
        %s382 = sand.u32 %s69, 1
        %s383 = sand.u32 %s69, 1
        %s384 = smul.addr %s383, 32
        %s385 = scalar_lea.vmem [#allocation3], %s384
        // Predicated region
        $region115: #{_lambda_.4} parent=109 // pred_check
          %p386 = pneg %p82
        $region116: #{_lambda_.4} parent=109 // pred_check_branch
          %388 = sbr.rel (%p386) target = $region118
        $region117: #{_lambda_.4} parent=109 // pred_region
          _
        $region118: #{_lambda_.4} parent=109 // pred_fallthru
          _
        %s389 = sand.u32 %s39, 1
        %s390 = sand.u32 %s39, 1
        %s391 = smul.addr %s390, 32
        %s392 = scalar_lea.vmem [#allocation2], %s391
        %p393 = pneg %p52
        %p394 = pneg %p49
        %s395 = sand.u32 %s69, 1
        %s396 = sand.u32 %s69, 1
        %s397 = smul.addr %s396, 32
        %s398 = scalar_lea.vmem [#allocation3], %s397
        %p399 = pneg %p82
        %p400 = pneg %p79
        %p401 = pneg %p103
        %p402 = pneg %p100
        %p403 = pneg %p124
        %p404 = pneg %p121
        %p405 = pneg %p152
        %p406 = pneg %p149
        %p407 = scmp.lt.s32.totalorder %s21, 1
        %s408 = scalar_select %p407, %s21, 1
        %p409 = scmp.lt.s32.totalorder %s22, 7
        %s410 = scalar_select %p409, %s22, 7
        %s411 = smul.addr %s408, 8
        %s412 = sadd.s32 %s410, %s411
        %s413 = smul.addr %s412, 8
        %s414 = scalar_lea.vmem %s4, %s413
        %p415 = pneg %p180
        %p416 = pneg %p177
        %p417 = scmp.lt.s32.totalorder %s21, 1
        %s418 = scalar_select %p417, %s21, 1
        %p419 = scmp.lt.s32.totalorder %s22, 7
        %s420 = scalar_select %p419, %s22, 7
        %s421 = smul.addr %s418, 8
        %s422 = sadd.s32 %s420, %s421
        %s423 = smul.addr %s422, 8
        %s424 = scalar_lea.vmem %s5, %s423
        %s425 = sadd.s32 %s22, 1
        %p426 = scmp.lt.s32.totalorder %s21, 1
        %s427 = scalar_select %p426, %s21, 1
        %p428 = scmp.lt.s32.totalorder %s22, 7
        %s429 = scalar_select %p428, %s22, 7
        %s430 = smul.addr %s427, 8
        %s431 = sadd.s32 %s429, %s430
        %s432 = smul.addr %s431, 8
        %s433 = scalar_lea.vmem %s4, %s432
        %p434 = scmp.lt.s32.totalorder %s21, 1
        %s435 = scalar_select %p434, %s21, 1
        %p436 = scmp.lt.s32.totalorder %s22, 7
        %s437 = scalar_select %p436, %s22, 7
        %s438 = smul.addr %s435, 8
        %s439 = sadd.s32 %s437, %s438
        %s440 = smul.addr %s439, 8
        %s441 = scalar_lea.vmem %s5, %s440
        %v443 = vld [vmem:[%s378] sm:$0x3]
        %v444 = vld [vmem:[%s2] sm:$0xf]
        %s445 = scalar_lea.vmem %s378, 4 [#allocation2]
        %v446 = vld [vmem:[%s445] sm:$0x3]
        %s447 = scalar_lea.vmem %s2, 4
        %v448 = vld [vmem:[%s447] sm:$0xf]
        %vm449 = vcmask 31744
        %v451 = vsel %vm449, %v448, 0
        %vm453 = vcmask 1041408
        %v455 = vsel %vm453, %v446, 0
        %457 = vmatpush.bf16.msra.mxu0 0
        %458 = vmatpush.bf16.msra.mxu0 0
        %459 = vmatpush.bf16.msra.mxu0 0
        %460 = vmatpush.bf16.msra.mxu0 0
        %461 = vmatpush.bf16.msra.mxu0 0
        %462 = vmatpush.bf16.msra.mxu0 0
        %463 = vmatpush.bf16.msra.mxu0 0
        %464 = vmatpush.bf16.msra.mxu0 %v455
        %465 = vmatmul.bf16.gmra.mxu0 %v451
        %v466 = vpop.f32.mrf.mxu0
        %v467 = vadd.f32 0.0, %v466
        %v468 = vpop.f32.mrf.mxu0
        %469 = vdwg.mxu0
        %v471 = vsel %vm449, %v444, 0
        %v474 = vsel %vm453, %v443, 0
        %476 = vmatpush.bf16.msra.mxu0 0
        %477 = vmatpush.bf16.msra.mxu0 0
        %478 = vmatpush.bf16.msra.mxu0 0
        %479 = vmatpush.bf16.msra.mxu0 0
        %480 = vmatpush.bf16.msra.mxu0 0
        %481 = vmatpush.bf16.msra.mxu0 0
        %482 = vmatpush.bf16.msra.mxu0 0
        %483 = vmatpush.bf16.msra.mxu0 %v474
        %484 = vmatmul.bf16.gmra.mxu0 %v471
        %v485 = vpop.f32.mrf.mxu0
        %v486 = vadd.f32 %v467, %v485
        %v487 = vpop.f32.mrf.mxu0
        %488 = vdwg.mxu0
        %v489 = vld [vmem:[%s378] sm:$0xf]
        %s490 = scalar_lea.vmem %s2, 8
        %v491 = vld [vmem:[%s490] sm:$0xf]
        %493 = vst [vmem:[#allocation1] ss:$4 sm:$0xff] %v489
        %v494 = vld.sshfl [vmem:[#allocation1] sm:$0xff pattern:$0x73625140]
        %v496 = vld.sshfl [vmem:[#allocation1 + $0x8] sm:$0xff pattern:$0x73625140]
        %498 = vrot.lane.b32.xlu0 %v494, 127
        %v499 = vpop.permute.xlu0 %498
        %500 = vrot.lane.b32.xlu0 %v496, 127
        %v501 = vpop.permute.xlu0 %500
        %vm502 = vcmask 1039360
        %v503 = vsel %vm502, %v499, %v501
        %v505 = vsel %vm449, %v491, 0
        %v508 = vsel %vm453, %v503, 0
        %510 = vmatpush.bf16.msra.mxu0 0
        %511 = vmatpush.bf16.msra.mxu0 0
        %512 = vmatpush.bf16.msra.mxu0 0
        %513 = vmatpush.bf16.msra.mxu0 0
        %514 = vmatpush.bf16.msra.mxu0 0
        %515 = vmatpush.bf16.msra.mxu0 0
        %516 = vmatpush.bf16.msra.mxu0 0
        %517 = vmatpush.bf16.msra.mxu0 %v508
        %518 = vmatmul.bf16.gmra.mxu0 %v505
        %v519 = vpop.f32.mrf.mxu0
        %v520 = vadd.f32 0.0, %v519
        %v521 = vpop.f32.mrf.mxu0
        %522 = vdwg.mxu0
        %v523 = vadd.f32 %v486, %v520
        %s524 = scalar_lea.vmem %s378, 8 [#allocation2]
        %v525 = vld [vmem:[%s524] sm:$0x3]
        %s526 = scalar_lea.vmem %s2, 12
        %v527 = vld [vmem:[%s526] sm:$0xf]
        %v529 = vsel %vm449, %v527, 0
        %v532 = vsel %vm453, %v525, 0
        %534 = vmatpush.bf16.msra.mxu0 0
        %535 = vmatpush.bf16.msra.mxu0 0
        %536 = vmatpush.bf16.msra.mxu0 0
        %537 = vmatpush.bf16.msra.mxu0 0
        %538 = vmatpush.bf16.msra.mxu0 0
        %539 = vmatpush.bf16.msra.mxu0 0
        %540 = vmatpush.bf16.msra.mxu0 0
        %541 = vmatpush.bf16.msra.mxu0 %v532
        %542 = vmatmul.bf16.gmra.mxu0 %v529
        %v543 = vpop.f32.mrf.mxu0
        %v544 = vadd.f32 0.0, %v543
        %v545 = vpop.f32.mrf.mxu0
        %546 = vdwg.mxu0
        %v547 = vadd.f32 %v523, %v544
        %s548 = scalar_lea.vmem %s378, 12 [#allocation2]
        %v549 = vld [vmem:[%s548] sm:$0x3]
        %s550 = scalar_lea.vmem %s2, 16
        %v551 = vld [vmem:[%s550] sm:$0xf]
        %v553 = vsel %vm449, %v551, 0
        %v556 = vsel %vm453, %v549, 0
        %558 = vmatpush.bf16.msra.mxu0 0
        %559 = vmatpush.bf16.msra.mxu0 0
        %560 = vmatpush.bf16.msra.mxu0 0
        %561 = vmatpush.bf16.msra.mxu0 0
        %562 = vmatpush.bf16.msra.mxu0 0
        %563 = vmatpush.bf16.msra.mxu0 0
        %564 = vmatpush.bf16.msra.mxu0 0
        %565 = vmatpush.bf16.msra.mxu0 %v556
        %566 = vmatmul.bf16.gmra.mxu0 %v553
        %v567 = vpop.f32.mrf.mxu0
        %v568 = vadd.f32 0.0, %v567
        %v569 = vpop.f32.mrf.mxu0
        %570 = vdwg.mxu0
        %v571 = vadd.f32 %v547, %v568
        %v572 = vld [vmem:[%s524] sm:$0xf]
        %s573 = scalar_lea.vmem %s2, 20
        %v574 = vld [vmem:[%s573] sm:$0xf]
        %576 = vst [vmem:[#allocation1] ss:$4 sm:$0xff] %v572
        %v577 = vld.sshfl [vmem:[#allocation1] sm:$0xff pattern:$0x73625140]
        %v579 = vld.sshfl [vmem:[#allocation1 + $0x8] sm:$0xff pattern:$0x73625140]
        %581 = vrot.lane.b32.xlu0 %v577, 127
        %v582 = vpop.permute.xlu0 %581
        %583 = vrot.lane.b32.xlu0 %v579, 127
        %v584 = vpop.permute.xlu0 %583
        %v585 = vsel %vm502, %v582, %v584
        %v587 = vsel %vm449, %v574, 0
        %v590 = vsel %vm453, %v585, 0
        %592 = vmatpush.bf16.msra.mxu0 0
        %593 = vmatpush.bf16.msra.mxu0 0
        %594 = vmatpush.bf16.msra.mxu0 0
        %595 = vmatpush.bf16.msra.mxu0 0
        %596 = vmatpush.bf16.msra.mxu0 0
        %597 = vmatpush.bf16.msra.mxu0 0
        %598 = vmatpush.bf16.msra.mxu0 0
        %599 = vmatpush.bf16.msra.mxu0 %v590
        %600 = vmatmul.bf16.gmra.mxu0 %v587
        %v601 = vpop.f32.mrf.mxu0
        %v602 = vadd.f32 0.0, %v601
        %v603 = vpop.f32.mrf.mxu0
        %604 = vdwg.mxu0
        %v605 = vadd.f32 %v571, %v602
        %v606 = vld [vmem:[%s378] sm:$0xf]
        %s607 = scalar_lea.vmem %s2, 24
        %v608 = vld [vmem:[%s607] sm:$0xf]
        %610 = vst [vmem:[#allocation1] ss:$4 sm:$0xff] %v606
        %v611 = vld.sshfl [vmem:[#allocation1] sm:$0xff pattern:$0x73625140]
        %v613 = vld.sshfl [vmem:[#allocation1 + $0x8] sm:$0xff pattern:$0x73625140]
        %615 = vrot.lane.b32.xlu0 %v611, 119
        %v616 = vpop.permute.xlu0 %615
        %617 = vrot.lane.b32.xlu0 %v613, 119
        %v618 = vpop.permute.xlu0 %617
        %vm619 = vcmask 973824
        %v620 = vsel %vm619, %v616, %v618
        %v622 = vsel %vm449, %v608, 0
        %v625 = vsel %vm453, %v620, 0
        %627 = vmatpush.bf16.msra.mxu0 0
        %628 = vmatpush.bf16.msra.mxu0 0
        %629 = vmatpush.bf16.msra.mxu0 0
        %630 = vmatpush.bf16.msra.mxu0 0
        %631 = vmatpush.bf16.msra.mxu0 0
        %632 = vmatpush.bf16.msra.mxu0 0
        %633 = vmatpush.bf16.msra.mxu0 0
        %634 = vmatpush.bf16.msra.mxu0 %v625
        %635 = vmatmul.bf16.gmra.mxu0 %v622
        %v636 = vpop.f32.mrf.mxu0
        %v637 = vadd.f32 0.0, %v636
        %v638 = vpop.f32.mrf.mxu0
        %639 = vdwg.mxu0
        %v640 = vadd.f32 %v605, %v637
        %v641 = vld [vmem:[%s445] sm:$0xf]
        %s642 = scalar_lea.vmem %s2, 28
        %v643 = vld [vmem:[%s642] sm:$0xf]
        %645 = vst [vmem:[#allocation1] ss:$4 sm:$0xff] %v641
        %v646 = vld.sshfl [vmem:[#allocation1] sm:$0xff pattern:$0x73625140]
        %v648 = vld.sshfl [vmem:[#allocation1 + $0x8] sm:$0xff pattern:$0x73625140]
        %650 = vrot.lane.b32.xlu0 %v646, 119
        %v651 = vpop.permute.xlu0 %650
        %652 = vrot.lane.b32.xlu0 %v648, 119
        %v653 = vpop.permute.xlu0 %652
        %v654 = vsel %vm619, %v651, %v653
        %v656 = vsel %vm449, %v643, 0
        %v659 = vsel %vm453, %v654, 0
        %661 = vmatpush.bf16.msra.mxu0 0
        %662 = vmatpush.bf16.msra.mxu0 0
        %663 = vmatpush.bf16.msra.mxu0 0
        %664 = vmatpush.bf16.msra.mxu0 0
        %665 = vmatpush.bf16.msra.mxu0 0
        %666 = vmatpush.bf16.msra.mxu0 0
        %667 = vmatpush.bf16.msra.mxu0 0
        %668 = vmatpush.bf16.msra.mxu0 %v659
        %669 = vmatmul.bf16.gmra.mxu0 %v656
        %v670 = vpop.f32.mrf.mxu0
        %v671 = vadd.f32 0.0, %v670
        %v672 = vpop.f32.mrf.mxu0
        %673 = vdwg.mxu0
        %v674 = vadd.f32 %v640, %v671
        %v675 = vld [vmem:[%s378] sm:$0xf]
        %s676 = scalar_lea.vmem %s2, 32
        %v677 = vld [vmem:[%s676] sm:$0xf]
        %679 = vst [vmem:[#allocation1] ss:$4 sm:$0xff] %v675
        %v680 = vld.sshfl [vmem:[#allocation1] sm:$0xff pattern:$0x73625140]
        %v682 = vld.sshfl [vmem:[#allocation1 + $0x8] sm:$0xff pattern:$0x73625140]
        %684 = vrot.lane.b32.xlu0 %v680, 118
        %v685 = vpop.permute.xlu0 %684
        %686 = vrot.lane.b32.xlu0 %v682, 118
        %v687 = vpop.permute.xlu0 %686
        %vm688 = vcmask 965632
        %v689 = vsel %vm688, %v685, %v687
        %v691 = vsel %vm449, %v677, 0
        %v694 = vsel %vm453, %v689, 0
        %696 = vmatpush.bf16.msra.mxu0 0
        %697 = vmatpush.bf16.msra.mxu0 0
        %698 = vmatpush.bf16.msra.mxu0 0
        %699 = vmatpush.bf16.msra.mxu0 0
        %700 = vmatpush.bf16.msra.mxu0 0
        %701 = vmatpush.bf16.msra.mxu0 0
        %702 = vmatpush.bf16.msra.mxu0 0
        %703 = vmatpush.bf16.msra.mxu0 %v694
        %704 = vmatmul.bf16.gmra.mxu0 %v691
        %v705 = vpop.f32.mrf.mxu0
        %v706 = vadd.f32 0.0, %v705
        %v707 = vpop.f32.mrf.mxu0
        %708 = vdwg.mxu0
        %v709 = vadd.f32 %v674, %v706
        %s710 = scalar_lea.vmem %s378, 16 [#allocation2]
        %v711 = vld [vmem:[%s710] sm:$0x3]
        %s712 = scalar_lea.vmem %s2, 36
        %v713 = vld [vmem:[%s712] sm:$0xf]
        %v715 = vsel %vm449, %v713, 0
        %v718 = vsel %vm453, %v711, 0
        %720 = vmatpush.bf16.msra.mxu0 0
        %721 = vmatpush.bf16.msra.mxu0 0
        %722 = vmatpush.bf16.msra.mxu0 0
        %723 = vmatpush.bf16.msra.mxu0 0
        %724 = vmatpush.bf16.msra.mxu0 0
        %725 = vmatpush.bf16.msra.mxu0 0
        %726 = vmatpush.bf16.msra.mxu0 0
        %727 = vmatpush.bf16.msra.mxu0 %v718
        %728 = vmatmul.bf16.gmra.mxu0 %v715
        %v729 = vpop.f32.mrf.mxu0
        %v730 = vadd.f32 0.0, %v729
        %v731 = vpop.f32.mrf.mxu0
        %732 = vdwg.mxu0
        %v733 = vadd.f32 %v709, %v730
        %s734 = scalar_lea.vmem %s378, 20 [#allocation2]
        %v735 = vld [vmem:[%s734] sm:$0x3]
        %s736 = scalar_lea.vmem %s2, 40
        %v737 = vld [vmem:[%s736] sm:$0xf]
        %v739 = vsel %vm449, %v737, 0
        %v742 = vsel %vm453, %v735, 0
        %744 = vmatpush.bf16.msra.mxu0 0
        %745 = vmatpush.bf16.msra.mxu0 0
        %746 = vmatpush.bf16.msra.mxu0 0
        %747 = vmatpush.bf16.msra.mxu0 0
        %748 = vmatpush.bf16.msra.mxu0 0
        %749 = vmatpush.bf16.msra.mxu0 0
        %750 = vmatpush.bf16.msra.mxu0 0
        %751 = vmatpush.bf16.msra.mxu0 %v742
        %752 = vmatmul.bf16.gmra.mxu0 %v739
        %v753 = vpop.f32.mrf.mxu0
        %v754 = vadd.f32 0.0, %v753
        %v755 = vpop.f32.mrf.mxu0
        %756 = vdwg.mxu0
        %v757 = vadd.f32 %v733, %v754
        %v758 = vld [vmem:[%s710] sm:$0xf]
        %s759 = scalar_lea.vmem %s2, 44
        %v760 = vld [vmem:[%s759] sm:$0xf]
        %762 = vst [vmem:[#allocation1] ss:$4 sm:$0xff] %v758
        %v763 = vld.sshfl [vmem:[#allocation1] sm:$0xff pattern:$0x73625140]
        %v765 = vld.sshfl [vmem:[#allocation1 + $0x8] sm:$0xff pattern:$0x73625140]
        %767 = vrot.lane.b32.xlu0 %v763, 127
        %v768 = vpop.permute.xlu0 %767
        %769 = vrot.lane.b32.xlu0 %v765, 127
        %v770 = vpop.permute.xlu0 %769
        %v771 = vsel %vm502, %v768, %v770
        %v773 = vsel %vm449, %v760, 0
        %v776 = vsel %vm453, %v771, 0
        %778 = vmatpush.bf16.msra.mxu0 0
        %779 = vmatpush.bf16.msra.mxu0 0
        %780 = vmatpush.bf16.msra.mxu0 0
        %781 = vmatpush.bf16.msra.mxu0 0
        %782 = vmatpush.bf16.msra.mxu0 0
        %783 = vmatpush.bf16.msra.mxu0 0
        %784 = vmatpush.bf16.msra.mxu0 0
        %785 = vmatpush.bf16.msra.mxu0 %v776
        %786 = vmatmul.bf16.gmra.mxu0 %v773
        %v787 = vpop.f32.mrf.mxu0
        %v788 = vadd.f32 0.0, %v787
        %v789 = vpop.f32.mrf.mxu0
        %790 = vdwg.mxu0
        %v791 = vadd.f32 %v757, %v788
        %s792 = scalar_lea.vmem %s378, 24 [#allocation2]
        %v793 = vld [vmem:[%s792] sm:$0x3]
        %s794 = scalar_lea.vmem %s2, 48
        %v795 = vld [vmem:[%s794] sm:$0xf]
        %v797 = vsel %vm449, %v795, 0
        %v800 = vsel %vm453, %v793, 0
        %802 = vmatpush.bf16.msra.mxu0 0
        %803 = vmatpush.bf16.msra.mxu0 0
        %804 = vmatpush.bf16.msra.mxu0 0
        %805 = vmatpush.bf16.msra.mxu0 0
        %806 = vmatpush.bf16.msra.mxu0 0
        %807 = vmatpush.bf16.msra.mxu0 0
        %808 = vmatpush.bf16.msra.mxu0 0
        %809 = vmatpush.bf16.msra.mxu0 %v800
        %810 = vmatmul.bf16.gmra.mxu0 %v797
        %v811 = vpop.f32.mrf.mxu0
        %v812 = vadd.f32 0.0, %v811
        %v813 = vpop.f32.mrf.mxu0
        %814 = vdwg.mxu0
        %v815 = vadd.f32 %v791, %v812
        %s816 = scalar_lea.vmem %s378, 28 [#allocation2]
        %v817 = vld [vmem:[%s816] sm:$0x3]
        %s818 = scalar_lea.vmem %s2, 52
        %v819 = vld [vmem:[%s818] sm:$0xf]
        %v821 = vsel %vm449, %v819, 0
        %v824 = vsel %vm453, %v817, 0
        %826 = vmatpush.bf16.msra.mxu0 0
        %827 = vmatpush.bf16.msra.mxu0 0
        %828 = vmatpush.bf16.msra.mxu0 0
        %829 = vmatpush.bf16.msra.mxu0 0
        %830 = vmatpush.bf16.msra.mxu0 0
        %831 = vmatpush.bf16.msra.mxu0 0
        %832 = vmatpush.bf16.msra.mxu0 0
        %833 = vmatpush.bf16.msra.mxu0 %v824
        %834 = vmatmul.bf16.gmra.mxu0 %v821
        %v835 = vpop.f32.mrf.mxu0
        %v836 = vadd.f32 0.0, %v835
        %v837 = vpop.f32.mrf.mxu0
        %838 = vdwg.mxu0
        %v839 = vadd.f32 %v815, %v836
        %v840 = vld [vmem:[%s792] sm:$0xf]
        %s841 = scalar_lea.vmem %s2, 56
        %v842 = vld [vmem:[%s841] sm:$0xf]
        %844 = vst [vmem:[#allocation1] ss:$4 sm:$0xff] %v840
        %v845 = vld.sshfl [vmem:[#allocation1] sm:$0xff pattern:$0x73625140]
        %v847 = vld.sshfl [vmem:[#allocation1 + $0x8] sm:$0xff pattern:$0x73625140]
        %849 = vrot.lane.b32.xlu0 %v845, 127
        %v850 = vpop.permute.xlu0 %849
        %851 = vrot.lane.b32.xlu0 %v847, 127
        %v852 = vpop.permute.xlu0 %851
        %v853 = vsel %vm502, %v850, %v852
        %v855 = vsel %vm449, %v842, 0
        %v858 = vsel %vm453, %v853, 0
        %860 = vmatpush.bf16.msra.mxu0 0
        %861 = vmatpush.bf16.msra.mxu0 0
        %862 = vmatpush.bf16.msra.mxu0 0
        %863 = vmatpush.bf16.msra.mxu0 0
        %864 = vmatpush.bf16.msra.mxu0 0
        %865 = vmatpush.bf16.msra.mxu0 0
        %866 = vmatpush.bf16.msra.mxu0 0
        %867 = vmatpush.bf16.msra.mxu0 %v858
        %868 = vmatmul.bf16.gmra.mxu0 %v855
        %v869 = vpop.f32.mrf.mxu0
        %v870 = vadd.f32 0.0, %v869
        %v871 = vpop.f32.mrf.mxu0
        %872 = vdwg.mxu0
        %v873 = vadd.f32 %v839, %v870
        %v874 = vld [vmem:[%s710] sm:$0xf]
        %s875 = scalar_lea.vmem %s2, 60
        %v876 = vld [vmem:[%s875] sm:$0xf]
        %878 = vst [vmem:[#allocation1] ss:$4 sm:$0xff] %v874
        %v879 = vld.sshfl [vmem:[#allocation1] sm:$0xff pattern:$0x73625140]
        %v881 = vld.sshfl [vmem:[#allocation1 + $0x8] sm:$0xff pattern:$0x73625140]
        %883 = vrot.lane.b32.xlu0 %v879, 119
        %v884 = vpop.permute.xlu0 %883
        %885 = vrot.lane.b32.xlu0 %v881, 119
        %v886 = vpop.permute.xlu0 %885
        %v887 = vsel %vm619, %v884, %v886
        %v889 = vsel %vm449, %v876, 0
        %v892 = vsel %vm453, %v887, 0
        %894 = vmatpush.bf16.msra.mxu0 0
        %895 = vmatpush.bf16.msra.mxu0 0
        %896 = vmatpush.bf16.msra.mxu0 0
        %897 = vmatpush.bf16.msra.mxu0 0
        %898 = vmatpush.bf16.msra.mxu0 0
        %899 = vmatpush.bf16.msra.mxu0 0
        %900 = vmatpush.bf16.msra.mxu0 0
        %901 = vmatpush.bf16.msra.mxu0 %v892
        %902 = vmatmul.bf16.gmra.mxu0 %v889
        %v903 = vpop.f32.mrf.mxu0
        %v904 = vadd.f32 0.0, %v903
        %v905 = vpop.f32.mrf.mxu0
        %906 = vdwg.mxu0
        %v907 = vadd.f32 %v873, %v904
        %v908 = vld [vmem:[%s734] sm:$0xf]
        %s909 = scalar_lea.vmem %s2, 64
        %v910 = vld [vmem:[%s909] sm:$0xf]
        %912 = vst [vmem:[#allocation1] ss:$4 sm:$0xff] %v908
        %v913 = vld.sshfl [vmem:[#allocation1] sm:$0xff pattern:$0x73625140]
        %v915 = vld.sshfl [vmem:[#allocation1 + $0x8] sm:$0xff pattern:$0x73625140]
        %917 = vrot.lane.b32.xlu0 %v913, 119
        %v918 = vpop.permute.xlu0 %917
        %919 = vrot.lane.b32.xlu0 %v915, 119
        %v920 = vpop.permute.xlu0 %919
        %v921 = vsel %vm619, %v918, %v920
        %v923 = vsel %vm449, %v910, 0
        %v926 = vsel %vm453, %v921, 0
        %928 = vmatpush.bf16.msra.mxu0 0
        %929 = vmatpush.bf16.msra.mxu0 0
        %930 = vmatpush.bf16.msra.mxu0 0
        %931 = vmatpush.bf16.msra.mxu0 0
        %932 = vmatpush.bf16.msra.mxu0 0
        %933 = vmatpush.bf16.msra.mxu0 0
        %934 = vmatpush.bf16.msra.mxu0 0
        %935 = vmatpush.bf16.msra.mxu0 %v926
        %936 = vmatmul.bf16.gmra.mxu0 %v923
        %v937 = vpop.f32.mrf.mxu0
        %v938 = vadd.f32 0.0, %v937
        %v939 = vpop.f32.mrf.mxu0
        %940 = vdwg.mxu0
        %v941 = vadd.f32 %v907, %v938
        %v942 = vld [vmem:[%s710] sm:$0xf]
        %s943 = scalar_lea.vmem %s2, 68
        %v944 = vld [vmem:[%s943] sm:$0xf]
        %946 = vst [vmem:[#allocation1] ss:$4 sm:$0xff] %v942
        %v947 = vld.sshfl [vmem:[#allocation1] sm:$0xff pattern:$0x73625140]
        %v949 = vld.sshfl [vmem:[#allocation1 + $0x8] sm:$0xff pattern:$0x73625140]
        %951 = vrot.lane.b32.xlu0 %v947, 118
        %v952 = vpop.permute.xlu0 %951
        %953 = vrot.lane.b32.xlu0 %v949, 118
        %v954 = vpop.permute.xlu0 %953
        %v955 = vsel %vm688, %v952, %v954
        %v957 = vsel %vm449, %v944, 0
        %v960 = vsel %vm453, %v955, 0
        %962 = vmatpush.bf16.msra.mxu0 0
        %963 = vmatpush.bf16.msra.mxu0 0
        %964 = vmatpush.bf16.msra.mxu0 0
        %965 = vmatpush.bf16.msra.mxu0 0
        %966 = vmatpush.bf16.msra.mxu0 0
        %967 = vmatpush.bf16.msra.mxu0 0
        %968 = vmatpush.bf16.msra.mxu0 0
        %969 = vmatpush.bf16.msra.mxu0 %v960
        %970 = vmatmul.bf16.gmra.mxu0 %v957
        %v971 = vpop.f32.mrf.mxu0
        %v972 = vadd.f32 0.0, %v971
        %v973 = vpop.f32.mrf.mxu0
        %974 = vdwg.mxu0
        %v975 = vadd.f32 %v941, %v972
        %v976 = vld [vmem:[%s385] sm:$0x3]
        %s977 = scalar_lea.vmem %s2, 72
        %v978 = vld [vmem:[%s977] sm:$0xf]
        %v980 = vsel %vm449, %v978, 0
        %v983 = vsel %vm453, %v976, 0
        %985 = vmatpush.bf16.msra.mxu0 0
        %986 = vmatpush.bf16.msra.mxu0 0
        %987 = vmatpush.bf16.msra.mxu0 0
        %988 = vmatpush.bf16.msra.mxu0 0
        %989 = vmatpush.bf16.msra.mxu0 0
        %990 = vmatpush.bf16.msra.mxu0 0
        %991 = vmatpush.bf16.msra.mxu0 0
        %992 = vmatpush.bf16.msra.mxu0 %v983
        %993 = vmatmul.bf16.gmra.mxu0 %v980
        %v994 = vpop.f32.mrf.mxu0
        %v995 = vadd.f32 0.0, %v994
        %v996 = vpop.f32.mrf.mxu0
        %997 = vdwg.mxu0
        %v998 = vadd.f32 %v975, %v995
        %s999 = scalar_lea.vmem %s385, 4 [#allocation3]
        %v1000 = vld [vmem:[%s999] sm:$0x3]
        %s1001 = scalar_lea.vmem %s2, 76
        %v1002 = vld [vmem:[%s1001] sm:$0xf]
        %v1004 = vsel %vm449, %v1002, 0
        %v1007 = vsel %vm453, %v1000, 0
        %1009 = vmatpush.bf16.msra.mxu0 0
        %1010 = vmatpush.bf16.msra.mxu0 0
        %1011 = vmatpush.bf16.msra.mxu0 0
        %1012 = vmatpush.bf16.msra.mxu0 0
        %1013 = vmatpush.bf16.msra.mxu0 0
        %1014 = vmatpush.bf16.msra.mxu0 0
        %1015 = vmatpush.bf16.msra.mxu0 0
        %1016 = vmatpush.bf16.msra.mxu0 %v1007
        %1017 = vmatmul.bf16.gmra.mxu0 %v1004
        %v1018 = vpop.f32.mrf.mxu0
        %v1019 = vadd.f32 0.0, %v1018
        %v1020 = vpop.f32.mrf.mxu0
        %1021 = vdwg.mxu0
        %v1022 = vadd.f32 %v998, %v1019
        %v1023 = vld [vmem:[%s385] sm:$0xf]
        %s1024 = scalar_lea.vmem %s2, 80
        %v1025 = vld [vmem:[%s1024] sm:$0xf]
        %1027 = vst [vmem:[#allocation1] ss:$4 sm:$0xff] %v1023
        %v1028 = vld.sshfl [vmem:[#allocation1] sm:$0xff pattern:$0x73625140]
        %v1030 = vld.sshfl [vmem:[#allocation1 + $0x8] sm:$0xff pattern:$0x73625140]
        %1032 = vrot.lane.b32.xlu0 %v1028, 127
        %v1033 = vpop.permute.xlu0 %1032
        %1034 = vrot.lane.b32.xlu0 %v1030, 127
        %v1035 = vpop.permute.xlu0 %1034
        %v1036 = vsel %vm502, %v1033, %v1035
        %v1038 = vsel %vm449, %v1025, 0
        %v1041 = vsel %vm453, %v1036, 0
        %1043 = vmatpush.bf16.msra.mxu0 0
        %1044 = vmatpush.bf16.msra.mxu0 0
        %1045 = vmatpush.bf16.msra.mxu0 0
        %1046 = vmatpush.bf16.msra.mxu0 0
        %1047 = vmatpush.bf16.msra.mxu0 0
        %1048 = vmatpush.bf16.msra.mxu0 0
        %1049 = vmatpush.bf16.msra.mxu0 0
        %1050 = vmatpush.bf16.msra.mxu0 %v1041
        %1051 = vmatmul.bf16.gmra.mxu0 %v1038
        %v1052 = vpop.f32.mrf.mxu0
        %v1053 = vadd.f32 0.0, %v1052
        %v1054 = vpop.f32.mrf.mxu0
        %1055 = vdwg.mxu0
        %v1056 = vadd.f32 %v1022, %v1053
        %s1057 = scalar_lea.vmem %s385, 8 [#allocation3]
        %v1058 = vld [vmem:[%s1057] sm:$0x3]
        %s1059 = scalar_lea.vmem %s2, 84
        %v1060 = vld [vmem:[%s1059] sm:$0xf]
        %v1062 = vsel %vm449, %v1060, 0
        %v1065 = vsel %vm453, %v1058, 0
        %1067 = vmatpush.bf16.msra.mxu0 0
        %1068 = vmatpush.bf16.msra.mxu0 0
        %1069 = vmatpush.bf16.msra.mxu0 0
        %1070 = vmatpush.bf16.msra.mxu0 0
        %1071 = vmatpush.bf16.msra.mxu0 0
        %1072 = vmatpush.bf16.msra.mxu0 0
        %1073 = vmatpush.bf16.msra.mxu0 0
        %1074 = vmatpush.bf16.msra.mxu0 %v1065
        %1075 = vmatmul.bf16.gmra.mxu0 %v1062
        %v1076 = vpop.f32.mrf.mxu0
        %v1077 = vadd.f32 0.0, %v1076
        %v1078 = vpop.f32.mrf.mxu0
        %1079 = vdwg.mxu0
        %v1080 = vadd.f32 %v1056, %v1077
        %s1081 = scalar_lea.vmem %s385, 12 [#allocation3]
        %v1082 = vld [vmem:[%s1081] sm:$0x3]
        %s1083 = scalar_lea.vmem %s2, 88
        %v1084 = vld [vmem:[%s1083] sm:$0xf]
        %v1086 = vsel %vm449, %v1084, 0
        %v1089 = vsel %vm453, %v1082, 0
        %1091 = vmatpush.bf16.msra.mxu0 0
        %1092 = vmatpush.bf16.msra.mxu0 0
        %1093 = vmatpush.bf16.msra.mxu0 0
        %1094 = vmatpush.bf16.msra.mxu0 0
        %1095 = vmatpush.bf16.msra.mxu0 0
        %1096 = vmatpush.bf16.msra.mxu0 0
        %1097 = vmatpush.bf16.msra.mxu0 0
        %1098 = vmatpush.bf16.msra.mxu0 %v1089
        %1099 = vmatmul.bf16.gmra.mxu0 %v1086
        %v1100 = vpop.f32.mrf.mxu0
        %v1101 = vadd.f32 0.0, %v1100
        %v1102 = vpop.f32.mrf.mxu0
        %1103 = vdwg.mxu0
        %v1104 = vadd.f32 %v1080, %v1101
        %v1105 = vld [vmem:[%s1057] sm:$0xf]
        %s1106 = scalar_lea.vmem %s2, 92
        %v1107 = vld [vmem:[%s1106] sm:$0xf]
        %1109 = vst [vmem:[#allocation1] ss:$4 sm:$0xff] %v1105
        %v1110 = vld.sshfl [vmem:[#allocation1] sm:$0xff pattern:$0x73625140]
        %v1112 = vld.sshfl [vmem:[#allocation1 + $0x8] sm:$0xff pattern:$0x73625140]
        %1114 = vrot.lane.b32.xlu0 %v1110, 127
        %v1115 = vpop.permute.xlu0 %1114
        %1116 = vrot.lane.b32.xlu0 %v1112, 127
        %v1117 = vpop.permute.xlu0 %1116
        %v1118 = vsel %vm502, %v1115, %v1117
        %v1120 = vsel %vm449, %v1107, 0
        %v1123 = vsel %vm453, %v1118, 0
        %1125 = vmatpush.bf16.msra.mxu0 0
        %1126 = vmatpush.bf16.msra.mxu0 0
        %1127 = vmatpush.bf16.msra.mxu0 0
        %1128 = vmatpush.bf16.msra.mxu0 0
        %1129 = vmatpush.bf16.msra.mxu0 0
        %1130 = vmatpush.bf16.msra.mxu0 0
        %1131 = vmatpush.bf16.msra.mxu0 0
        %1132 = vmatpush.bf16.msra.mxu0 %v1123
        %1133 = vmatmul.bf16.gmra.mxu0 %v1120
        %v1134 = vpop.f32.mrf.mxu0
        %v1135 = vadd.f32 0.0, %v1134
        %v1136 = vpop.f32.mrf.mxu0
        %1137 = vdwg.mxu0
        %v1138 = vadd.f32 %v1104, %v1135
        %v1139 = vld [vmem:[%s385] sm:$0xf]
        %s1140 = scalar_lea.vmem %s2, 96
        %v1141 = vld [vmem:[%s1140] sm:$0xf]
        %1143 = vst [vmem:[#allocation1] ss:$4 sm:$0xff] %v1139
        %v1144 = vld.sshfl [vmem:[#allocation1] sm:$0xff pattern:$0x73625140]
        %v1146 = vld.sshfl [vmem:[#allocation1 + $0x8] sm:$0xff pattern:$0x73625140]
        %1148 = vrot.lane.b32.xlu0 %v1144, 119
        %v1149 = vpop.permute.xlu0 %1148
        %1150 = vrot.lane.b32.xlu0 %v1146, 119
        %v1151 = vpop.permute.xlu0 %1150
        %v1152 = vsel %vm619, %v1149, %v1151
        %v1154 = vsel %vm449, %v1141, 0
        %v1157 = vsel %vm453, %v1152, 0
        %1159 = vmatpush.bf16.msra.mxu0 0
        %1160 = vmatpush.bf16.msra.mxu0 0
        %1161 = vmatpush.bf16.msra.mxu0 0
        %1162 = vmatpush.bf16.msra.mxu0 0
        %1163 = vmatpush.bf16.msra.mxu0 0
        %1164 = vmatpush.bf16.msra.mxu0 0
        %1165 = vmatpush.bf16.msra.mxu0 0
        %1166 = vmatpush.bf16.msra.mxu0 %v1157
        %1167 = vmatmul.bf16.gmra.mxu0 %v1154
        %v1168 = vpop.f32.mrf.mxu0
        %v1169 = vadd.f32 0.0, %v1168
        %v1170 = vpop.f32.mrf.mxu0
        %1171 = vdwg.mxu0
        %v1172 = vadd.f32 %v1138, %v1169
        %v1173 = vld [vmem:[%s999] sm:$0xf]
        %s1174 = scalar_lea.vmem %s2, 100
        %v1175 = vld [vmem:[%s1174] sm:$0xf]
        %1177 = vst [vmem:[#allocation1] ss:$4 sm:$0xff] %v1173
        %v1178 = vld.sshfl [vmem:[#allocation1] sm:$0xff pattern:$0x73625140]
        %v1180 = vld.sshfl [vmem:[#allocation1 + $0x8] sm:$0xff pattern:$0x73625140]
        %1182 = vrot.lane.b32.xlu0 %v1178, 119
        %v1183 = vpop.permute.xlu0 %1182
        %1184 = vrot.lane.b32.xlu0 %v1180, 119
        %v1185 = vpop.permute.xlu0 %1184
        %v1186 = vsel %vm619, %v1183, %v1185
        %v1188 = vsel %vm449, %v1175, 0
        %v1191 = vsel %vm453, %v1186, 0
        %1193 = vmatpush.bf16.msra.mxu0 0
        %1194 = vmatpush.bf16.msra.mxu0 0
        %1195 = vmatpush.bf16.msra.mxu0 0
        %1196 = vmatpush.bf16.msra.mxu0 0
        %1197 = vmatpush.bf16.msra.mxu0 0
        %1198 = vmatpush.bf16.msra.mxu0 0
        %1199 = vmatpush.bf16.msra.mxu0 0
        %1200 = vmatpush.bf16.msra.mxu0 %v1191
        %1201 = vmatmul.bf16.gmra.mxu0 %v1188
        %v1202 = vpop.f32.mrf.mxu0
        %v1203 = vadd.f32 0.0, %v1202
        %v1204 = vpop.f32.mrf.mxu0
        %1205 = vdwg.mxu0
        %v1206 = vadd.f32 %v1172, %v1203
        %v1207 = vld [vmem:[%s385] sm:$0xf]
        %s1208 = scalar_lea.vmem %s2, 104
        %v1209 = vld [vmem:[%s1208] sm:$0xf]
        %1211 = vst [vmem:[#allocation1] ss:$4 sm:$0xff] %v1207
        %v1212 = vld.sshfl [vmem:[#allocation1] sm:$0xff pattern:$0x73625140]
        %v1214 = vld.sshfl [vmem:[#allocation1 + $0x8] sm:$0xff pattern:$0x73625140]
        %1216 = vrot.lane.b32.xlu0 %v1212, 118
        %v1217 = vpop.permute.xlu0 %1216
        %1218 = vrot.lane.b32.xlu0 %v1214, 118
        %v1219 = vpop.permute.xlu0 %1218
        %v1220 = vsel %vm688, %v1217, %v1219
        %v1222 = vsel %vm449, %v1209, 0
        %v1225 = vsel %vm453, %v1220, 0
        %1227 = vmatpush.bf16.msra.mxu0 0
        %1228 = vmatpush.bf16.msra.mxu0 0
        %1229 = vmatpush.bf16.msra.mxu0 0
        %1230 = vmatpush.bf16.msra.mxu0 0
        %1231 = vmatpush.bf16.msra.mxu0 0
        %1232 = vmatpush.bf16.msra.mxu0 0
        %1233 = vmatpush.bf16.msra.mxu0 0
        %1234 = vmatpush.bf16.msra.mxu0 %v1225
        %1235 = vmatmul.bf16.gmra.mxu0 %v1222
        %v1236 = vpop.f32.mrf.mxu0
        %v1237 = vadd.f32 0.0, %v1236
        %v1238 = vpop.f32.mrf.mxu0
        %1239 = vdwg.mxu0
        %v1240 = vadd.f32 %v1206, %v1237
        %1241 = vst [vmem:[%s433] sm:$0xff] %v1240
        %v1242 = vld [vmem:[%s3] sm:$0x1]
        %v1244 = vperm.slane %v1242, 0
        %v1246 = vmul.f32 %v1240, %v1244
        %1247 = vadd.xlane.f32.xlu0 %v1246
        %v1248 = vpop.xlane.xlu0 %1247
        %vm1249 = vcmask 7168
        %1250 = vst.msk [vmem:[%s441] sm:$0xff] %vm1249, %v1248
        %v1251 = vmul.f32 %v1246, %v1246
        %1252 = vadd.xlane.f32.xlu0 %v1251
        %v1253 = vpop.xlane.xlu0 %1252
        %vm1254 = vcmask 15368
        %1255 = vst.msk [vmem:[%s441] sm:$0xff] %vm1254, %v1253
        %p1256 = scmp.lt.s32.totalorder %s21, 1
        %s1257 = scalar_select %p1256, %s21, 1
        %p1258 = scmp.lt.s32.totalorder %s22, 7
        %s1259 = scalar_select %p1258, %s22, 7
        %s1260 = smul.addr %s1257, 8
        %s1261 = sadd.s32 %s1259, %s1260
        %s1262 = smul.addr %s1261, 8
        %s1263 = scalar_lea.vmem %s4, %s1262
        %p1264 = scmp.lt.s32.totalorder %s21, 1
        %s1265 = scalar_select %p1264, %s21, 1
        %p1266 = scmp.lt.s32.totalorder %s22, 7
        %s1267 = scalar_select %p1266, %s22, 7
        %s1268 = smul.addr %s1265, 8
        %s1269 = sadd.s32 %s1267, %s1268
        %s1270 = smul.addr %s1269, 8
        %s1271 = scalar_lea.vmem %s5, %s1270
        // Predicated region
        $region119: #{_lambda_.4} parent=109 // pred_check
          %p1272 = pneg %p149
        $region120: #{_lambda_.4} parent=109 // pred_check_branch
          %1274 = sbr.rel (%p1272) target = $region122
        $region121: #{_lambda_.4} parent=109 // pred_region
          _
        $region122: #{_lambda_.4} parent=109 // pred_fallthru
          _
        // Predicated region
        $region123: #{_lambda_.4} parent=109 // pred_check
          %p1275 = pneg %p177
        $region124: #{_lambda_.4} parent=109 // pred_check_branch
          %1277 = sbr.rel (%p1275) target = $region126
        $region125: #{_lambda_.4} parent=109 // pred_region
          _
        $region126: #{_lambda_.4} parent=109 // pred_fallthru
          _
      $region110: #{_lambda_.4} parent=5 // pred_fallthru
        _
      %p1278 = scmp.le.s32.totalorder 2, %s12
      // Predicated region
      $region127: #{_lambda_.4} parent=5 // pred_check
        %p1279 = pneg %p1278
      $region128: #{_lambda_.4} parent=5 // pred_check_branch
        %1281 = sbr.rel (%p1279) target = $region130
      $region129: #{_lambda_.4} parent=5 // pred_region
        %s1282 = ssub.s32 %s12, 2
        // Predicated region
        $region131: #{_lambda_.4} parent=129 // pred_check
          %p1283 = pneg %p155
        $region132: #{_lambda_.4} parent=129 // pred_check_branch
          %1285 = sbr.rel (%p1283) target = $region134
        $region133: #{_lambda_.4} parent=129 // pred_region
          %p1286 = scmp.lt.s32.totalorder %s23, 1
          %s1287 = scalar_select %p1286, %s23, 1
          %p1288 = scmp.lt.s32.totalorder %s24, 7
          %s1289 = scalar_select %p1288, %s24, 7
          %s1290 = smul.addr %s1287, 8
          %s1291 = sadd.s32 %s1289, %s1290
          %s1292 = smul.addr %s1291, 8
          %s1293 = scalar_lea.vmem %s4, %s1292
        $region134: #{_lambda_.4} parent=129 // pred_fallthru
          _
        // Predicated region
        $region135: #{_lambda_.4} parent=129 // pred_check
          %p1294 = pneg %p183
        $region136: #{_lambda_.4} parent=129 // pred_check_branch
          %1296 = sbr.rel (%p1294) target = $region138
        $region137: #{_lambda_.4} parent=129 // pred_region
          %p1297 = scmp.lt.s32.totalorder %s23, 1
          %s1298 = scalar_select %p1297, %s23, 1
          %p1299 = scmp.lt.s32.totalorder %s24, 7
          %s1300 = scalar_select %p1299, %s24, 7
          %s1301 = smul.addr %s1298, 8
          %s1302 = sadd.s32 %s1300, %s1301
          %s1303 = smul.addr %s1302, 8
          %s1304 = scalar_lea.vmem %s5, %s1303
        $region138: #{_lambda_.4} parent=129 // pred_fallthru
          _
      $region130: #{_lambda_.4} parent=5 // pred_fallthru
        _
    $region6: #{_lambda_.4} parent=1 // loop_footer
      %s16 = sadd.s32 1, %s12
    $region7: #{_lambda_.4} parent=1 // loop_footer_branch
      %11 = sbr.rel target = $region3
    $region8: #{_lambda_.4} parent=1 // loop_exit
      _

// kernel: _lambda_.6
$region0: #{_lambda_.6}
  #allocation0 [shape = 'u32[]', space=smem, size = 0x4, offset = 0x4, fixed_abs, tag = 'smem constant byte address 0x4 - core index']
  #allocation1 [shape = 'u32[72,128]{1,0:T(1,128)}', space=vmem, size = 0x9000, scoped, tag = 'internal scratch']
  %s0 = inlined_call_operand.vmem [shape: bf16[2,8,5,8,256], index: 0, kind: input, shape index: {}, may-alias: {0,1}]
  %s1 = inlined_call_operand.vmem [shape: bf16[2,8,5,8,256], index: 1, kind: input, shape index: {}, may-alias: {0,1}]
  %s2 = inlined_call_operand.vmem [shape: bf16[27,16,8], index: 2, kind: input, shape index: {}]
  %s3 = inlined_call_operand.vmem [shape: f32[1,128], index: 3, kind: input, shape index: {}]
  %s4 = inlined_call_operand.vmem [shape: f32[2,4,16,128], index: 4, kind: output, shape index: {0}]
  %s5 = inlined_call_operand.vmem [shape: f32[2,4,16,2], index: 5, kind: output, shape index: {1}]
  %6 = xla_tuple %s4, %s5
  %s7 = sld [smem:[#allocation0]]
  $region133: #{_lambda_.6} parent=0
    _
  %s9 = ssub.s32 1, %s7
  %s10 = scalar_select 0, %s9, %s7
  $region1: #{_lambda_.6} parent=0
    #allocation2 [shape = 'u8[65536]{0}', space=vmem, size = 0x10000, scoped, tag = 'input window, operand 0']
    #allocation3 [shape = 'u8[65536]{0}', space=vmem, size = 0x10000, scoped, tag = 'input window, operand 1']
    loop: start=0, step=1, limit=10
    $region2: #{_lambda_.6} parent=1 // loop_pre_header
      _
    $region3: #{_lambda_.6} parent=1 // loop_header
      %s12 = sphi 0, %s16
      %p13 = scmp.ge.s32.totalorder %s12, 10
      %s19 = sphi 0, %s31
      %s20 = sphi 0, %s27
      %s21 = sphi 0, %s19
      %s22 = sphi 0, %s20
      %s23 = sphi 0, %s21
      %s24 = sphi 0, %s22
      %s36 = sphi 0, %s38
      %s39 = sphi 0, %s36
      %s40 = sphi 0, %s39
      %s56 = sphi 0, %s40
      %s66 = sphi 0, %s68
      %s69 = sphi 0, %s66
      %s70 = sphi 0, %s69
      %s86 = sphi 0, %s70
      %s90 = sphi 0, %s90
      %s92 = sphi 0, %s90
      %s93 = sphi 0, %s92
      %s107 = sphi 0, %s93
      %s111 = sphi 0, %s111
      %s113 = sphi 0, %s111
      %s114 = sphi 0, %s113
      %s128 = sphi 0, %s114
      %s136 = sphi 0, %s138
      %s139 = sphi 0, %s136
      %s140 = sphi 0, %s139
      %s156 = sphi 0, %s140
      %s164 = sphi 0, %s166
      %s167 = sphi 0, %s164
      %s168 = sphi 0, %s167
      %s184 = sphi 0, %s168
    $region4: #{_lambda_.6} parent=1 // loop_header_branch
      %15 = sbr.rel (%p13) target = $region8
    $region5: #{_lambda_.6} parent=1 // loop_body
      %s17 = ssub.s32 %s12, 1
      %s18 = ssub.s32 %s12, 2
      %s25 = sadd.s32 1, %s20
      %p26 = scmp.ge.s32.totalorder %s25, 4
      %s27 = scalar_select %p26, 0, %s25
      %s28 = sadd.s32 1, %s19
      %s29 = scalar_select %p26, %s28, %s19
      %p30 = scmp.ge.s32.totalorder %s29, 2
      %s31 = scalar_select %p30, 0, %s29
      %s32 = ssub.s32 %s19, %s31
      %s33 = ssub.s32 %s20, %s27
      %s34 = sor.u32 %s32, %s33
      %p35 = scmp.eq.s32.totalorder %s34, 0
      %s37 = sadd.s32 %s36, 1
      %s38 = scalar_select %p35, %s36, %s37
      %p41 = pneg %p35
      %p42 = scmp.eq.s32.totalorder %s12, 7
      %p43 = por %p41, %p42
      %p44 = scmp.ne.s32.totalorder %s36, %s39
      %p45 = scmp.eq.s32.totalorder %s12, 0
      %p46 = por %p44, %p45
      %p47 = scmp.ne.s32.totalorder %s36, %s39
      %p48 = scmp.eq.s32.totalorder %s17, 7
      %p49 = por %p47, %p48
      %p50 = scmp.ne.s32.totalorder %s39, %s40
      %p51 = scmp.eq.s32.totalorder %s17, 0
      %p52 = por %p50, %p51
      %p53 = scmp.ne.s32.totalorder %s39, %s40
      %p54 = scmp.eq.s32.totalorder %s18, 7
      %p55 = por %p53, %p54
      %p57 = scmp.ne.s32.totalorder %s40, %s56
      %p58 = scmp.eq.s32.totalorder %s18, 0
      %p59 = por %p57, %p58
      %s60 = sadd.s32 %s20, 1
      %s61 = sadd.s32 %s27, 1
      %s62 = ssub.s32 %s19, %s31
      %s63 = ssub.s32 %s60, %s61
      %s64 = sor.u32 %s62, %s63
      %p65 = scmp.eq.s32.totalorder %s64, 0
      %s67 = sadd.s32 %s66, 1
      %s68 = scalar_select %p65, %s66, %s67
      %p71 = pneg %p65
      %p72 = scmp.eq.s32.totalorder %s12, 7
      %p73 = por %p71, %p72
      %p74 = scmp.ne.s32.totalorder %s66, %s69
      %p75 = scmp.eq.s32.totalorder %s12, 0
      %p76 = por %p74, %p75
      %p77 = scmp.ne.s32.totalorder %s66, %s69
      %p78 = scmp.eq.s32.totalorder %s17, 7
      %p79 = por %p77, %p78
      %p80 = scmp.ne.s32.totalorder %s69, %s70
      %p81 = scmp.eq.s32.totalorder %s17, 0
      %p82 = por %p80, %p81
      %p83 = scmp.ne.s32.totalorder %s69, %s70
      %p84 = scmp.eq.s32.totalorder %s18, 7
      %p85 = por %p83, %p84
      %p87 = scmp.ne.s32.totalorder %s70, %s86
      %p88 = scmp.eq.s32.totalorder %s18, 0
      %p89 = por %p87, %p88
      %s91 = sadd.s32 %s90, 1
      %p94 = scmp.eq.s32.totalorder %s12, 7
      %p95 = scmp.ne.s32.totalorder %s90, %s92
      %p96 = scmp.eq.s32.totalorder %s12, 0
      %p97 = por %p95, %p96
      %p98 = scmp.ne.s32.totalorder %s90, %s92
      %p99 = scmp.eq.s32.totalorder %s17, 7
      %p100 = por %p98, %p99
      %p101 = scmp.ne.s32.totalorder %s92, %s93
      %p102 = scmp.eq.s32.totalorder %s17, 0
      %p103 = por %p101, %p102
      %p104 = scmp.ne.s32.totalorder %s92, %s93
      %p105 = scmp.eq.s32.totalorder %s18, 7
      %p106 = por %p104, %p105
      %p108 = scmp.ne.s32.totalorder %s93, %s107
      %p109 = scmp.eq.s32.totalorder %s18, 0
      %p110 = por %p108, %p109
      %s112 = sadd.s32 %s111, 1
      %p115 = scmp.eq.s32.totalorder %s12, 7
      %p116 = scmp.ne.s32.totalorder %s111, %s113
      %p117 = scmp.eq.s32.totalorder %s12, 0
      %p118 = por %p116, %p117
      %p119 = scmp.ne.s32.totalorder %s111, %s113
      %p120 = scmp.eq.s32.totalorder %s17, 7
      %p121 = por %p119, %p120
      %p122 = scmp.ne.s32.totalorder %s113, %s114
      %p123 = scmp.eq.s32.totalorder %s17, 0
      %p124 = por %p122, %p123
      %p125 = scmp.ne.s32.totalorder %s113, %s114
      %p126 = scmp.eq.s32.totalorder %s18, 7
      %p127 = por %p125, %p126
      %p129 = scmp.ne.s32.totalorder %s114, %s128
      %p130 = scmp.eq.s32.totalorder %s18, 0
      %p131 = por %p129, %p130
      %s132 = ssub.s32 %s19, %s31
      %s133 = ssub.s32 %s20, %s27
      %s134 = sor.u32 %s132, %s133
      %p135 = scmp.eq.s32.totalorder %s134, 0
      %s137 = sadd.s32 %s136, 1
      %s138 = scalar_select %p135, %s136, %s137
      %p141 = pneg %p135
      %p142 = scmp.eq.s32.totalorder %s12, 7
      %p143 = por %p141, %p142
      %p144 = scmp.ne.s32.totalorder %s136, %s139
      %p145 = scmp.eq.s32.totalorder %s12, 0
      %p146 = por %p144, %p145
      %p147 = scmp.ne.s32.totalorder %s136, %s139
      %p148 = scmp.eq.s32.totalorder %s17, 7
      %p149 = por %p147, %p148
      %p150 = scmp.ne.s32.totalorder %s139, %s140
      %p151 = scmp.eq.s32.totalorder %s17, 0
      %p152 = por %p150, %p151
      %p153 = scmp.ne.s32.totalorder %s139, %s140
      %p154 = scmp.eq.s32.totalorder %s18, 7
      %p155 = por %p153, %p154
      %p157 = scmp.ne.s32.totalorder %s140, %s156
      %p158 = scmp.eq.s32.totalorder %s18, 0
      %p159 = por %p157, %p158
      %s160 = ssub.s32 %s19, %s31
      %s161 = ssub.s32 %s20, %s27
      %s162 = sor.u32 %s160, %s161
      %p163 = scmp.eq.s32.totalorder %s162, 0
      %s165 = sadd.s32 %s164, 1
      %s166 = scalar_select %p163, %s164, %s165
      %p169 = pneg %p163
      %p170 = scmp.eq.s32.totalorder %s12, 7
      %p171 = por %p169, %p170
      %p172 = scmp.ne.s32.totalorder %s164, %s167
      %p173 = scmp.eq.s32.totalorder %s12, 0
      %p174 = por %p172, %p173
      %p175 = scmp.ne.s32.totalorder %s164, %s167
      %p176 = scmp.eq.s32.totalorder %s17, 7
      %p177 = por %p175, %p176
      %p178 = scmp.ne.s32.totalorder %s167, %s168
      %p179 = scmp.eq.s32.totalorder %s17, 0
      %p180 = por %p178, %p179
      %p181 = scmp.ne.s32.totalorder %s167, %s168
      %p182 = scmp.eq.s32.totalorder %s18, 7
      %p183 = por %p181, %p182
      %p185 = scmp.ne.s32.totalorder %s168, %s184
      %p186 = scmp.eq.s32.totalorder %s18, 0
      %p187 = por %p185, %p186
      %p188 = scmp.le.s32.totalorder 1, %s12
      %p189 = scmp.lt.s32.totalorder %s12, 9
      %p190 = pnand %p188, %p189
      %p191 = pneg %p190
      // Predicated region
      $region9: #{_lambda_.6} parent=5 // pred_check
        _
      $region10: #{_lambda_.6} parent=5 // pred_check_branch
        %193 = sbr.rel (%p190) target = $region12
      $region11: #{_lambda_.6} parent=5 // pred_region
        %s194 = ssub.s32 %s12, 1
        // Predicated region
        $region13: #{_lambda_.6} parent=11 // pred_check
          %p195 = pneg %p103
        $region14: #{_lambda_.6} parent=11 // pred_check_branch
          %197 = sbr.rel (%p195) target = $region16
        $region15: #{_lambda_.6} parent=11 // pred_region
          _
        $region16: #{_lambda_.6} parent=11 // pred_fallthru
          _
        // Predicated region
        $region17: #{_lambda_.6} parent=11 // pred_check
          %p198 = pneg %p124
        $region18: #{_lambda_.6} parent=11 // pred_check_branch
          %200 = sbr.rel (%p198) target = $region20
        $region19: #{_lambda_.6} parent=11 // pred_region
          _
        $region20: #{_lambda_.6} parent=11 // pred_fallthru
          _
      $region12: #{_lambda_.6} parent=5 // pred_fallthru
        _
      %p201 = scmp.lt.s32.totalorder %s12, 8
      // Predicated region
      $region21: #{_lambda_.6} parent=5 // pred_check
        %p202 = pneg %p201
      $region22: #{_lambda_.6} parent=5 // pred_check_branch
        %204 = sbr.rel (%p202) target = $region24
      $region23: #{_lambda_.6} parent=5 // pred_region
        // Predicated region
        $region25: #{_lambda_.6} parent=23 // pred_check
          %p205 = pneg %p46
        $region26: #{_lambda_.6} parent=23 // pred_check_branch
          %207 = sbr.rel (%p205) target = $region28
        $region27: #{_lambda_.6} parent=23 // pred_region
          %s208 = sand.u32 %s36, 1
          %s209 = sand.u32 %s36, 1
          %s210 = smul.addr %s209, 64
          %s211 = scalar_lea.vmem [#allocation2], %s210
          %s212 = smul.addr %s20, 2
          %s213 = smul.addr %s19, 80
          %s214 = sadd.s32 %s212, %s213
          %s215 = smul.addr %s214, 4
          %s216 = scalar_lea.vmem %s0, %s215
          // Predicated region
          $region29: #{_lambda_.6} parent=27 // pred_check
            _
          $region30: #{_lambda_.6} parent=27 // pred_check_branch
            %218 = sbr.rel (0) target = $region32
          $region31: #{_lambda_.6} parent=27 // pred_region
            // Predicated region
            $region33: #{_lambda_.6} parent=31 // pred_check
              _
            $region34: #{_lambda_.6} parent=31 // pred_check_branch
              %220 = sbr.rel (0) target = $region36
            $region35: #{_lambda_.6} parent=31 // pred_region
              // Predicated region
              $region48: #{_lambda_.6} parent=35 // pred_check
                _
              $region49: #{_lambda_.6} parent=35 // pred_check_branch
                %250 = sbr.rel (0) target = $region51
              $region50: #{_lambda_.6} parent=35 // pred_region
                loop: start=0, step=1, limit=1
                $region52: #{_lambda_.6} parent=50 // loop_pre_header
                  _
                $region53: #{_lambda_.6} parent=50 // loop_header
                  %s252 = sphi 0, %s256
                  %p253 = scmp.ge.s32.totalorder %s252, 1
                  %s257 = sphi %s216, %s216
                  %s258 = sphi %s211, %s211
                $region54: #{_lambda_.6} parent=50 // loop_header_branch
                  %255 = sbr.rel (%p253) target = $region58
                $region55: #{_lambda_.6} parent=50 // loop_body
                  %v259 = vld [vmem:[%s257] sm:$0xff]
                  %260 = vst [vmem:[%s258] sm:$0xff] %v259
                  %v261 = vld [vmem:[%s257 + $0x28] sm:$0xff]
                  %262 = vst [vmem:[%s258 + $0x8] sm:$0xff] %v261
                  %v263 = vld [vmem:[%s257 + $0x50] sm:$0xff]
                  %264 = vst [vmem:[%s258 + $0x10] sm:$0xff] %v263
                  %v265 = vld [vmem:[%s257 + $0x78] sm:$0xff]
                  %266 = vst [vmem:[%s258 + $0x18] sm:$0xff] %v265
                  %v267 = vld [vmem:[%s257 + $0xa0] sm:$0xff]
                  %268 = vst [vmem:[%s258 + $0x20] sm:$0xff] %v267
                  %v269 = vld [vmem:[%s257 + $0xc8] sm:$0xff]
                  %270 = vst [vmem:[%s258 + $0x28] sm:$0xff] %v269
                  %v271 = vld [vmem:[%s257 + $0xf0] sm:$0xff]
                  %272 = vst [vmem:[%s258 + $0x30] sm:$0xff] %v271
                  %v273 = vld [vmem:[%s257 + $0x118] sm:$0xff]
                  %274 = vst [vmem:[%s258 + $0x38] sm:$0xff] %v273
                $region56: #{_lambda_.6} parent=50 // loop_footer
                  %s256 = sadd.s32 1, %s252
                $region57: #{_lambda_.6} parent=50 // loop_footer_branch
                  %251 = sbr.rel target = $region53
                $region58: #{_lambda_.6} parent=50 // loop_exit
                  _
              $region51: #{_lambda_.6} parent=35 // pred_fallthru
                _
              // Predicated region
              $region59: #{_lambda_.6} parent=35 // pred_check
                _
              $region60: #{_lambda_.6} parent=35 // pred_check_branch
                %276 = sbr.rel target = $region62
              $region61: #{_lambda_.6} parent=35 // pred_region
                _
              $region62: #{_lambda_.6} parent=35 // pred_fallthru
                _
            $region36: #{_lambda_.6} parent=31 // pred_fallthru
              _
            // Predicated region
            $region37: #{_lambda_.6} parent=31 // pred_check
              _
            $region38: #{_lambda_.6} parent=31 // pred_check_branch
              %222 = sbr.rel target = $region40
            $region39: #{_lambda_.6} parent=31 // pred_region
              %s224 = ssub.s32 256, 1
              loop: start=0, step=1, limit=1
              $region41: #{_lambda_.6} parent=39 // loop_pre_header
                _
              $region42: #{_lambda_.6} parent=39 // loop_header
                %s226 = sphi 0, %s230
                %p227 = scmp.ge.s32.totalorder %s226, 1
                %s231 = sphi %s216, %s216
                %s232 = sphi %s211, %s211
              $region43: #{_lambda_.6} parent=39 // loop_header_branch
                %229 = sbr.rel (%p227) target = $region47
              $region44: #{_lambda_.6} parent=39 // loop_body
                %v233 = vld [vmem:[%s231] sm:%s224]
                %234 = vst [vmem:[%s232] sm:%s224] %v233
                %v235 = vld [vmem:[%s231 + $0x28] sm:%s224]
                %236 = vst [vmem:[%s232 + $0x8] sm:%s224] %v235
                %v237 = vld [vmem:[%s231 + $0x50] sm:%s224]
                %238 = vst [vmem:[%s232 + $0x10] sm:%s224] %v237
                %v239 = vld [vmem:[%s231 + $0x78] sm:%s224]
                %240 = vst [vmem:[%s232 + $0x18] sm:%s224] %v239
                %v241 = vld [vmem:[%s231 + $0xa0] sm:%s224]
                %242 = vst [vmem:[%s232 + $0x20] sm:%s224] %v241
                %v243 = vld [vmem:[%s231 + $0xc8] sm:%s224]
                %244 = vst [vmem:[%s232 + $0x28] sm:%s224] %v243
                %v245 = vld [vmem:[%s231 + $0xf0] sm:%s224]
                %246 = vst [vmem:[%s232 + $0x30] sm:%s224] %v245
                %v247 = vld [vmem:[%s231 + $0x118] sm:%s224]
                %248 = vst [vmem:[%s232 + $0x38] sm:%s224] %v247
              $region45: #{_lambda_.6} parent=39 // loop_footer
                %s230 = sadd.s32 1, %s226
              $region46: #{_lambda_.6} parent=39 // loop_footer_branch
                %225 = sbr.rel target = $region42
              $region47: #{_lambda_.6} parent=39 // loop_exit
                _
            $region40: #{_lambda_.6} parent=31 // pred_fallthru
              _
          $region32: #{_lambda_.6} parent=27 // pred_fallthru
            _
          %277 = vnop
        $region28: #{_lambda_.6} parent=23 // pred_fallthru
          _
        // Predicated region
        $region63: #{_lambda_.6} parent=23 // pred_check
          %p278 = pneg %p76
        $region64: #{_lambda_.6} parent=23 // pred_check_branch
          %280 = sbr.rel (%p278) target = $region66
        $region65: #{_lambda_.6} parent=23 // pred_region
          %s281 = sand.u32 %s66, 1
          %s282 = sand.u32 %s66, 1
          %s283 = smul.addr %s282, 64
          %s284 = scalar_lea.vmem [#allocation3], %s283
          %s285 = sadd.s32 %s20, 1
          %s286 = smul.addr %s285, 2
          %s287 = smul.addr %s19, 80
          %s288 = sadd.s32 %s286, %s287
          %s289 = smul.addr %s288, 4
          %s290 = scalar_lea.vmem %s1, %s289
          // Predicated region
          $region67: #{_lambda_.6} parent=65 // pred_check
            _
          $region68: #{_lambda_.6} parent=65 // pred_check_branch
            %292 = sbr.rel (0) target = $region70
          $region69: #{_lambda_.6} parent=65 // pred_region
            // Predicated region
            $region71: #{_lambda_.6} parent=69 // pred_check
              _
            $region72: #{_lambda_.6} parent=69 // pred_check_branch
              %294 = sbr.rel (0) target = $region74
            $region73: #{_lambda_.6} parent=69 // pred_region
              // Predicated region
              $region86: #{_lambda_.6} parent=73 // pred_check
                _
              $region87: #{_lambda_.6} parent=73 // pred_check_branch
                %324 = sbr.rel (0) target = $region89
              $region88: #{_lambda_.6} parent=73 // pred_region
                loop: start=0, step=1, limit=1
                $region90: #{_lambda_.6} parent=88 // loop_pre_header
                  _
                $region91: #{_lambda_.6} parent=88 // loop_header
                  %s326 = sphi 0, %s330
                  %p327 = scmp.ge.s32.totalorder %s326, 1
                  %s331 = sphi %s290, %s290
                  %s332 = sphi %s284, %s284
                $region92: #{_lambda_.6} parent=88 // loop_header_branch
                  %329 = sbr.rel (%p327) target = $region96
                $region93: #{_lambda_.6} parent=88 // loop_body
                  %v333 = vld [vmem:[%s331] sm:$0xff]
                  %334 = vst [vmem:[%s332] sm:$0xff] %v333
                  %v335 = vld [vmem:[%s331 + $0x28] sm:$0xff]
                  %336 = vst [vmem:[%s332 + $0x8] sm:$0xff] %v335
                  %v337 = vld [vmem:[%s331 + $0x50] sm:$0xff]
                  %338 = vst [vmem:[%s332 + $0x10] sm:$0xff] %v337
                  %v339 = vld [vmem:[%s331 + $0x78] sm:$0xff]
                  %340 = vst [vmem:[%s332 + $0x18] sm:$0xff] %v339
                  %v341 = vld [vmem:[%s331 + $0xa0] sm:$0xff]
                  %342 = vst [vmem:[%s332 + $0x20] sm:$0xff] %v341
                  %v343 = vld [vmem:[%s331 + $0xc8] sm:$0xff]
                  %344 = vst [vmem:[%s332 + $0x28] sm:$0xff] %v343
                  %v345 = vld [vmem:[%s331 + $0xf0] sm:$0xff]
                  %346 = vst [vmem:[%s332 + $0x30] sm:$0xff] %v345
                  %v347 = vld [vmem:[%s331 + $0x118] sm:$0xff]
                  %348 = vst [vmem:[%s332 + $0x38] sm:$0xff] %v347
                $region94: #{_lambda_.6} parent=88 // loop_footer
                  %s330 = sadd.s32 1, %s326
                $region95: #{_lambda_.6} parent=88 // loop_footer_branch
                  %325 = sbr.rel target = $region91
                $region96: #{_lambda_.6} parent=88 // loop_exit
                  _
              $region89: #{_lambda_.6} parent=73 // pred_fallthru
                _
              // Predicated region
              $region97: #{_lambda_.6} parent=73 // pred_check
                _
              $region98: #{_lambda_.6} parent=73 // pred_check_branch
                %350 = sbr.rel target = $region100
              $region99: #{_lambda_.6} parent=73 // pred_region
                _
              $region100: #{_lambda_.6} parent=73 // pred_fallthru
                _
            $region74: #{_lambda_.6} parent=69 // pred_fallthru
              _
            // Predicated region
            $region75: #{_lambda_.6} parent=69 // pred_check
              _
            $region76: #{_lambda_.6} parent=69 // pred_check_branch
              %296 = sbr.rel target = $region78
            $region77: #{_lambda_.6} parent=69 // pred_region
              %s298 = ssub.s32 256, 1
              loop: start=0, step=1, limit=1
              $region79: #{_lambda_.6} parent=77 // loop_pre_header
                _
              $region80: #{_lambda_.6} parent=77 // loop_header
                %s300 = sphi 0, %s304
                %p301 = scmp.ge.s32.totalorder %s300, 1
                %s305 = sphi %s290, %s290
                %s306 = sphi %s284, %s284
              $region81: #{_lambda_.6} parent=77 // loop_header_branch
                %303 = sbr.rel (%p301) target = $region85
              $region82: #{_lambda_.6} parent=77 // loop_body
                %v307 = vld [vmem:[%s305] sm:%s298]
                %308 = vst [vmem:[%s306] sm:%s298] %v307
                %v309 = vld [vmem:[%s305 + $0x28] sm:%s298]
                %310 = vst [vmem:[%s306 + $0x8] sm:%s298] %v309
                %v311 = vld [vmem:[%s305 + $0x50] sm:%s298]
                %312 = vst [vmem:[%s306 + $0x10] sm:%s298] %v311
                %v313 = vld [vmem:[%s305 + $0x78] sm:%s298]
                %314 = vst [vmem:[%s306 + $0x18] sm:%s298] %v313
                %v315 = vld [vmem:[%s305 + $0xa0] sm:%s298]
                %316 = vst [vmem:[%s306 + $0x20] sm:%s298] %v315
                %v317 = vld [vmem:[%s305 + $0xc8] sm:%s298]
                %318 = vst [vmem:[%s306 + $0x28] sm:%s298] %v317
                %v319 = vld [vmem:[%s305 + $0xf0] sm:%s298]
                %320 = vst [vmem:[%s306 + $0x30] sm:%s298] %v319
                %v321 = vld [vmem:[%s305 + $0x118] sm:%s298]
                %322 = vst [vmem:[%s306 + $0x38] sm:%s298] %v321
              $region83: #{_lambda_.6} parent=77 // loop_footer
                %s304 = sadd.s32 1, %s300
              $region84: #{_lambda_.6} parent=77 // loop_footer_branch
                %299 = sbr.rel target = $region80
              $region85: #{_lambda_.6} parent=77 // loop_exit
                _
            $region78: #{_lambda_.6} parent=69 // pred_fallthru
              _
          $region70: #{_lambda_.6} parent=65 // pred_fallthru
            _
          %351 = vnop
        $region66: #{_lambda_.6} parent=23 // pred_fallthru
          _
      $region24: #{_lambda_.6} parent=5 // pred_fallthru
        _
      %p352 = scmp.le.s32.totalorder 1, %s12
      %p353 = scmp.lt.s32.totalorder %s12, 9
      %p354 = pnand %p352, %p353
      %p355 = pneg %p354
      // Predicated region
      $region101: #{_lambda_.6} parent=5 // pred_check
        _
      $region102: #{_lambda_.6} parent=5 // pred_check_branch
        %357 = sbr.rel (%p354) target = $region104
      $region103: #{_lambda_.6} parent=5 // pred_region
        %s358 = ssub.s32 %s12, 1
        %s359 = sand.u32 %s39, 1
        %s360 = sand.u32 %s39, 1
        %s361 = smul.addr %s360, 64
        %s362 = scalar_lea.vmem [#allocation2], %s361
        // Predicated region
        $region105: #{_lambda_.6} parent=103 // pred_check
          %p363 = pneg %p52
        $region106: #{_lambda_.6} parent=103 // pred_check_branch
          %365 = sbr.rel (%p363) target = $region108
        $region107: #{_lambda_.6} parent=103 // pred_region
          _
        $region108: #{_lambda_.6} parent=103 // pred_fallthru
          _
        %s366 = sand.u32 %s69, 1
        %s367 = sand.u32 %s69, 1
        %s368 = smul.addr %s367, 64
        %s369 = scalar_lea.vmem [#allocation3], %s368
        // Predicated region
        $region109: #{_lambda_.6} parent=103 // pred_check
          %p370 = pneg %p82
        $region110: #{_lambda_.6} parent=103 // pred_check_branch
          %372 = sbr.rel (%p370) target = $region112
        $region111: #{_lambda_.6} parent=103 // pred_region
          _
        $region112: #{_lambda_.6} parent=103 // pred_fallthru
          _
        %s373 = sand.u32 %s39, 1
        %s374 = sand.u32 %s39, 1
        %s375 = smul.addr %s374, 64
        %s376 = scalar_lea.vmem [#allocation2], %s375
        %p377 = pneg %p52
        %p378 = pneg %p49
        %s379 = sand.u32 %s69, 1
        %s380 = sand.u32 %s69, 1
        %s381 = smul.addr %s380, 64
        %s382 = scalar_lea.vmem [#allocation3], %s381
        %p383 = pneg %p82
        %p384 = pneg %p79
        %p385 = pneg %p103
        %p386 = pneg %p100
        %p387 = pneg %p124
        %p388 = pneg %p121
        %p389 = pneg %p152
        %p390 = pneg %p149
        %p391 = scmp.lt.s32.totalorder %s21, 1
        %s392 = scalar_select %p391, %s21, 1
        %p393 = scmp.lt.s32.totalorder %s22, 3
        %s394 = scalar_select %p393, %s22, 3
        %s395 = smul.addr %s394, 2
        %s396 = smul.addr %s392, 8
        %s397 = sadd.s32 %s395, %s396
        %s398 = smul.addr %s397, 8
        %s399 = scalar_lea.vmem %s4, %s398
        %p400 = pneg %p180
        %p401 = pneg %p177
        %p402 = scmp.lt.s32.totalorder %s21, 1
        %s403 = scalar_select %p402, %s21, 1
        %p404 = scmp.lt.s32.totalorder %s22, 3
        %s405 = scalar_select %p404, %s22, 3
        %s406 = smul.addr %s405, 2
        %s407 = smul.addr %s403, 8
        %s408 = sadd.s32 %s406, %s407
        %s409 = smul.addr %s408, 8
        %s410 = scalar_lea.vmem %s5, %s409
        %s411 = sadd.s32 %s22, 1
        %p412 = scmp.lt.s32.totalorder %s21, 1
        %s413 = scalar_select %p412, %s21, 1
        %p414 = scmp.lt.s32.totalorder %s22, 3
        %s415 = scalar_select %p414, %s22, 3
        %s416 = smul.addr %s415, 2
        %s417 = smul.addr %s413, 8
        %s418 = sadd.s32 %s416, %s417
        %s419 = smul.addr %s418, 8
        %s420 = scalar_lea.vmem %s4, %s419
        %p421 = scmp.lt.s32.totalorder %s21, 1
        %s422 = scalar_select %p421, %s21, 1
        %p423 = scmp.lt.s32.totalorder %s22, 3
        %s424 = scalar_select %p423, %s22, 3
        %s425 = smul.addr %s424, 2
        %s426 = smul.addr %s422, 8
        %s427 = sadd.s32 %s425, %s426
        %s428 = smul.addr %s427, 8
        %s429 = scalar_lea.vmem %s5, %s428
        %v431 = vld [vmem:[%s362] sm:$0xf]
        %v432 = vld [vmem:[%s2] sm:$0xf]
        %v433 = vld [vmem:[%s2 + $0x4] sm:$0xf]
        %s434 = scalar_lea.vmem %s362, 8 [#allocation2]
        %v435 = vld [vmem:[%s434] sm:$0xf]
        %s436 = scalar_lea.vmem %s2, 8
        %v437 = vld [vmem:[%s436] sm:$0xf]
        %v438 = vld [vmem:[%s436 + $0x4] sm:$0xf]
        %v441 = vunpack.c.l.b16 %v437
        %v442 = vunpack.c.l.b16 %v438
        %v443 = vpack.c.b16 %v442, %v441
        %vm444 = vcmask 64512
        %v446 = vsel %vm444, %v443, 0
        %vm448 = vcmask 1043456
        %v450 = vsel %vm448, %v435, 0
        %452 = vmatpush.bf16.msra.mxu0 0
        %453 = vmatpush.bf16.msra.mxu0 0
        %454 = vmatpush.bf16.msra.mxu0 0
        %455 = vmatpush.bf16.msra.mxu0 0
        %456 = vmatpush.bf16.msra.mxu0 0
        %457 = vmatpush.bf16.msra.mxu0 0
        %458 = vmatpush.bf16.msra.mxu0 0
        %459 = vmatpush.bf16.msra.mxu0 %v450
        %460 = vmatmul.bf16.gmra.mxu0 %v446
        %v461 = vpop.f32.mrf.mxu0
        %v462 = vadd.f32 0.0, %v461
        %v463 = vpop.f32.mrf.mxu0
        %v464 = vadd.f32 0.0, %v463
        %465 = vdwg.mxu0
        %v468 = vunpack.c.l.b16 %v432
        %v469 = vunpack.c.l.b16 %v433
        %v470 = vpack.c.b16 %v469, %v468
        %v472 = vsel %vm444, %v470, 0
        %v475 = vsel %vm448, %v431, 0
        %477 = vmatpush.bf16.msra.mxu0 0
        %478 = vmatpush.bf16.msra.mxu0 0
        %479 = vmatpush.bf16.msra.mxu0 0
        %480 = vmatpush.bf16.msra.mxu0 0
        %481 = vmatpush.bf16.msra.mxu0 0
        %482 = vmatpush.bf16.msra.mxu0 0
        %483 = vmatpush.bf16.msra.mxu0 0
        %484 = vmatpush.bf16.msra.mxu0 %v475
        %485 = vmatmul.bf16.gmra.mxu0 %v472
        %v486 = vpop.f32.mrf.mxu0
        %v487 = vadd.f32 %v462, %v486
        %v488 = vpop.f32.mrf.mxu0
        %v489 = vadd.f32 %v464, %v488
        %490 = vdwg.mxu0
        %v491 = vld [vmem:[%s362] sm:$0xff]
        %s492 = scalar_lea.vmem %s2, 16
        %v493 = vld [vmem:[%s492] sm:$0xf]
        %v494 = vld [vmem:[%s492 + $0x4] sm:$0xf]
        %v497 = vunpack.c.l.b16 %v493
        %v498 = vunpack.c.l.b16 %v494
        %v499 = vpack.c.b16 %v498, %v497
        %v501 = vunpack.c.l.b16 %v491
        %v502 = vunpack.c.h.b16 %v491
        %v503 = vpack.c.b16 %v501, %v501
        %v504 = vpack.c.b16 %v502, %v502
        %505 = vrot.lane.b32.xlu0 %v503, 127
        %v506 = vpop.permute.xlu0 %505
        %507 = vrot.lane.b32.xlu0 %v504, 127
        %v508 = vpop.permute.xlu0 %507
        %vm509 = vcmask 1039360
        %v510 = vsel %vm509, %v506, %v508
        %v512 = vsel %vm444, %v499, 0
        %v515 = vsel %vm448, %v510, 0
        %517 = vmatpush.bf16.msra.mxu0 0
        %518 = vmatpush.bf16.msra.mxu0 0
        %519 = vmatpush.bf16.msra.mxu0 0
        %520 = vmatpush.bf16.msra.mxu0 0
        %521 = vmatpush.bf16.msra.mxu0 0
        %522 = vmatpush.bf16.msra.mxu0 0
        %523 = vmatpush.bf16.msra.mxu0 0
        %524 = vmatpush.bf16.msra.mxu0 %v515
        %525 = vmatmul.bf16.gmra.mxu0 %v512
        %v526 = vpop.f32.mrf.mxu0
        %v527 = vadd.f32 0.0, %v526
        %v528 = vpop.f32.mrf.mxu0
        %v529 = vadd.f32 0.0, %v528
        %530 = vdwg.mxu0
        %v531 = vadd.f32 %v487, %v527
        %v532 = vadd.f32 %v489, %v529
        %s533 = scalar_lea.vmem %s362, 16 [#allocation2]
        %v534 = vld [vmem:[%s533] sm:$0xf]
        %s535 = scalar_lea.vmem %s2, 24
        %v536 = vld [vmem:[%s535] sm:$0xf]
        %v537 = vld [vmem:[%s535 + $0x4] sm:$0xf]
        %v540 = vunpack.c.l.b16 %v536
        %v541 = vunpack.c.l.b16 %v537
        %v542 = vpack.c.b16 %v541, %v540
        %v544 = vsel %vm444, %v542, 0
        %v547 = vsel %vm448, %v534, 0
        %549 = vmatpush.bf16.msra.mxu0 0
        %550 = vmatpush.bf16.msra.mxu0 0
        %551 = vmatpush.bf16.msra.mxu0 0
        %552 = vmatpush.bf16.msra.mxu0 0
        %553 = vmatpush.bf16.msra.mxu0 0
        %554 = vmatpush.bf16.msra.mxu0 0
        %555 = vmatpush.bf16.msra.mxu0 0
        %556 = vmatpush.bf16.msra.mxu0 %v547
        %557 = vmatmul.bf16.gmra.mxu0 %v544
        %v558 = vpop.f32.mrf.mxu0
        %v559 = vadd.f32 0.0, %v558
        %v560 = vpop.f32.mrf.mxu0
        %v561 = vadd.f32 0.0, %v560
        %562 = vdwg.mxu0
        %v563 = vadd.f32 %v531, %v559
        %v564 = vadd.f32 %v532, %v561
        %s565 = scalar_lea.vmem %s362, 24 [#allocation2]
        %v566 = vld [vmem:[%s565] sm:$0xf]
        %s567 = scalar_lea.vmem %s2, 32
        %v568 = vld [vmem:[%s567] sm:$0xf]
        %v569 = vld [vmem:[%s567 + $0x4] sm:$0xf]
        %v572 = vunpack.c.l.b16 %v568
        %v573 = vunpack.c.l.b16 %v569
        %v574 = vpack.c.b16 %v573, %v572
        %v576 = vsel %vm444, %v574, 0
        %v579 = vsel %vm448, %v566, 0
        %581 = vmatpush.bf16.msra.mxu0 0
        %582 = vmatpush.bf16.msra.mxu0 0
        %583 = vmatpush.bf16.msra.mxu0 0
        %584 = vmatpush.bf16.msra.mxu0 0
        %585 = vmatpush.bf16.msra.mxu0 0
        %586 = vmatpush.bf16.msra.mxu0 0
        %587 = vmatpush.bf16.msra.mxu0 0
        %588 = vmatpush.bf16.msra.mxu0 %v579
        %589 = vmatmul.bf16.gmra.mxu0 %v576
        %v590 = vpop.f32.mrf.mxu0
        %v591 = vadd.f32 0.0, %v590
        %v592 = vpop.f32.mrf.mxu0
        %v593 = vadd.f32 0.0, %v592
        %594 = vdwg.mxu0
        %v595 = vadd.f32 %v563, %v591
        %v596 = vadd.f32 %v564, %v593
        %v597 = vld [vmem:[%s533] sm:$0xff]
        %s598 = scalar_lea.vmem %s2, 40
        %v599 = vld [vmem:[%s598] sm:$0xf]
        %v600 = vld [vmem:[%s598 + $0x4] sm:$0xf]
        %v603 = vunpack.c.l.b16 %v599
        %v604 = vunpack.c.l.b16 %v600
        %v605 = vpack.c.b16 %v604, %v603
        %v607 = vunpack.c.l.b16 %v597
        %v608 = vunpack.c.h.b16 %v597
        %v609 = vpack.c.b16 %v607, %v607
        %v610 = vpack.c.b16 %v608, %v608
        %611 = vrot.lane.b32.xlu0 %v609, 127
        %v612 = vpop.permute.xlu0 %611
        %613 = vrot.lane.b32.xlu0 %v610, 127
        %v614 = vpop.permute.xlu0 %613
        %v615 = vsel %vm509, %v612, %v614
        %v617 = vsel %vm444, %v605, 0
        %v620 = vsel %vm448, %v615, 0
        %622 = vmatpush.bf16.msra.mxu0 0
        %623 = vmatpush.bf16.msra.mxu0 0
        %624 = vmatpush.bf16.msra.mxu0 0
        %625 = vmatpush.bf16.msra.mxu0 0
        %626 = vmatpush.bf16.msra.mxu0 0
        %627 = vmatpush.bf16.msra.mxu0 0
        %628 = vmatpush.bf16.msra.mxu0 0
        %629 = vmatpush.bf16.msra.mxu0 %v620
        %630 = vmatmul.bf16.gmra.mxu0 %v617
        %v631 = vpop.f32.mrf.mxu0
        %v632 = vadd.f32 0.0, %v631
        %v633 = vpop.f32.mrf.mxu0
        %v634 = vadd.f32 0.0, %v633
        %635 = vdwg.mxu0
        %v636 = vadd.f32 %v595, %v632
        %v637 = vadd.f32 %v596, %v634
        %s638 = scalar_lea.vmem %s2, 48
        %v639 = vld [vmem:[%s638] sm:$0xf]
        %v640 = vld [vmem:[%s638 + $0x4] sm:$0xf]
        %v643 = vunpack.c.l.b16 %v639
        %v644 = vunpack.c.l.b16 %v640
        %v645 = vpack.c.b16 %v644, %v643
        %646 = vrot.lane.b32.xlu0 %v503, 123
        %v647 = vpop.permute.xlu0 %646
        %648 = vrot.lane.b32.xlu0 %v504, 123
        %v649 = vpop.permute.xlu0 %648
        %vm650 = vcmask 1006592
        %v651 = vsel %vm650, %v647, %v649
        %v653 = vsel %vm444, %v645, 0
        %v656 = vsel %vm448, %v651, 0
        %658 = vmatpush.bf16.msra.mxu0 0
        %659 = vmatpush.bf16.msra.mxu0 0
        %660 = vmatpush.bf16.msra.mxu0 0
        %661 = vmatpush.bf16.msra.mxu0 0
        %662 = vmatpush.bf16.msra.mxu0 0
        %663 = vmatpush.bf16.msra.mxu0 0
        %664 = vmatpush.bf16.msra.mxu0 0
        %665 = vmatpush.bf16.msra.mxu0 %v656
        %666 = vmatmul.bf16.gmra.mxu0 %v653
        %v667 = vpop.f32.mrf.mxu0
        %v668 = vadd.f32 0.0, %v667
        %v669 = vpop.f32.mrf.mxu0
        %v670 = vadd.f32 0.0, %v669
        %671 = vdwg.mxu0
        %v672 = vadd.f32 %v636, %v668
        %v673 = vadd.f32 %v637, %v670
        %v674 = vld [vmem:[%s434] sm:$0xff]
        %s675 = scalar_lea.vmem %s2, 56
        %v676 = vld [vmem:[%s675] sm:$0xf]
        %v677 = vld [vmem:[%s675 + $0x4] sm:$0xf]
        %v680 = vunpack.c.l.b16 %v676
        %v681 = vunpack.c.l.b16 %v677
        %v682 = vpack.c.b16 %v681, %v680
        %v684 = vunpack.c.l.b16 %v674
        %v685 = vunpack.c.h.b16 %v674
        %v686 = vpack.c.b16 %v684, %v684
        %v687 = vpack.c.b16 %v685, %v685
        %688 = vrot.lane.b32.xlu0 %v686, 123
        %v689 = vpop.permute.xlu0 %688
        %690 = vrot.lane.b32.xlu0 %v687, 123
        %v691 = vpop.permute.xlu0 %690
        %v692 = vsel %vm650, %v689, %v691
        %v694 = vsel %vm444, %v682, 0
        %v697 = vsel %vm448, %v692, 0
        %699 = vmatpush.bf16.msra.mxu0 0
        %700 = vmatpush.bf16.msra.mxu0 0
        %701 = vmatpush.bf16.msra.mxu0 0
        %702 = vmatpush.bf16.msra.mxu0 0
        %703 = vmatpush.bf16.msra.mxu0 0
        %704 = vmatpush.bf16.msra.mxu0 0
        %705 = vmatpush.bf16.msra.mxu0 0
        %706 = vmatpush.bf16.msra.mxu0 %v697
        %707 = vmatmul.bf16.gmra.mxu0 %v694
        %v708 = vpop.f32.mrf.mxu0
        %v709 = vadd.f32 0.0, %v708
        %v710 = vpop.f32.mrf.mxu0
        %v711 = vadd.f32 0.0, %v710
        %712 = vdwg.mxu0
        %v713 = vadd.f32 %v672, %v709
        %v714 = vadd.f32 %v673, %v711
        %s715 = scalar_lea.vmem %s2, 64
        %v716 = vld [vmem:[%s715] sm:$0xf]
        %v717 = vld [vmem:[%s715 + $0x4] sm:$0xf]
        %v720 = vunpack.c.l.b16 %v716
        %v721 = vunpack.c.l.b16 %v717
        %v722 = vpack.c.b16 %v721, %v720
        %723 = vrot.lane.b32.xlu0 %v503, 122
        %v724 = vpop.permute.xlu0 %723
        %725 = vrot.lane.b32.xlu0 %v504, 122
        %v726 = vpop.permute.xlu0 %725
        %vm727 = vcmask 998400
        %v728 = vsel %vm727, %v724, %v726
        %v730 = vsel %vm444, %v722, 0
        %v733 = vsel %vm448, %v728, 0
        %735 = vmatpush.bf16.msra.mxu0 0
        %736 = vmatpush.bf16.msra.mxu0 0
        %737 = vmatpush.bf16.msra.mxu0 0
        %738 = vmatpush.bf16.msra.mxu0 0
        %739 = vmatpush.bf16.msra.mxu0 0
        %740 = vmatpush.bf16.msra.mxu0 0
        %741 = vmatpush.bf16.msra.mxu0 0
        %742 = vmatpush.bf16.msra.mxu0 %v733
        %743 = vmatmul.bf16.gmra.mxu0 %v730
        %v744 = vpop.f32.mrf.mxu0
        %v745 = vadd.f32 0.0, %v744
        %v746 = vpop.f32.mrf.mxu0
        %v747 = vadd.f32 0.0, %v746
        %748 = vdwg.mxu0
        %v749 = vadd.f32 %v713, %v745
        %v750 = vadd.f32 %v714, %v747
        %s751 = scalar_lea.vmem %s362, 32 [#allocation2]
        %v752 = vld [vmem:[%s751] sm:$0xf]
        %s753 = scalar_lea.vmem %s2, 72
        %v754 = vld [vmem:[%s753] sm:$0xf]
        %v755 = vld [vmem:[%s753 + $0x4] sm:$0xf]
        %v758 = vunpack.c.l.b16 %v754
        %v759 = vunpack.c.l.b16 %v755
        %v760 = vpack.c.b16 %v759, %v758
        %v762 = vsel %vm444, %v760, 0
        %v765 = vsel %vm448, %v752, 0
        %767 = vmatpush.bf16.msra.mxu0 0
        %768 = vmatpush.bf16.msra.mxu0 0
        %769 = vmatpush.bf16.msra.mxu0 0
        %770 = vmatpush.bf16.msra.mxu0 0
        %771 = vmatpush.bf16.msra.mxu0 0
        %772 = vmatpush.bf16.msra.mxu0 0
        %773 = vmatpush.bf16.msra.mxu0 0
        %774 = vmatpush.bf16.msra.mxu0 %v765
        %775 = vmatmul.bf16.gmra.mxu0 %v762
        %v776 = vpop.f32.mrf.mxu0
        %v777 = vadd.f32 0.0, %v776
        %v778 = vpop.f32.mrf.mxu0
        %v779 = vadd.f32 0.0, %v778
        %780 = vdwg.mxu0
        %v781 = vadd.f32 %v749, %v777
        %v782 = vadd.f32 %v750, %v779
        %s783 = scalar_lea.vmem %s362, 40 [#allocation2]
        %v784 = vld [vmem:[%s783] sm:$0xf]
        %s785 = scalar_lea.vmem %s2, 80
        %v786 = vld [vmem:[%s785] sm:$0xf]
        %v787 = vld [vmem:[%s785 + $0x4] sm:$0xf]
        %v790 = vunpack.c.l.b16 %v786
        %v791 = vunpack.c.l.b16 %v787
        %v792 = vpack.c.b16 %v791, %v790
        %v794 = vsel %vm444, %v792, 0
        %v797 = vsel %vm448, %v784, 0
        %799 = vmatpush.bf16.msra.mxu0 0
        %800 = vmatpush.bf16.msra.mxu0 0
        %801 = vmatpush.bf16.msra.mxu0 0
        %802 = vmatpush.bf16.msra.mxu0 0
        %803 = vmatpush.bf16.msra.mxu0 0
        %804 = vmatpush.bf16.msra.mxu0 0
        %805 = vmatpush.bf16.msra.mxu0 0
        %806 = vmatpush.bf16.msra.mxu0 %v797
        %807 = vmatmul.bf16.gmra.mxu0 %v794
        %v808 = vpop.f32.mrf.mxu0
        %v809 = vadd.f32 0.0, %v808
        %v810 = vpop.f32.mrf.mxu0
        %v811 = vadd.f32 0.0, %v810
        %812 = vdwg.mxu0
        %v813 = vadd.f32 %v781, %v809
        %v814 = vadd.f32 %v782, %v811
        %v815 = vld [vmem:[%s751] sm:$0xff]
        %s816 = scalar_lea.vmem %s2, 88
        %v817 = vld [vmem:[%s816] sm:$0xf]
        %v818 = vld [vmem:[%s816 + $0x4] sm:$0xf]
        %v821 = vunpack.c.l.b16 %v817
        %v822 = vunpack.c.l.b16 %v818
        %v823 = vpack.c.b16 %v822, %v821
        %v825 = vunpack.c.l.b16 %v815
        %v826 = vunpack.c.h.b16 %v815
        %v827 = vpack.c.b16 %v825, %v825
        %v828 = vpack.c.b16 %v826, %v826
        %829 = vrot.lane.b32.xlu0 %v827, 127
        %v830 = vpop.permute.xlu0 %829
        %831 = vrot.lane.b32.xlu0 %v828, 127
        %v832 = vpop.permute.xlu0 %831
        %v833 = vsel %vm509, %v830, %v832
        %v835 = vsel %vm444, %v823, 0
        %v838 = vsel %vm448, %v833, 0
        %840 = vmatpush.bf16.msra.mxu0 0
        %841 = vmatpush.bf16.msra.mxu0 0
        %842 = vmatpush.bf16.msra.mxu0 0
        %843 = vmatpush.bf16.msra.mxu0 0
        %844 = vmatpush.bf16.msra.mxu0 0
        %845 = vmatpush.bf16.msra.mxu0 0
        %846 = vmatpush.bf16.msra.mxu0 0
        %847 = vmatpush.bf16.msra.mxu0 %v838
        %848 = vmatmul.bf16.gmra.mxu0 %v835
        %v849 = vpop.f32.mrf.mxu0
        %v850 = vadd.f32 0.0, %v849
        %v851 = vpop.f32.mrf.mxu0
        %v852 = vadd.f32 0.0, %v851
        %853 = vdwg.mxu0
        %v854 = vadd.f32 %v813, %v850
        %v855 = vadd.f32 %v814, %v852
        %s856 = scalar_lea.vmem %s362, 48 [#allocation2]
        %v857 = vld [vmem:[%s856] sm:$0xf]
        %s858 = scalar_lea.vmem %s2, 96
        %v859 = vld [vmem:[%s858] sm:$0xf]
        %v860 = vld [vmem:[%s858 + $0x4] sm:$0xf]
        %v863 = vunpack.c.l.b16 %v859
        %v864 = vunpack.c.l.b16 %v860
        %v865 = vpack.c.b16 %v864, %v863
        %v867 = vsel %vm444, %v865, 0
        %v870 = vsel %vm448, %v857, 0
        %872 = vmatpush.bf16.msra.mxu0 0
        %873 = vmatpush.bf16.msra.mxu0 0
        %874 = vmatpush.bf16.msra.mxu0 0
        %875 = vmatpush.bf16.msra.mxu0 0
        %876 = vmatpush.bf16.msra.mxu0 0
        %877 = vmatpush.bf16.msra.mxu0 0
        %878 = vmatpush.bf16.msra.mxu0 0
        %879 = vmatpush.bf16.msra.mxu0 %v870
        %880 = vmatmul.bf16.gmra.mxu0 %v867
        %v881 = vpop.f32.mrf.mxu0
        %v882 = vadd.f32 0.0, %v881
        %v883 = vpop.f32.mrf.mxu0
        %v884 = vadd.f32 0.0, %v883
        %885 = vdwg.mxu0
        %v886 = vadd.f32 %v854, %v882
        %v887 = vadd.f32 %v855, %v884
        %s888 = scalar_lea.vmem %s362, 56 [#allocation2]
        %v889 = vld [vmem:[%s888] sm:$0xf]
        %s890 = scalar_lea.vmem %s2, 104
        %v891 = vld [vmem:[%s890] sm:$0xf]
        %v892 = vld [vmem:[%s890 + $0x4] sm:$0xf]
        %v895 = vunpack.c.l.b16 %v891
        %v896 = vunpack.c.l.b16 %v892
        %v897 = vpack.c.b16 %v896, %v895
        %v899 = vsel %vm444, %v897, 0
        %v902 = vsel %vm448, %v889, 0
        %904 = vmatpush.bf16.msra.mxu0 0
        %905 = vmatpush.bf16.msra.mxu0 0
        %906 = vmatpush.bf16.msra.mxu0 0
        %907 = vmatpush.bf16.msra.mxu0 0
        %908 = vmatpush.bf16.msra.mxu0 0
        %909 = vmatpush.bf16.msra.mxu0 0
        %910 = vmatpush.bf16.msra.mxu0 0
        %911 = vmatpush.bf16.msra.mxu0 %v902
        %912 = vmatmul.bf16.gmra.mxu0 %v899
        %v913 = vpop.f32.mrf.mxu0
        %v914 = vadd.f32 0.0, %v913
        %v915 = vpop.f32.mrf.mxu0
        %v916 = vadd.f32 0.0, %v915
        %917 = vdwg.mxu0
        %v918 = vadd.f32 %v886, %v914
        %v919 = vadd.f32 %v887, %v916
        %v920 = vld [vmem:[%s856] sm:$0xff]
        %s921 = scalar_lea.vmem %s2, 112
        %v922 = vld [vmem:[%s921] sm:$0xf]
        %v923 = vld [vmem:[%s921 + $0x4] sm:$0xf]
        %v926 = vunpack.c.l.b16 %v922
        %v927 = vunpack.c.l.b16 %v923
        %v928 = vpack.c.b16 %v927, %v926
        %v930 = vunpack.c.l.b16 %v920
        %v931 = vunpack.c.h.b16 %v920
        %v932 = vpack.c.b16 %v930, %v930
        %v933 = vpack.c.b16 %v931, %v931
        %934 = vrot.lane.b32.xlu0 %v932, 127
        %v935 = vpop.permute.xlu0 %934
        %936 = vrot.lane.b32.xlu0 %v933, 127
        %v937 = vpop.permute.xlu0 %936
        %v938 = vsel %vm509, %v935, %v937
        %v940 = vsel %vm444, %v928, 0
        %v943 = vsel %vm448, %v938, 0
        %945 = vmatpush.bf16.msra.mxu0 0
        %946 = vmatpush.bf16.msra.mxu0 0
        %947 = vmatpush.bf16.msra.mxu0 0
        %948 = vmatpush.bf16.msra.mxu0 0
        %949 = vmatpush.bf16.msra.mxu0 0
        %950 = vmatpush.bf16.msra.mxu0 0
        %951 = vmatpush.bf16.msra.mxu0 0
        %952 = vmatpush.bf16.msra.mxu0 %v943
        %953 = vmatmul.bf16.gmra.mxu0 %v940
        %v954 = vpop.f32.mrf.mxu0
        %v955 = vadd.f32 0.0, %v954
        %v956 = vpop.f32.mrf.mxu0
        %v957 = vadd.f32 0.0, %v956
        %958 = vdwg.mxu0
        %v959 = vadd.f32 %v918, %v955
        %v960 = vadd.f32 %v919, %v957
        %s961 = scalar_lea.vmem %s2, 120
        %v962 = vld [vmem:[%s961] sm:$0xf]
        %v963 = vld [vmem:[%s961 + $0x4] sm:$0xf]
        %v966 = vunpack.c.l.b16 %v962
        %v967 = vunpack.c.l.b16 %v963
        %v968 = vpack.c.b16 %v967, %v966
        %969 = vrot.lane.b32.xlu0 %v827, 123
        %v970 = vpop.permute.xlu0 %969
        %971 = vrot.lane.b32.xlu0 %v828, 123
        %v972 = vpop.permute.xlu0 %971
        %v973 = vsel %vm650, %v970, %v972
        %v975 = vsel %vm444, %v968, 0
        %v978 = vsel %vm448, %v973, 0
        %980 = vmatpush.bf16.msra.mxu0 0
        %981 = vmatpush.bf16.msra.mxu0 0
        %982 = vmatpush.bf16.msra.mxu0 0
        %983 = vmatpush.bf16.msra.mxu0 0
        %984 = vmatpush.bf16.msra.mxu0 0
        %985 = vmatpush.bf16.msra.mxu0 0
        %986 = vmatpush.bf16.msra.mxu0 0
        %987 = vmatpush.bf16.msra.mxu0 %v978
        %988 = vmatmul.bf16.gmra.mxu0 %v975
        %v989 = vpop.f32.mrf.mxu0
        %v990 = vadd.f32 0.0, %v989
        %v991 = vpop.f32.mrf.mxu0
        %v992 = vadd.f32 0.0, %v991
        %993 = vdwg.mxu0
        %v994 = vadd.f32 %v959, %v990
        %v995 = vadd.f32 %v960, %v992
        %v996 = vld [vmem:[%s783] sm:$0xff]
        %s997 = scalar_lea.vmem %s2, 128
        %v998 = vld [vmem:[%s997] sm:$0xf]
        %v999 = vld [vmem:[%s997 + $0x4] sm:$0xf]
        %v1002 = vunpack.c.l.b16 %v998
        %v1003 = vunpack.c.l.b16 %v999
        %v1004 = vpack.c.b16 %v1003, %v1002
        %v1006 = vunpack.c.l.b16 %v996
        %v1007 = vunpack.c.h.b16 %v996
        %v1008 = vpack.c.b16 %v1006, %v1006
        %v1009 = vpack.c.b16 %v1007, %v1007
        %1010 = vrot.lane.b32.xlu0 %v1008, 123
        %v1011 = vpop.permute.xlu0 %1010
        %1012 = vrot.lane.b32.xlu0 %v1009, 123
        %v1013 = vpop.permute.xlu0 %1012
        %v1014 = vsel %vm650, %v1011, %v1013
        %v1016 = vsel %vm444, %v1004, 0
        %v1019 = vsel %vm448, %v1014, 0
        %1021 = vmatpush.bf16.msra.mxu0 0
        %1022 = vmatpush.bf16.msra.mxu0 0
        %1023 = vmatpush.bf16.msra.mxu0 0
        %1024 = vmatpush.bf16.msra.mxu0 0
        %1025 = vmatpush.bf16.msra.mxu0 0
        %1026 = vmatpush.bf16.msra.mxu0 0
        %1027 = vmatpush.bf16.msra.mxu0 0
        %1028 = vmatpush.bf16.msra.mxu0 %v1019
        %1029 = vmatmul.bf16.gmra.mxu0 %v1016
        %v1030 = vpop.f32.mrf.mxu0
        %v1031 = vadd.f32 0.0, %v1030
        %v1032 = vpop.f32.mrf.mxu0
        %v1033 = vadd.f32 0.0, %v1032
        %1034 = vdwg.mxu0
        %v1035 = vadd.f32 %v994, %v1031
        %v1036 = vadd.f32 %v995, %v1033
        %s1037 = scalar_lea.vmem %s2, 136
        %v1038 = vld [vmem:[%s1037] sm:$0xf]
        %v1039 = vld [vmem:[%s1037 + $0x4] sm:$0xf]
        %v1042 = vunpack.c.l.b16 %v1038
        %v1043 = vunpack.c.l.b16 %v1039
        %v1044 = vpack.c.b16 %v1043, %v1042
        %1045 = vrot.lane.b32.xlu0 %v827, 122
        %v1046 = vpop.permute.xlu0 %1045
        %1047 = vrot.lane.b32.xlu0 %v828, 122
        %v1048 = vpop.permute.xlu0 %1047
        %v1049 = vsel %vm727, %v1046, %v1048
        %v1051 = vsel %vm444, %v1044, 0
        %v1054 = vsel %vm448, %v1049, 0
        %1056 = vmatpush.bf16.msra.mxu0 0
        %1057 = vmatpush.bf16.msra.mxu0 0
        %1058 = vmatpush.bf16.msra.mxu0 0
        %1059 = vmatpush.bf16.msra.mxu0 0
        %1060 = vmatpush.bf16.msra.mxu0 0
        %1061 = vmatpush.bf16.msra.mxu0 0
        %1062 = vmatpush.bf16.msra.mxu0 0
        %1063 = vmatpush.bf16.msra.mxu0 %v1054
        %1064 = vmatmul.bf16.gmra.mxu0 %v1051
        %v1065 = vpop.f32.mrf.mxu0
        %v1066 = vadd.f32 0.0, %v1065
        %v1067 = vpop.f32.mrf.mxu0
        %v1068 = vadd.f32 0.0, %v1067
        %1069 = vdwg.mxu0
        %v1070 = vadd.f32 %v1035, %v1066
        %v1071 = vadd.f32 %v1036, %v1068
        %v1072 = vld [vmem:[%s369] sm:$0xf]
        %s1073 = scalar_lea.vmem %s2, 144
        %v1074 = vld [vmem:[%s1073] sm:$0xf]
        %v1075 = vld [vmem:[%s1073 + $0x4] sm:$0xf]
        %v1078 = vunpack.c.l.b16 %v1074
        %v1079 = vunpack.c.l.b16 %v1075
        %v1080 = vpack.c.b16 %v1079, %v1078
        %v1082 = vsel %vm444, %v1080, 0
        %v1085 = vsel %vm448, %v1072, 0
        %1087 = vmatpush.bf16.msra.mxu0 0
        %1088 = vmatpush.bf16.msra.mxu0 0
        %1089 = vmatpush.bf16.msra.mxu0 0
        %1090 = vmatpush.bf16.msra.mxu0 0
        %1091 = vmatpush.bf16.msra.mxu0 0
        %1092 = vmatpush.bf16.msra.mxu0 0
        %1093 = vmatpush.bf16.msra.mxu0 0
        %1094 = vmatpush.bf16.msra.mxu0 %v1085
        %1095 = vmatmul.bf16.gmra.mxu0 %v1082
        %v1096 = vpop.f32.mrf.mxu0
        %v1097 = vadd.f32 0.0, %v1096
        %v1098 = vpop.f32.mrf.mxu0
        %v1099 = vadd.f32 0.0, %v1098
        %1100 = vdwg.mxu0
        %v1101 = vadd.f32 %v1070, %v1097
        %v1102 = vadd.f32 %v1071, %v1099
        %s1103 = scalar_lea.vmem %s369, 8 [#allocation3]
        %v1104 = vld [vmem:[%s1103] sm:$0xf]
        %s1105 = scalar_lea.vmem %s2, 152
        %v1106 = vld [vmem:[%s1105] sm:$0xf]
        %v1107 = vld [vmem:[%s1105 + $0x4] sm:$0xf]
        %v1110 = vunpack.c.l.b16 %v1106
        %v1111 = vunpack.c.l.b16 %v1107
        %v1112 = vpack.c.b16 %v1111, %v1110
        %v1114 = vsel %vm444, %v1112, 0
        %v1117 = vsel %vm448, %v1104, 0
        %1119 = vmatpush.bf16.msra.mxu0 0
        %1120 = vmatpush.bf16.msra.mxu0 0
        %1121 = vmatpush.bf16.msra.mxu0 0
        %1122 = vmatpush.bf16.msra.mxu0 0
        %1123 = vmatpush.bf16.msra.mxu0 0
        %1124 = vmatpush.bf16.msra.mxu0 0
        %1125 = vmatpush.bf16.msra.mxu0 0
        %1126 = vmatpush.bf16.msra.mxu0 %v1117
        %1127 = vmatmul.bf16.gmra.mxu0 %v1114
        %v1128 = vpop.f32.mrf.mxu0
        %v1129 = vadd.f32 0.0, %v1128
        %v1130 = vpop.f32.mrf.mxu0
        %v1131 = vadd.f32 0.0, %v1130
        %1132 = vdwg.mxu0
        %v1133 = vadd.f32 %v1101, %v1129
        %v1134 = vadd.f32 %v1102, %v1131
        %v1135 = vld [vmem:[%s369] sm:$0xff]
        %s1136 = scalar_lea.vmem %s2, 160
        %v1137 = vld [vmem:[%s1136] sm:$0xf]
        %v1138 = vld [vmem:[%s1136 + $0x4] sm:$0xf]
        %v1141 = vunpack.c.l.b16 %v1137
        %v1142 = vunpack.c.l.b16 %v1138
        %v1143 = vpack.c.b16 %v1142, %v1141
        %v1145 = vunpack.c.l.b16 %v1135
        %v1146 = vunpack.c.h.b16 %v1135
        %v1147 = vpack.c.b16 %v1145, %v1145
        %v1148 = vpack.c.b16 %v1146, %v1146
        %1149 = vrot.lane.b32.xlu0 %v1147, 127
        %v1150 = vpop.permute.xlu0 %1149
        %1151 = vrot.lane.b32.xlu0 %v1148, 127
        %v1152 = vpop.permute.xlu0 %1151
        %v1153 = vsel %vm509, %v1150, %v1152
        %v1155 = vsel %vm444, %v1143, 0
        %v1158 = vsel %vm448, %v1153, 0
        %1160 = vmatpush.bf16.msra.mxu0 0
        %1161 = vmatpush.bf16.msra.mxu0 0
        %1162 = vmatpush.bf16.msra.mxu0 0
        %1163 = vmatpush.bf16.msra.mxu0 0
        %1164 = vmatpush.bf16.msra.mxu0 0
        %1165 = vmatpush.bf16.msra.mxu0 0
        %1166 = vmatpush.bf16.msra.mxu0 0
        %1167 = vmatpush.bf16.msra.mxu0 %v1158
        %1168 = vmatmul.bf16.gmra.mxu0 %v1155
        %v1169 = vpop.f32.mrf.mxu0
        %v1170 = vadd.f32 0.0, %v1169
        %v1171 = vpop.f32.mrf.mxu0
        %v1172 = vadd.f32 0.0, %v1171
        %1173 = vdwg.mxu0
        %v1174 = vadd.f32 %v1133, %v1170
        %v1175 = vadd.f32 %v1134, %v1172
        %s1176 = scalar_lea.vmem %s369, 16 [#allocation3]
        %v1177 = vld [vmem:[%s1176] sm:$0xf]
        %s1178 = scalar_lea.vmem %s2, 168
        %v1179 = vld [vmem:[%s1178] sm:$0xf]
        %v1180 = vld [vmem:[%s1178 + $0x4] sm:$0xf]
        %v1183 = vunpack.c.l.b16 %v1179
        %v1184 = vunpack.c.l.b16 %v1180
        %v1185 = vpack.c.b16 %v1184, %v1183
        %v1187 = vsel %vm444, %v1185, 0
        %v1190 = vsel %vm448, %v1177, 0
        %1192 = vmatpush.bf16.msra.mxu0 0
        %1193 = vmatpush.bf16.msra.mxu0 0
        %1194 = vmatpush.bf16.msra.mxu0 0
        %1195 = vmatpush.bf16.msra.mxu0 0
        %1196 = vmatpush.bf16.msra.mxu0 0
        %1197 = vmatpush.bf16.msra.mxu0 0
        %1198 = vmatpush.bf16.msra.mxu0 0
        %1199 = vmatpush.bf16.msra.mxu0 %v1190
        %1200 = vmatmul.bf16.gmra.mxu0 %v1187
        %v1201 = vpop.f32.mrf.mxu0
        %v1202 = vadd.f32 0.0, %v1201
        %v1203 = vpop.f32.mrf.mxu0
        %v1204 = vadd.f32 0.0, %v1203
        %1205 = vdwg.mxu0
        %v1206 = vadd.f32 %v1174, %v1202
        %v1207 = vadd.f32 %v1175, %v1204
        %s1208 = scalar_lea.vmem %s369, 24 [#allocation3]
        %v1209 = vld [vmem:[%s1208] sm:$0xf]
        %s1210 = scalar_lea.vmem %s2, 176
        %v1211 = vld [vmem:[%s1210] sm:$0xf]
        %v1212 = vld [vmem:[%s1210 + $0x4] sm:$0xf]
        %v1215 = vunpack.c.l.b16 %v1211
        %v1216 = vunpack.c.l.b16 %v1212
        %v1217 = vpack.c.b16 %v1216, %v1215
        %v1219 = vsel %vm444, %v1217, 0
        %v1222 = vsel %vm448, %v1209, 0
        %1224 = vmatpush.bf16.msra.mxu0 0
        %1225 = vmatpush.bf16.msra.mxu0 0
        %1226 = vmatpush.bf16.msra.mxu0 0
        %1227 = vmatpush.bf16.msra.mxu0 0
        %1228 = vmatpush.bf16.msra.mxu0 0
        %1229 = vmatpush.bf16.msra.mxu0 0
        %1230 = vmatpush.bf16.msra.mxu0 0
        %1231 = vmatpush.bf16.msra.mxu0 %v1222
        %1232 = vmatmul.bf16.gmra.mxu0 %v1219
        %v1233 = vpop.f32.mrf.mxu0
        %v1234 = vadd.f32 0.0, %v1233
        %v1235 = vpop.f32.mrf.mxu0
        %v1236 = vadd.f32 0.0, %v1235
        %1237 = vdwg.mxu0
        %v1238 = vadd.f32 %v1206, %v1234
        %v1239 = vadd.f32 %v1207, %v1236
        %v1240 = vld [vmem:[%s1176] sm:$0xff]
        %s1241 = scalar_lea.vmem %s2, 184
        %v1242 = vld [vmem:[%s1241] sm:$0xf]
        %v1243 = vld [vmem:[%s1241 + $0x4] sm:$0xf]
        %v1246 = vunpack.c.l.b16 %v1242
        %v1247 = vunpack.c.l.b16 %v1243
        %v1248 = vpack.c.b16 %v1247, %v1246
        %v1250 = vunpack.c.l.b16 %v1240
        %v1251 = vunpack.c.h.b16 %v1240
        %v1252 = vpack.c.b16 %v1250, %v1250
        %v1253 = vpack.c.b16 %v1251, %v1251
        %1254 = vrot.lane.b32.xlu0 %v1252, 127
        %v1255 = vpop.permute.xlu0 %1254
        %1256 = vrot.lane.b32.xlu0 %v1253, 127
        %v1257 = vpop.permute.xlu0 %1256
        %v1258 = vsel %vm509, %v1255, %v1257
        %v1260 = vsel %vm444, %v1248, 0
        %v1263 = vsel %vm448, %v1258, 0
        %1265 = vmatpush.bf16.msra.mxu0 0
        %1266 = vmatpush.bf16.msra.mxu0 0
        %1267 = vmatpush.bf16.msra.mxu0 0
        %1268 = vmatpush.bf16.msra.mxu0 0
        %1269 = vmatpush.bf16.msra.mxu0 0
        %1270 = vmatpush.bf16.msra.mxu0 0
        %1271 = vmatpush.bf16.msra.mxu0 0
        %1272 = vmatpush.bf16.msra.mxu0 %v1263
        %1273 = vmatmul.bf16.gmra.mxu0 %v1260
        %v1274 = vpop.f32.mrf.mxu0
        %v1275 = vadd.f32 0.0, %v1274
        %v1276 = vpop.f32.mrf.mxu0
        %v1277 = vadd.f32 0.0, %v1276
        %1278 = vdwg.mxu0
        %v1279 = vadd.f32 %v1238, %v1275
        %v1280 = vadd.f32 %v1239, %v1277
        %s1281 = scalar_lea.vmem %s2, 192
        %v1282 = vld [vmem:[%s1281] sm:$0xf]
        %v1283 = vld [vmem:[%s1281 + $0x4] sm:$0xf]
        %v1286 = vunpack.c.l.b16 %v1282
        %v1287 = vunpack.c.l.b16 %v1283
        %v1288 = vpack.c.b16 %v1287, %v1286
        %1289 = vrot.lane.b32.xlu0 %v1147, 123
        %v1290 = vpop.permute.xlu0 %1289
        %1291 = vrot.lane.b32.xlu0 %v1148, 123
        %v1292 = vpop.permute.xlu0 %1291
        %v1293 = vsel %vm650, %v1290, %v1292
        %v1295 = vsel %vm444, %v1288, 0
        %v1298 = vsel %vm448, %v1293, 0
        %1300 = vmatpush.bf16.msra.mxu0 0
        %1301 = vmatpush.bf16.msra.mxu0 0
        %1302 = vmatpush.bf16.msra.mxu0 0
        %1303 = vmatpush.bf16.msra.mxu0 0
        %1304 = vmatpush.bf16.msra.mxu0 0
        %1305 = vmatpush.bf16.msra.mxu0 0
        %1306 = vmatpush.bf16.msra.mxu0 0
        %1307 = vmatpush.bf16.msra.mxu0 %v1298
        %1308 = vmatmul.bf16.gmra.mxu0 %v1295
        %v1309 = vpop.f32.mrf.mxu0
        %v1310 = vadd.f32 0.0, %v1309
        %v1311 = vpop.f32.mrf.mxu0
        %v1312 = vadd.f32 0.0, %v1311
        %1313 = vdwg.mxu0
        %v1314 = vadd.f32 %v1279, %v1310
        %v1315 = vadd.f32 %v1280, %v1312
        %v1316 = vld [vmem:[%s1103] sm:$0xff]
        %s1317 = scalar_lea.vmem %s2, 200
        %v1318 = vld [vmem:[%s1317] sm:$0xf]
        %v1319 = vld [vmem:[%s1317 + $0x4] sm:$0xf]
        %v1322 = vunpack.c.l.b16 %v1318
        %v1323 = vunpack.c.l.b16 %v1319
        %v1324 = vpack.c.b16 %v1323, %v1322
        %v1326 = vunpack.c.l.b16 %v1316
        %v1327 = vunpack.c.h.b16 %v1316
        %v1328 = vpack.c.b16 %v1326, %v1326
        %v1329 = vpack.c.b16 %v1327, %v1327
        %1330 = vrot.lane.b32.xlu0 %v1328, 123
        %v1331 = vpop.permute.xlu0 %1330
        %1332 = vrot.lane.b32.xlu0 %v1329, 123
        %v1333 = vpop.permute.xlu0 %1332
        %v1334 = vsel %vm650, %v1331, %v1333
        %v1336 = vsel %vm444, %v1324, 0
        %v1339 = vsel %vm448, %v1334, 0
        %1341 = vmatpush.bf16.msra.mxu0 0
        %1342 = vmatpush.bf16.msra.mxu0 0
        %1343 = vmatpush.bf16.msra.mxu0 0
        %1344 = vmatpush.bf16.msra.mxu0 0
        %1345 = vmatpush.bf16.msra.mxu0 0
        %1346 = vmatpush.bf16.msra.mxu0 0
        %1347 = vmatpush.bf16.msra.mxu0 0
        %1348 = vmatpush.bf16.msra.mxu0 %v1339
        %1349 = vmatmul.bf16.gmra.mxu0 %v1336
        %v1350 = vpop.f32.mrf.mxu0
        %v1351 = vadd.f32 0.0, %v1350
        %v1352 = vpop.f32.mrf.mxu0
        %v1353 = vadd.f32 0.0, %v1352
        %1354 = vdwg.mxu0
        %v1355 = vadd.f32 %v1314, %v1351
        %v1356 = vadd.f32 %v1315, %v1353
        %s1357 = scalar_lea.vmem %s2, 208
        %v1358 = vld [vmem:[%s1357] sm:$0xf]
        %v1359 = vld [vmem:[%s1357 + $0x4] sm:$0xf]
        %v1362 = vunpack.c.l.b16 %v1358
        %v1363 = vunpack.c.l.b16 %v1359
        %v1364 = vpack.c.b16 %v1363, %v1362
        %1365 = vrot.lane.b32.xlu0 %v1147, 122
        %v1366 = vpop.permute.xlu0 %1365
        %1367 = vrot.lane.b32.xlu0 %v1148, 122
        %v1368 = vpop.permute.xlu0 %1367
        %v1369 = vsel %vm727, %v1366, %v1368
        %v1371 = vsel %vm444, %v1364, 0
        %v1374 = vsel %vm448, %v1369, 0
        %1376 = vmatpush.bf16.msra.mxu0 0
        %1377 = vmatpush.bf16.msra.mxu0 0
        %1378 = vmatpush.bf16.msra.mxu0 0
        %1379 = vmatpush.bf16.msra.mxu0 0
        %1380 = vmatpush.bf16.msra.mxu0 0
        %1381 = vmatpush.bf16.msra.mxu0 0
        %1382 = vmatpush.bf16.msra.mxu0 0
        %1383 = vmatpush.bf16.msra.mxu0 %v1374
        %1384 = vmatmul.bf16.gmra.mxu0 %v1371
        %v1385 = vpop.f32.mrf.mxu0
        %v1386 = vadd.f32 0.0, %v1385
        %v1387 = vpop.f32.mrf.mxu0
        %v1388 = vadd.f32 0.0, %v1387
        %1389 = vdwg.mxu0
        %v1390 = vadd.f32 %v1355, %v1386
        %v1391 = vadd.f32 %v1356, %v1388
        %1392 = vst [vmem:[%s420] sm:$0xff] %v1390
        %1393 = vst [vmem:[%s420 + $0x8] sm:$0xff] %v1391
        %v1394 = vld [vmem:[%s3] sm:$0x1]
        %v1396 = vperm.slane %v1394, 0
        %v1398 = vmul.f32 %v1390, %v1396
        %v1399 = vmul.f32 %v1391, %v1396
        %1400 = vadd.xlane.f32.xlu0 %v1398
        %v1401 = vpop.xlane.xlu0 %1400
        %1402 = vadd.xlane.f32.xlu0 %v1399
        %v1403 = vpop.xlane.xlu0 %1402
        %vm1404 = vcmask 7168
        %1405 = vst.msk [vmem:[%s429] sm:$0xff] %vm1404, %v1401
        %1406 = vst.msk [vmem:[%s429 + $0x8] sm:$0xff] %vm1404, %v1403
        %v1407 = vmul.f32 %v1398, %v1398
        %v1408 = vmul.f32 %v1399, %v1399
        %1409 = vadd.xlane.f32.xlu0 %v1407
        %v1410 = vpop.xlane.xlu0 %1409
        %1411 = vadd.xlane.f32.xlu0 %v1408
        %v1412 = vpop.xlane.xlu0 %1411
        %vm1413 = vcmask 15368
        %1414 = vst.msk [vmem:[%s429] sm:$0xff] %vm1413, %v1410
        %1415 = vst.msk [vmem:[%s429 + $0x8] sm:$0xff] %vm1413, %v1412
        %p1416 = scmp.lt.s32.totalorder %s21, 1
        %s1417 = scalar_select %p1416, %s21, 1
        %p1418 = scmp.lt.s32.totalorder %s22, 3
        %s1419 = scalar_select %p1418, %s22, 3
        %s1420 = smul.addr %s1419, 2
        %s1421 = smul.addr %s1417, 8
        %s1422 = sadd.s32 %s1420, %s1421
        %s1423 = smul.addr %s1422, 8
        %s1424 = scalar_lea.vmem %s4, %s1423
        %p1425 = scmp.lt.s32.totalorder %s21, 1
        %s1426 = scalar_select %p1425, %s21, 1
        %p1427 = scmp.lt.s32.totalorder %s22, 3
        %s1428 = scalar_select %p1427, %s22, 3
        %s1429 = smul.addr %s1428, 2
        %s1430 = smul.addr %s1426, 8
        %s1431 = sadd.s32 %s1429, %s1430
        %s1432 = smul.addr %s1431, 8
        %s1433 = scalar_lea.vmem %s5, %s1432
        // Predicated region
        $region113: #{_lambda_.6} parent=103 // pred_check
          %p1434 = pneg %p149
        $region114: #{_lambda_.6} parent=103 // pred_check_branch
          %1436 = sbr.rel (%p1434) target = $region116
        $region115: #{_lambda_.6} parent=103 // pred_region
          _
        $region116: #{_lambda_.6} parent=103 // pred_fallthru
          _
        // Predicated region
        $region117: #{_lambda_.6} parent=103 // pred_check
          %p1437 = pneg %p177
        $region118: #{_lambda_.6} parent=103 // pred_check_branch
          %1439 = sbr.rel (%p1437) target = $region120
        $region119: #{_lambda_.6} parent=103 // pred_region
          _
        $region120: #{_lambda_.6} parent=103 // pred_fallthru
          _
      $region104: #{_lambda_.6} parent=5 // pred_fallthru
        _
      %p1440 = scmp.le.s32.totalorder 2, %s12
      // Predicated region
      $region121: #{_lambda_.6} parent=5 // pred_check
        %p1441 = pneg %p1440
      $region122: #{_lambda_.6} parent=5 // pred_check_branch
        %1443 = sbr.rel (%p1441) target = $region124
      $region123: #{_lambda_.6} parent=5 // pred_region
        %s1444 = ssub.s32 %s12, 2
        // Predicated region
        $region125: #{_lambda_.6} parent=123 // pred_check
          %p1445 = pneg %p155
        $region126: #{_lambda_.6} parent=123 // pred_check_branch
          %1447 = sbr.rel (%p1445) target = $region128
        $region127: #{_lambda_.6} parent=123 // pred_region
          %p1448 = scmp.lt.s32.totalorder %s23, 1
          %s1449 = scalar_select %p1448, %s23, 1
          %p1450 = scmp.lt.s32.totalorder %s24, 3
          %s1451 = scalar_select %p1450, %s24, 3
          %s1452 = smul.addr %s1451, 2
          %s1453 = smul.addr %s1449, 8
          %s1454 = sadd.s32 %s1452, %s1453
          %s1455 = smul.addr %s1454, 8
          %s1456 = scalar_lea.vmem %s4, %s1455
        $region128: #{_lambda_.6} parent=123 // pred_fallthru
          _
        // Predicated region
        $region129: #{_lambda_.6} parent=123 // pred_check
          %p1457 = pneg %p183
        $region130: #{_lambda_.6} parent=123 // pred_check_branch
          %1459 = sbr.rel (%p1457) target = $region132
        $region131: #{_lambda_.6} parent=123 // pred_region
          %p1460 = scmp.lt.s32.totalorder %s23, 1
          %s1461 = scalar_select %p1460, %s23, 1
          %p1462 = scmp.lt.s32.totalorder %s24, 3
          %s1463 = scalar_select %p1462, %s24, 3
          %s1464 = smul.addr %s1463, 2
          %s1465 = smul.addr %s1461, 8
          %s1466 = sadd.s32 %s1464, %s1465
          %s1467 = smul.addr %s1466, 8
          %s1468 = scalar_lea.vmem %s5, %s1467
        $region132: #{_lambda_.6} parent=123 // pred_fallthru
          _
      $region124: #{_lambda_.6} parent=5 // pred_fallthru
        _
    $region6: #{_lambda_.6} parent=1 // loop_footer
      %s16 = sadd.s32 1, %s12
    $region7: #{_lambda_.6} parent=1 // loop_footer_branch
      %11 = sbr.rel target = $region3
    $region8: #{_lambda_.6} parent=1 // loop_exit
      _

// kernel: _lambda_.7
$region0: #{_lambda_.7}
  #allocation0 [shape = 'u32[]', space=smem, size = 0x4, offset = 0x4, fixed_abs, tag = 'smem constant byte address 0x4 - core index']
  #allocation1 [shape = 'u32[72,128]{1,0:T(1,128)}', space=vmem, size = 0x9000, scoped, tag = 'internal scratch']
  %s0 = inlined_call_operand.vmem [shape: f32[2,4,16,128], index: 0, kind: input, shape index: {}]
  %s1 = inlined_call_operand.vmem [shape: f32[2,16,2], index: 1, kind: input, shape index: {}]
  %s2 = inlined_call_operand.vmem [shape: f32[2,4,16,128], index: 2, kind: output, shape index: {}]
  %s3 = sld [smem:[#allocation0]]
  $region41: #{_lambda_.7} parent=0
    _
  %s5 = ssub.s32 1, %s3
  %s6 = scalar_select 0, %s5, %s3
  loop: start=0, step=1, limit=10
  $region2: #{_lambda_.7} parent=0 // loop_pre_header
    _
  $region3: #{_lambda_.7} parent=0 // loop_header
    %s8 = sphi 0, %s12
    %p9 = scmp.ge.s32.totalorder %s8, 10
    %s15 = sphi 0, %s27
    %s16 = sphi 0, %s23
    %s17 = sphi 0, %s15
    %s18 = sphi 0, %s16
    %s19 = sphi 0, %s17
    %s20 = sphi 0, %s18
    %s32 = sphi 0, %s34
    %s35 = sphi 0, %s32
    %s36 = sphi 0, %s35
    %s52 = sphi 0, %s36
    %s58 = sphi 0, %s60
    %s61 = sphi 0, %s58
    %s62 = sphi 0, %s61
    %s78 = sphi 0, %s62
    %s86 = sphi 0, %s88
    %s89 = sphi 0, %s86
    %s90 = sphi 0, %s89
    %s106 = sphi 0, %s90
  $region4: #{_lambda_.7} parent=0 // loop_header_branch
    %11 = sbr.rel (%p9) target = $region8
  $region5: #{_lambda_.7} parent=0 // loop_body
    %s13 = ssub.s32 %s8, 1
    %s14 = ssub.s32 %s8, 2
    %s21 = sadd.s32 1, %s16
    %p22 = scmp.ge.s32.totalorder %s21, 4
    %s23 = scalar_select %p22, 0, %s21
    %s24 = sadd.s32 1, %s15
    %s25 = scalar_select %p22, %s24, %s15
    %p26 = scmp.ge.s32.totalorder %s25, 2
    %s27 = scalar_select %p26, 0, %s25
    %s28 = ssub.s32 %s15, %s27
    %s29 = ssub.s32 %s16, %s23
    %s30 = sor.u32 %s28, %s29
    %p31 = scmp.eq.s32.totalorder %s30, 0
    %s33 = sadd.s32 %s32, 1
    %s34 = scalar_select %p31, %s32, %s33
    %p37 = pneg %p31
    %p38 = scmp.eq.s32.totalorder %s8, 7
    %p39 = por %p37, %p38
    %p40 = scmp.ne.s32.totalorder %s32, %s35
    %p41 = scmp.eq.s32.totalorder %s8, 0
    %p42 = por %p40, %p41
    %p43 = scmp.ne.s32.totalorder %s32, %s35
    %p44 = scmp.eq.s32.totalorder %s13, 7
    %p45 = por %p43, %p44
    %p46 = scmp.ne.s32.totalorder %s35, %s36
    %p47 = scmp.eq.s32.totalorder %s13, 0
    %p48 = por %p46, %p47
    %p49 = scmp.ne.s32.totalorder %s35, %s36
    %p50 = scmp.eq.s32.totalorder %s14, 7
    %p51 = por %p49, %p50
    %p53 = scmp.ne.s32.totalorder %s36, %s52
    %p54 = scmp.eq.s32.totalorder %s14, 0
    %p55 = por %p53, %p54
    %s56 = ssub.s32 %s15, %s27
    %p57 = scmp.eq.s32.totalorder %s56, 0
    %s59 = sadd.s32 %s58, 1
    %s60 = scalar_select %p57, %s58, %s59
    %p63 = pneg %p57
    %p64 = scmp.eq.s32.totalorder %s8, 7
    %p65 = por %p63, %p64
    %p66 = scmp.ne.s32.totalorder %s58, %s61
    %p67 = scmp.eq.s32.totalorder %s8, 0
    %p68 = por %p66, %p67
    %p69 = scmp.ne.s32.totalorder %s58, %s61
    %p70 = scmp.eq.s32.totalorder %s13, 7
    %p71 = por %p69, %p70
    %p72 = scmp.ne.s32.totalorder %s61, %s62
    %p73 = scmp.eq.s32.totalorder %s13, 0
    %p74 = por %p72, %p73
    %p75 = scmp.ne.s32.totalorder %s61, %s62
    %p76 = scmp.eq.s32.totalorder %s14, 7
    %p77 = por %p75, %p76
    %p79 = scmp.ne.s32.totalorder %s62, %s78
    %p80 = scmp.eq.s32.totalorder %s14, 0
    %p81 = por %p79, %p80
    %s82 = ssub.s32 %s15, %s27
    %s83 = ssub.s32 %s16, %s23
    %s84 = sor.u32 %s82, %s83
    %p85 = scmp.eq.s32.totalorder %s84, 0
    %s87 = sadd.s32 %s86, 1
    %s88 = scalar_select %p85, %s86, %s87
    %p91 = pneg %p85
    %p92 = scmp.eq.s32.totalorder %s8, 7
    %p93 = por %p91, %p92
    %p94 = scmp.ne.s32.totalorder %s86, %s89
    %p95 = scmp.eq.s32.totalorder %s8, 0
    %p96 = por %p94, %p95
    %p97 = scmp.ne.s32.totalorder %s86, %s89
    %p98 = scmp.eq.s32.totalorder %s13, 7
    %p99 = por %p97, %p98
    %p100 = scmp.ne.s32.totalorder %s89, %s90
    %p101 = scmp.eq.s32.totalorder %s13, 0
    %p102 = por %p100, %p101
    %p103 = scmp.ne.s32.totalorder %s89, %s90
    %p104 = scmp.eq.s32.totalorder %s14, 7
    %p105 = por %p103, %p104
    %p107 = scmp.ne.s32.totalorder %s90, %s106
    %p108 = scmp.eq.s32.totalorder %s14, 0
    %p109 = por %p107, %p108
    %p110 = scmp.le.s32.totalorder 1, %s8
    %p111 = scmp.lt.s32.totalorder %s8, 9
    %p112 = pnand %p110, %p111
    %p113 = pneg %p112
    // Predicated region
    $region9: #{_lambda_.7} parent=5 // pred_check
      _
    $region10: #{_lambda_.7} parent=5 // pred_check_branch
      %115 = sbr.rel (%p112) target = $region12
    $region11: #{_lambda_.7} parent=5 // pred_region
      %s116 = ssub.s32 %s8, 1
    $region12: #{_lambda_.7} parent=5 // pred_fallthru
      _
    %p117 = scmp.lt.s32.totalorder %s8, 8
    // Predicated region
    $region13: #{_lambda_.7} parent=5 // pred_check
      %p118 = pneg %p117
    $region14: #{_lambda_.7} parent=5 // pred_check_branch
      %120 = sbr.rel (%p118) target = $region16
    $region15: #{_lambda_.7} parent=5 // pred_region
      // Predicated region
      $region17: #{_lambda_.7} parent=15 // pred_check
        %p121 = pneg %p42
      $region18: #{_lambda_.7} parent=15 // pred_check_branch
        %123 = sbr.rel (%p121) target = $region20
      $region19: #{_lambda_.7} parent=15 // pred_region
        %p124 = scmp.lt.s32.totalorder %s15, 1
        %s125 = scalar_select %p124, %s15, 1
        %p126 = scmp.lt.s32.totalorder %s16, 3
        %s127 = scalar_select %p126, %s16, 3
        %s128 = smul.addr %s127, 2
        %s129 = smul.addr %s125, 8
        %s130 = sadd.s32 %s128, %s129
        %s131 = smul.addr %s130, 8
        %s132 = scalar_lea.vmem %s0, %s131
      $region20: #{_lambda_.7} parent=15 // pred_fallthru
        _
      // Predicated region
      $region21: #{_lambda_.7} parent=15 // pred_check
        %p133 = pneg %p68
      $region22: #{_lambda_.7} parent=15 // pred_check_branch
        %135 = sbr.rel (%p133) target = $region24
      $region23: #{_lambda_.7} parent=15 // pred_region
        %p136 = scmp.lt.s32.totalorder %s15, 1
        %s137 = scalar_select %p136, %s15, 1
        %s138 = smul.addr %s137, 2
        %s139 = smul.addr %s138, 8
        %s140 = scalar_lea.vmem %s1, %s139
      $region24: #{_lambda_.7} parent=15 // pred_fallthru
        _
    $region16: #{_lambda_.7} parent=5 // pred_fallthru
      _
    %p141 = scmp.le.s32.totalorder 1, %s8
    %p142 = scmp.lt.s32.totalorder %s8, 9
    %p143 = pnand %p141, %p142
    %p144 = pneg %p143
    // Predicated region
    $region25: #{_lambda_.7} parent=5 // pred_check
      _
    $region26: #{_lambda_.7} parent=5 // pred_check_branch
      %146 = sbr.rel (%p143) target = $region28
    $region27: #{_lambda_.7} parent=5 // pred_region
      %s147 = ssub.s32 %s8, 1
      %p148 = scmp.lt.s32.totalorder %s17, 1
      %s149 = scalar_select %p148, %s17, 1
      %p150 = scmp.lt.s32.totalorder %s18, 3
      %s151 = scalar_select %p150, %s18, 3
      %s152 = smul.addr %s151, 2
      %s153 = smul.addr %s149, 8
      %s154 = sadd.s32 %s152, %s153
      %s155 = smul.addr %s154, 8
      %s156 = scalar_lea.vmem %s0, %s155
      %p157 = pneg %p48
      %p158 = pneg %p45
      %p159 = scmp.lt.s32.totalorder %s17, 1
      %s160 = scalar_select %p159, %s17, 1
      %s161 = smul.addr %s160, 2
      %s162 = smul.addr %s161, 8
      %s163 = scalar_lea.vmem %s1, %s162
      %p164 = pneg %p74
      %p165 = pneg %p71
      %p166 = pneg %p102
      %p167 = pneg %p99
      %p168 = scmp.lt.s32.totalorder %s17, 1
      %s169 = scalar_select %p168, %s17, 1
      %p170 = scmp.lt.s32.totalorder %s18, 3
      %s171 = scalar_select %p170, %s18, 3
      %s172 = smul.addr %s171, 2
      %s173 = smul.addr %s169, 8
      %s174 = sadd.s32 %s172, %s173
      %s175 = smul.addr %s174, 8
      %s176 = scalar_lea.vmem %s2, %s175
      %p177 = scmp.lt.s32.totalorder %s17, 1
      %s178 = scalar_select %p177, %s17, 1
      %p179 = scmp.lt.s32.totalorder %s18, 3
      %s180 = scalar_select %p179, %s18, 3
      %s181 = smul.addr %s180, 2
      %s182 = smul.addr %s178, 8
      %s183 = sadd.s32 %s181, %s182
      %s184 = smul.addr %s183, 8
      %s185 = scalar_lea.vmem %s0, %s184
      %p186 = scmp.lt.s32.totalorder %s17, 1
      %s187 = scalar_select %p186, %s17, 1
      %s188 = smul.addr %s187, 2
      %s189 = smul.addr %s188, 8
      %s190 = scalar_lea.vmem %s1, %s189
      %p191 = scmp.lt.s32.totalorder %s17, 1
      %s192 = scalar_select %p191, %s17, 1
      %p193 = scmp.lt.s32.totalorder %s18, 3
      %s194 = scalar_select %p193, %s18, 3
      %s195 = smul.addr %s194, 2
      %s196 = smul.addr %s192, 8
      %s197 = sadd.s32 %s195, %s196
      %s198 = smul.addr %s197, 8
      %s199 = scalar_lea.vmem %s2, %s198
      %v200 = vld [vmem:[%s185] sm:$0xff]
      %v201 = vld [vmem:[%s185 + $0x8] sm:$0xff]
      %v202 = vld [vmem:[%s190] sm:$0xff]
      %v203 = vld [vmem:[%s190 + $0x8] sm:$0xff]
      %205 = vset.pattern.permute.xlu0 0
      %206 = vperm.xlu0 %205, %v202
      %v207 = vpop.permute.xlu0 %206
      %210 = vset.pattern.permute.xlu0 0
      %211 = vperm.xlu0 %210, %v203
      %v212 = vpop.permute.xlu0 %211
      %v214 = vmul.f32 %v200, %v207
      %v215 = vmul.f32 %v201, %v212
      %216 = vset.pattern.permute.xlu0 1
      %217 = vperm.xlu0 %216, %v202
      %v218 = vpop.permute.xlu0 %217
      %220 = vset.pattern.permute.xlu0 1
      %221 = vperm.xlu0 %220, %v203
      %v222 = vpop.permute.xlu0 %221
      %v224 = vadd.f32 %v214, %v218
      %v225 = vadd.f32 %v215, %v222
      %vm226 = vcmp.ge.f32.partialorder %v224, 0.0
      %vm227 = vcmp.ge.f32.partialorder %v225, 0.0
      %v228 = vmul.f32 %v224, 0.01
      %v229 = vmul.f32 %v225, 0.01
      %v230 = vsel %vm226, %v224, %v228
      %v231 = vsel %vm227, %v225, %v229
      %232 = vst [vmem:[%s199] sm:$0xff] %v230
      %233 = vst [vmem:[%s199 + $0x8] sm:$0xff] %v231
      %p234 = scmp.lt.s32.totalorder %s17, 1
      %s235 = scalar_select %p234, %s17, 1
      %p236 = scmp.lt.s32.totalorder %s18, 3
      %s237 = scalar_select %p236, %s18, 3
      %s238 = smul.addr %s237, 2
      %s239 = smul.addr %s235, 8
      %s240 = sadd.s32 %s238, %s239
      %s241 = smul.addr %s240, 8
      %s242 = scalar_lea.vmem %s2, %s241
      // Predicated region
      $region29: #{_lambda_.7} parent=27 // pred_check
        %p243 = pneg %p99
      $region30: #{_lambda_.7} parent=27 // pred_check_branch
        %245 = sbr.rel (%p243) target = $region32
      $region31: #{_lambda_.7} parent=27 // pred_region
        _
      $region32: #{_lambda_.7} parent=27 // pred_fallthru
        _
    $region28: #{_lambda_.7} parent=5 // pred_fallthru
      _
    %p246 = scmp.le.s32.totalorder 2, %s8
    // Predicated region
    $region33: #{_lambda_.7} parent=5 // pred_check
      %p247 = pneg %p246
    $region34: #{_lambda_.7} parent=5 // pred_check_branch
      %249 = sbr.rel (%p247) target = $region36
    $region35: #{_lambda_.7} parent=5 // pred_region
      %s250 = ssub.s32 %s8, 2
      // Predicated region
      $region37: #{_lambda_.7} parent=35 // pred_check
        %p251 = pneg %p105
      $region38: #{_lambda_.7} parent=35 // pred_check_branch
        %253 = sbr.rel (%p251) target = $region40
      $region39: #{_lambda_.7} parent=35 // pred_region
        %p254 = scmp.lt.s32.totalorder %s19, 1
        %s255 = scalar_select %p254, %s19, 1
        %p256 = scmp.lt.s32.totalorder %s20, 3
        %s257 = scalar_select %p256, %s20, 3
        %s258 = smul.addr %s257, 2
        %s259 = smul.addr %s255, 8
        %s260 = sadd.s32 %s258, %s259
        %s261 = smul.addr %s260, 8
        %s262 = scalar_lea.vmem %s2, %s261
      $region40: #{_lambda_.7} parent=35 // pred_fallthru
        _
    $region36: #{_lambda_.7} parent=5 // pred_fallthru
      _
  $region6: #{_lambda_.7} parent=0 // loop_footer
    %s12 = sadd.s32 1, %s8
  $region7: #{_lambda_.7} parent=0 // loop_footer_branch
    %7 = sbr.rel target = $region3
  $region8: #{_lambda_.7} parent=0 // loop_exit
    _

</llo_original>
